<compile_context>
chip_gen: v7x
topology: tpu7x:2x2x1
jax: 0.10.0
libtpu: 0.0.40
codegen_flags: <defaults>
</compile_context>

<pallas_src>
import jax
import jax.numpy as jnp
from jax.experimental import pallas as pl
from jax.experimental.pallas import tpu as pltpu

CI = 256          # in channels  (fixed by the module)
CO = 256          # out channels (fixed by the module)
KH = KW = 4       # kernel size
IH = IW = 8       # input spatial (x.view(-1, 256, 8, 8))
OH = OW = 16      # output spatial of ConvTranspose2d(k=4, s=2, p=1)
PH = PW = IH + 2  # padded input spatial (pad=1 each side)


def upconv_kernel(x_ref, w_ref, b_ref, o_ref):
    # x_ref: (BN, 10, 10, CI)      bf16 zero-padded NHWC input tile
    # w_ref: (2, 2, 4*CI, CO)      bf16 per-parity channel-concatenated taps
    # b_ref: (1, CO)               f32 bias
    # o_ref: (BN, 2, 2, 8, 8, CO)  output, layout (n, r, s, a, b, co)
    bn = x_ref.shape[0]
    rows = bn * IH * IW
    bias = b_ref[...]                                        # (1, CO) f32

    # 9 distinct shifted windows, shared by all 4 parities (de-duplicated
    # from the 16 (r,s,dy,dx) combinations).
    win = [[x_ref[:, a:a + IH, b:b + IW, :].reshape(rows, CI)
            for b in range(3)] for a in range(3)]

    for r in range(2):
        for s in range(2):
            # Build the K=1024 operand from the 4 shared windows and do ONE
            # MXU matmul per parity (accumulation stays inside the MXU).
            xcat = jnp.concatenate(
                [win[r][s], win[r][s + 1], win[r + 1][s], win[r + 1][s + 1]],
                axis=1)                                       # (rows, 4*CI) bf16
            res = jnp.dot(xcat, w_ref[r, s],
                          preferred_element_type=jnp.float32)  # (rows, CO) f32
            res = jnp.maximum(res + bias, 0.0)                # bias + ReLU in f32
            o_ref[:, r, s, :, :, :] = res.reshape(bn, IH, IW, CO).astype(o_ref.dtype)


def prepare_params(weight, bias):
    """One-time (per weight) re-layout, hoisted out of the forward path.

    weight: (CI, CO, 4, 4) -- PyTorch ConvTranspose2d layout (Cin, Cout, kH, kW)
    bias:   (CO,)
    Tap for output parity (r, s), input offset (dy, dx) is
    weight[:, :, 3 - r - 2*dy, 3 - s - 2*dx].  The 4 taps of a parity are
    concatenated along Cin (order (dy,dx) row-major) so the kernel can do one
    (rows, 4*CI) @ (4*CI, CO) matmul per parity.
    Returns (w_prep (2,2,4*CI,CO) bf16, bias (1,CO) f32).
    """
    per_parity = []
    for r in range(2):
        for s in range(2):
            taps = [weight[:, :, 3 - r - 2 * dy, 3 - s - 2 * dx]
                    for dy in range(2) for dx in range(2)]       # each (CI, CO)
            per_parity.append(jnp.concatenate(taps, axis=0))      # (4*CI, CO)
    w_prep = jnp.stack(per_parity).reshape(2, 2, 4 * CI, CO).astype(jnp.bfloat16)
    return w_prep, bias.reshape(1, CO).astype(jnp.float32)


def upconv1_forward(x, w_prep, b_prep):
    """Forward pass of UpConv1 given pre-rearranged weights.

    x: any shape that views to (-1, 256, 8, 8) (NCHW).  Returns (N,256,16,16).
    """
    x = x.reshape(-1, CI, IH, IW)
    N = x.shape[0]

    # Batch tile: >=2 grid steps whenever N>=2 (keeps both v7x TensorCores
    # busy via the "parallel" axis), capped at 8 images = 512 matmul rows per
    # step.  Ragged N is padded up to a multiple of BN and sliced back.
    BN = min(8, max(1, (N + 1) // 2))
    N_pad = -(-N // BN) * BN

    # NCHW -> NHWC, bf16 cast, 1px zero pad (+ batch pad): one fused host pass.
    xh = jnp.transpose(x, (0, 2, 3, 1)).astype(jnp.bfloat16)
    xp = jnp.pad(xh, ((0, N_pad - N), (1, 1), (1, 1), (0, 0)))   # (N_pad,10,10,256)

    out = pl.pallas_call(
        upconv_kernel,
        out_shape=jax.ShapeDtypeStruct((N_pad, 2, 2, IH, IW, CO), x.dtype),
        grid=(N_pad // BN,),
        in_specs=[
            pl.BlockSpec((BN, PH, PW, CI), lambda n: (n, 0, 0, 0)),
            # Constant index_maps -> weights/bias fetched once, VMEM resident.
            pl.BlockSpec((2, 2, 4 * CI, CO), lambda n: (0, 0, 0, 0)),
            pl.BlockSpec((1, CO), lambda n: (0, 0)),
        ],
        out_specs=pl.BlockSpec((BN, 2, 2, IH, IW, CO),
                               lambda n: (n, 0, 0, 0, 0, 0)),
        compiler_params=pltpu.CompilerParams(
            dimension_semantics=("parallel",),
            vmem_limit_bytes=48 * 1024 * 1024),
    )(xp, w_prep, b_prep)

    out = out[:N]
    # (n, r, s, a, b, c) -> (n, c, a, r, b, s) -> (N, 256, 16, 16): ONE fused
    # transpose handles both the parity interleave and the NCHW conversion.
    # (If a downstream consumer accepted NHWC this transpose could be dropped.)
    out = jnp.transpose(out, (0, 5, 3, 1, 4, 2))
    return out.reshape(N, CO, OH, OW)


upconv1_forward_jit = jax.jit(upconv1_forward)


def reference_forward(x, weight, bias):
    """Pure-JAX reference: transposed conv via lhs-dilated conv with flipped kernel."""
    x = x.reshape(-1, CI, IH, IW)
    w_flip = jnp.transpose(weight[:, :, ::-1, ::-1], (1, 0, 2, 3))  # (Co, Ci, kH, kW)
    y = jax.lax.conv_general_dilated(
        x, w_flip, window_strides=(1, 1), padding=((2, 2), (2, 2)),
        lhs_dilation=(2, 2), rhs_dilation=(1, 1),
        dimension_numbers=("NCHW", "OIHW", "NCHW"))
    return jax.nn.relu(y + bias.reshape(1, CO, 1, 1))


if __name__ == "__main__":
    key = jax.random.PRNGKey(0)
    kx, kw, kb = jax.random.split(key, 3)

    # Deterministic parameter init (PyTorch-like uniform, 1/sqrt(fan_in)).
    bound = 1.0 / jnp.sqrt(jnp.float32(CI * KH * KW))
    weight = jax.random.uniform(kw, (CI, CO, KH, KW), jnp.float32, -bound, bound)
    bias = jax.random.uniform(kb, (CO,), jnp.float32, -bound, bound)

    # Input: batch of 2 feature maps that view(-1, 256, 8, 8).
    x = jax.random.normal(kx, (2, CI, IH, IW), jnp.float32)

    # Weight re-layout happens ONCE here, not per forward call.
    w_prep, b_prep = prepare_params(weight, bias)

    out = jax.block_until_ready(upconv1_forward_jit(x, w_prep, b_prep))
    assert out.shape == (2, CO, OH, OW), out.shape

    ref = jax.block_until_ready(reference_forward(x, weight, bias))
    max_err = float(jnp.max(jnp.abs(out - ref)))
    assert max_err < 5e-2, f"mismatch vs reference, max abs err = {max_err}"

    print("KERNEL_OK")
</pallas_src>

<mosaic_0001>
module attributes {stable_mosaic.version = 11 : i64} {
  func.func @upconv_kernel(%arg0: i32, %arg1: memref<1x10x10x256xbf16, #tpu.memory_space<vmem>>, %arg2: memref<2x2x1024x256xbf16, #tpu.memory_space<vmem>>, %arg3: memref<1x256xf32, #tpu.memory_space<vmem>>, %arg4: memref<1x2x2x8x8x256xf32, #tpu.memory_space<vmem>>) attributes {dimension_semantics = [#tpu.dimension_semantics<parallel>], iteration_bounds = array<i64: 2>, scalar_prefetch = 0 : i64, scratch_operands = 0 : i64, tpu.core_type = #tpu.core_type<tc>, window_params = [{transform_indices = @transform_0, window_bounds = array<i64: 1, 10, 10, 256>}, {pipeline_mode = #tpu.pipeline_mode<synchronous>, transform_indices = @transform_1, window_bounds = array<i64: 2, 2, 1024, 256>}, {pipeline_mode = #tpu.pipeline_mode<synchronous>, transform_indices = @transform_2, window_bounds = array<i64: 1, 256>}, {transform_indices = @transform_3, window_bounds = array<i64: 1, 2, 2, 8, 8, 256>}]} {
    %c0 = arith.constant 0 : index
    %c0_0 = arith.constant 0 : index
    %0 = vector.load %arg3[%c0, %c0_0] : memref<1x256xf32, #tpu.memory_space<vmem>>, vector<1x256xf32>
    %c0_1 = arith.constant 0 : index
    %c0_2 = arith.constant 0 : index
    %c0_3 = arith.constant 0 : index
    %c0_4 = arith.constant 0 : index
    %1 = vector.load %arg1[%c0_1, %c0_2, %c0_3, %c0_4] : memref<1x10x10x256xbf16, #tpu.memory_space<vmem>>, vector<1x8x8x256xbf16>
    %2 = vector.shape_cast %1 : vector<1x8x8x256xbf16> to vector<64x256xbf16>
    %c0_5 = arith.constant 0 : index
    %c0_6 = arith.constant 0 : index
    %c1 = arith.constant 1 : index
    %c0_7 = arith.constant 0 : index
    %3 = vector.load %arg1[%c0_5, %c0_6, %c1, %c0_7] : memref<1x10x10x256xbf16, #tpu.memory_space<vmem>>, vector<1x8x8x256xbf16>
    %4 = vector.shape_cast %3 : vector<1x8x8x256xbf16> to vector<64x256xbf16>
    %c0_8 = arith.constant 0 : index
    %c0_9 = arith.constant 0 : index
    %c2 = arith.constant 2 : index
    %c0_10 = arith.constant 0 : index
    %5 = vector.load %arg1[%c0_8, %c0_9, %c2, %c0_10] : memref<1x10x10x256xbf16, #tpu.memory_space<vmem>>, vector<1x8x8x256xbf16>
    %6 = vector.shape_cast %5 : vector<1x8x8x256xbf16> to vector<64x256xbf16>
    %c0_11 = arith.constant 0 : index
    %c1_12 = arith.constant 1 : index
    %c0_13 = arith.constant 0 : index
    %c0_14 = arith.constant 0 : index
    %7 = vector.load %arg1[%c0_11, %c1_12, %c0_13, %c0_14] : memref<1x10x10x256xbf16, #tpu.memory_space<vmem>>, vector<1x8x8x256xbf16>
    %8 = vector.shape_cast %7 : vector<1x8x8x256xbf16> to vector<64x256xbf16>
    %c0_15 = arith.constant 0 : index
    %c1_16 = arith.constant 1 : index
    %c1_17 = arith.constant 1 : index
    %c0_18 = arith.constant 0 : index
    %9 = vector.load %arg1[%c0_15, %c1_16, %c1_17, %c0_18] : memref<1x10x10x256xbf16, #tpu.memory_space<vmem>>, vector<1x8x8x256xbf16>
    %10 = vector.shape_cast %9 : vector<1x8x8x256xbf16> to vector<64x256xbf16>
    %c0_19 = arith.constant 0 : index
    %c1_20 = arith.constant 1 : index
    %c2_21 = arith.constant 2 : index
    %c0_22 = arith.constant 0 : index
    %11 = vector.load %arg1[%c0_19, %c1_20, %c2_21, %c0_22] : memref<1x10x10x256xbf16, #tpu.memory_space<vmem>>, vector<1x8x8x256xbf16>
    %12 = vector.shape_cast %11 : vector<1x8x8x256xbf16> to vector<64x256xbf16>
    %c0_23 = arith.constant 0 : index
    %c2_24 = arith.constant 2 : index
    %c0_25 = arith.constant 0 : index
    %c0_26 = arith.constant 0 : index
    %13 = vector.load %arg1[%c0_23, %c2_24, %c0_25, %c0_26] : memref<1x10x10x256xbf16, #tpu.memory_space<vmem>>, vector<1x8x8x256xbf16>
    %14 = vector.shape_cast %13 : vector<1x8x8x256xbf16> to vector<64x256xbf16>
    %c0_27 = arith.constant 0 : index
    %c2_28 = arith.constant 2 : index
    %c1_29 = arith.constant 1 : index
    %c0_30 = arith.constant 0 : index
    %15 = vector.load %arg1[%c0_27, %c2_28, %c1_29, %c0_30] : memref<1x10x10x256xbf16, #tpu.memory_space<vmem>>, vector<1x8x8x256xbf16>
    %16 = vector.shape_cast %15 : vector<1x8x8x256xbf16> to vector<64x256xbf16>
    %c0_31 = arith.constant 0 : index
    %c2_32 = arith.constant 2 : index
    %c2_33 = arith.constant 2 : index
    %c0_34 = arith.constant 0 : index
    %17 = vector.load %arg1[%c0_31, %c2_32, %c2_33, %c0_34] : memref<1x10x10x256xbf16, #tpu.memory_space<vmem>>, vector<1x8x8x256xbf16>
    %18 = vector.shape_cast %17 : vector<1x8x8x256xbf16> to vector<64x256xbf16>
    %19 = tpu.concatenate %2, %4, %8, %10 in 1 : vector<64x256xbf16>, vector<64x256xbf16>, vector<64x256xbf16>, vector<64x256xbf16> -> vector<64x1024xbf16>
    %c0_35 = arith.constant 0 : index
    %c0_36 = arith.constant 0 : index
    %c0_37 = arith.constant 0 : index
    %c0_38 = arith.constant 0 : index
    %20 = vector.load %arg2[%c0_35, %c0_36, %c0_37, %c0_38] : memref<2x2x1024x256xbf16, #tpu.memory_space<vmem>>, vector<1x1x1024x256xbf16>
    %21 = vector.shape_cast %20 : vector<1x1x1024x256xbf16> to vector<1024x256xbf16>
    %cst = arith.constant dense<0.000000e+00> : vector<64x256xf32>
    %22 = tpu.matmul %19, %21, %cst {dimension_numbers = #tpu.dot_dimension_numbers<[1], [0], [0], [1], [0, 0, 1, 1], [], []>} : vector<64x1024xbf16>, vector<1024x256xbf16>, vector<64x256xf32> -> vector<64x256xf32>
    %23 = vector.broadcast %0 : vector<1x256xf32> to vector<64x256xf32>
    %24 = arith.addf %22, %23 : vector<64x256xf32>
    %cst_39 = arith.constant 0.000000e+00 : f32
    %25 = vector.broadcast %cst_39 : f32 to vector<64x256xf32>
    %26 = arith.maximumf %24, %25 : vector<64x256xf32>
    %27 = vector.shape_cast %26 : vector<64x256xf32> to vector<1x8x8x256xf32>
    %c0_40 = arith.constant 0 : index
    %c0_41 = arith.constant 0 : index
    %c0_42 = arith.constant 0 : index
    %c0_43 = arith.constant 0 : index
    %c0_44 = arith.constant 0 : index
    %c0_45 = arith.constant 0 : index
    %28 = vector.load %arg4[%c0_40, %c0_41, %c0_42, %c0_43, %c0_44, %c0_45] : memref<1x2x2x8x8x256xf32, #tpu.memory_space<vmem>>, vector<1x1x1x8x8x256xf32>
    %29 = vector.shape_cast %28 : vector<1x1x1x8x8x256xf32> to vector<1x8x8x256xf32>
    %30 = vector.shape_cast %27 : vector<1x8x8x256xf32> to vector<1x1x1x8x8x256xf32>
    tpu.vector_store %arg4[%c0_40, %c0_41, %c0_42, %c0_43, %c0_44, %c0_45], %30 {strides = array<i32>} : memref<1x2x2x8x8x256xf32, #tpu.memory_space<vmem>>, vector<1x1x1x8x8x256xf32>,
    %31 = tpu.concatenate %4, %6, %10, %12 in 1 : vector<64x256xbf16>, vector<64x256xbf16>, vector<64x256xbf16>, vector<64x256xbf16> -> vector<64x1024xbf16>
    %c0_46 = arith.constant 0 : index
    %c1_47 = arith.constant 1 : index
    %c0_48 = arith.constant 0 : index
    %c0_49 = arith.constant 0 : index
    %32 = vector.load %arg2[%c0_46, %c1_47, %c0_48, %c0_49] : memref<2x2x1024x256xbf16, #tpu.memory_space<vmem>>, vector<1x1x1024x256xbf16>
    %33 = vector.shape_cast %32 : vector<1x1x1024x256xbf16> to vector<1024x256xbf16>
    %cst_50 = arith.constant dense<0.000000e+00> : vector<64x256xf32>
    %34 = tpu.matmul %31, %33, %cst_50 {dimension_numbers = #tpu.dot_dimension_numbers<[1], [0], [0], [1], [0, 0, 1, 1], [], []>} : vector<64x1024xbf16>, vector<1024x256xbf16>, vector<64x256xf32> -> vector<64x256xf32>
    %35 = vector.broadcast %0 : vector<1x256xf32> to vector<64x256xf32>
    %36 = arith.addf %34, %35 : vector<64x256xf32>
    %cst_51 = arith.constant 0.000000e+00 : f32
    %37 = vector.broadcast %cst_51 : f32 to vector<64x256xf32>
    %38 = arith.maximumf %36, %37 : vector<64x256xf32>
    %39 = vector.shape_cast %38 : vector<64x256xf32> to vector<1x8x8x256xf32>
    %c0_52 = arith.constant 0 : index
    %c0_53 = arith.constant 0 : index
    %c1_54 = arith.constant 1 : index
    %c0_55 = arith.constant 0 : index
    %c0_56 = arith.constant 0 : index
    %c0_57 = arith.constant 0 : index
    %40 = vector.load %arg4[%c0_52, %c0_53, %c1_54, %c0_55, %c0_56, %c0_57] : memref<1x2x2x8x8x256xf32, #tpu.memory_space<vmem>>, vector<1x1x1x8x8x256xf32>
    %41 = vector.shape_cast %40 : vector<1x1x1x8x8x256xf32> to vector<1x8x8x256xf32>
    %42 = vector.shape_cast %39 : vector<1x8x8x256xf32> to vector<1x1x1x8x8x256xf32>
    tpu.vector_store %arg4[%c0_52, %c0_53, %c1_54, %c0_55, %c0_56, %c0_57], %42 {strides = array<i32>} : memref<1x2x2x8x8x256xf32, #tpu.memory_space<vmem>>, vector<1x1x1x8x8x256xf32>,
    %43 = tpu.concatenate %8, %10, %14, %16 in 1 : vector<64x256xbf16>, vector<64x256xbf16>, vector<64x256xbf16>, vector<64x256xbf16> -> vector<64x1024xbf16>
    %c1_58 = arith.constant 1 : index
    %c0_59 = arith.constant 0 : index
    %c0_60 = arith.constant 0 : index
    %c0_61 = arith.constant 0 : index
    %44 = vector.load %arg2[%c1_58, %c0_59, %c0_60, %c0_61] : memref<2x2x1024x256xbf16, #tpu.memory_space<vmem>>, vector<1x1x1024x256xbf16>
    %45 = vector.shape_cast %44 : vector<1x1x1024x256xbf16> to vector<1024x256xbf16>
    %cst_62 = arith.constant dense<0.000000e+00> : vector<64x256xf32>
    %46 = tpu.matmul %43, %45, %cst_62 {dimension_numbers = #tpu.dot_dimension_numbers<[1], [0], [0], [1], [0, 0, 1, 1], [], []>} : vector<64x1024xbf16>, vector<1024x256xbf16>, vector<64x256xf32> -> vector<64x256xf32>
    %47 = vector.broadcast %0 : vector<1x256xf32> to vector<64x256xf32>
    %48 = arith.addf %46, %47 : vector<64x256xf32>
    %cst_63 = arith.constant 0.000000e+00 : f32
    %49 = vector.broadcast %cst_63 : f32 to vector<64x256xf32>
    %50 = arith.maximumf %48, %49 : vector<64x256xf32>
    %51 = vector.shape_cast %50 : vector<64x256xf32> to vector<1x8x8x256xf32>
    %c0_64 = arith.constant 0 : index
    %c1_65 = arith.constant 1 : index
    %c0_66 = arith.constant 0 : index
    %c0_67 = arith.constant 0 : index
    %c0_68 = arith.constant 0 : index
    %c0_69 = arith.constant 0 : index
    %52 = vector.load %arg4[%c0_64, %c1_65, %c0_66, %c0_67, %c0_68, %c0_69] : memref<1x2x2x8x8x256xf32, #tpu.memory_space<vmem>>, vector<1x1x1x8x8x256xf32>
    %53 = vector.shape_cast %52 : vector<1x1x1x8x8x256xf32> to vector<1x8x8x256xf32>
    %54 = vector.shape_cast %51 : vector<1x8x8x256xf32> to vector<1x1x1x8x8x256xf32>
    tpu.vector_store %arg4[%c0_64, %c1_65, %c0_66, %c0_67, %c0_68, %c0_69], %54 {strides = array<i32>} : memref<1x2x2x8x8x256xf32, #tpu.memory_space<vmem>>, vector<1x1x1x8x8x256xf32>,
    %55 = tpu.concatenate %10, %12, %16, %18 in 1 : vector<64x256xbf16>, vector<64x256xbf16>, vector<64x256xbf16>, vector<64x256xbf16> -> vector<64x1024xbf16>
    %c1_70 = arith.constant 1 : index
    %c1_71 = arith.constant 1 : index
    %c0_72 = arith.constant 0 : index
    %c0_73 = arith.constant 0 : index
    %56 = vector.load %arg2[%c1_70, %c1_71, %c0_72, %c0_73] : memref<2x2x1024x256xbf16, #tpu.memory_space<vmem>>, vector<1x1x1024x256xbf16>
    %57 = vector.shape_cast %56 : vector<1x1x1024x256xbf16> to vector<1024x256xbf16>
    %cst_74 = arith.constant dense<0.000000e+00> : vector<64x256xf32>
    %58 = tpu.matmul %55, %57, %cst_74 {dimension_numbers = #tpu.dot_dimension_numbers<[1], [0], [0], [1], [0, 0, 1, 1], [], []>} : vector<64x1024xbf16>, vector<1024x256xbf16>, vector<64x256xf32> -> vector<64x256xf32>
    %59 = vector.broadcast %0 : vector<1x256xf32> to vector<64x256xf32>
    %60 = arith.addf %58, %59 : vector<64x256xf32>
    %cst_75 = arith.constant 0.000000e+00 : f32
    %61 = vector.broadcast %cst_75 : f32 to vector<64x256xf32>
    %62 = arith.maximumf %60, %61 : vector<64x256xf32>
    %63 = vector.shape_cast %62 : vector<64x256xf32> to vector<1x8x8x256xf32>
    %c0_76 = arith.constant 0 : index
    %c1_77 = arith.constant 1 : index
    %c1_78 = arith.constant 1 : index
    %c0_79 = arith.constant 0 : index
    %c0_80 = arith.constant 0 : index
    %c0_81 = arith.constant 0 : index
    %64 = vector.load %arg4[%c0_76, %c1_77, %c1_78, %c0_79, %c0_80, %c0_81] : memref<1x2x2x8x8x256xf32, #tpu.memory_space<vmem>>, vector<1x1x1x8x8x256xf32>
    %65 = vector.shape_cast %64 : vector<1x1x1x8x8x256xf32> to vector<1x8x8x256xf32>
    %66 = vector.shape_cast %63 : vector<1x8x8x256xf32> to vector<1x1x1x8x8x256xf32>
    tpu.vector_store %arg4[%c0_76, %c1_77, %c1_78, %c0_79, %c0_80, %c0_81], %66 {strides = array<i32>} : memref<1x2x2x8x8x256xf32, #tpu.memory_space<vmem>>, vector<1x1x1x8x8x256xf32>,
    return
  }
  func.func @transform_0(%arg0: i32) -> (i32, i32, i32, i32) {
    %c0_i32 = arith.constant 0 : i32
    %c0_i32_0 = arith.constant 0 : i32
    %c0_i32_1 = arith.constant 0 : i32
    %c0_i32_2 = arith.constant 0 : i32
    return %arg0, %c0_i32, %c0_i32_0, %c0_i32_1 : i32, i32, i32, i32
  }
  func.func @transform_1(%arg0: i32) -> (i32, i32, i32, i32) {
    %c0_i32 = arith.constant 0 : i32
    %c0_i32_0 = arith.constant 0 : i32
    %c0_i32_1 = arith.constant 0 : i32
    %c0_i32_2 = arith.constant 0 : i32
    %c0_i32_3 = arith.constant 0 : i32
    return %c0_i32, %c0_i32_0, %c0_i32_1, %c0_i32_2 : i32, i32, i32, i32
  }
  func.func @transform_2(%arg0: i32) -> (i32, i32) {
    %c0_i32 = arith.constant 0 : i32
    %c0_i32_0 = arith.constant 0 : i32
    %c0_i32_1 = arith.constant 0 : i32
    return %c0_i32, %c0_i32_0 : i32, i32
  }
  func.func @transform_3(%arg0: i32) -> (i32, i32, i32, i32, i32, i32) {
    %c0_i32 = arith.constant 0 : i32
    %c0_i32_0 = arith.constant 0 : i32
    %c0_i32_1 = arith.constant 0 : i32
    %c0_i32_2 = arith.constant 0 : i32
    %c0_i32_3 = arith.constant 0 : i32
    %c0_i32_4 = arith.constant 0 : i32
    return %arg0, %c0_i32, %c0_i32_0, %c0_i32_1, %c0_i32_2, %c0_i32_3 : i32, i32, i32, i32, i32, i32
  }
}

</mosaic_0001>

<llo_original>
// kernel: upconv1_forward.1
$region0: #{upconv1_forward.1}
  #allocation0 [shape = 'u32[]', space=smem, size = 0x4, offset = 0x4, fixed_abs, tag = 'smem constant byte address 0x4 - core index']
  #allocation1 [shape = 'u32[144,128]{1,0:T(1,128)}', space=vmem, size = 0x12000, scoped, tag = 'internal scratch']
  %s0 = inlined_call_operand.vmem [shape: bf16[2,10,10,256], index: 0, kind: input, shape index: {}]
  %s1 = inlined_call_operand.hbm [shape: bf16[2,2,1024,256], index: 1, kind: input, shape index: {}]
  %s2 = inlined_call_operand.hbm [shape: f32[1,256], index: 2, kind: input, shape index: {}]
  %s3 = inlined_call_operand.vmem [shape: f32[2,2,2,8,8,256], index: 3, kind: output, shape index: {}]
  %s4 = sld [smem:[#allocation0]]
  $region53: #{upconv1_forward.1} parent=0
    _
  %s6 = ssub.s32 1, %s4
  %s7 = scalar_select 0, %s6, %s4
  $region1: #{upconv1_forward.1} parent=0
    #allocation2 [shape = 'u8[2097152]{0}', space=vmem, size = 0x200000, scoped, tag = 'input window, operand 1, single buffered']
    #allocation3 [shape = 's32[2]{0}', space=sflag, size = 0x8, scoped, tag = 'scoped memory for upconv1_forward.1']
    #allocation4 [shape = 'u8[1024]{0}', space=vmem, size = 0x400, scoped, tag = 'input window, operand 2, single buffered']
    #allocation5 [shape = 's32[1]{0}', space=sflag, size = 0x4, scoped, tag = 'scoped memory for upconv1_forward.1']
    %8 = vsyncpa [#allocation3], 0
    %9 = vsyncpa [#allocation5], 0
    loop: start=0, step=1, limit=4
    $region2: #{upconv1_forward.1} parent=1 // loop_pre_header
      _
    $region3: #{upconv1_forward.1} parent=1 // loop_header
      %s11 = sphi 0, %s15
      %p12 = scmp.ge.s32.totalorder %s11, 4
      %s21 = sphi 0, %s23
      %s24 = sphi 0, %s21
      %s25 = sphi 0, %s24
      %s41 = sphi 0, %s25
      %s45 = sphi 0, %s45
      %s47 = sphi 0, %s45
      %s48 = sphi 0, %s47
      %s62 = sphi 0, %s48
      %s66 = sphi 0, %s66
      %s68 = sphi 0, %s66
      %s69 = sphi 0, %s68
      %s83 = sphi 0, %s69
      %s89 = sphi 0, %s91
      %s92 = sphi 0, %s89
      %s93 = sphi 0, %s92
      %s109 = sphi 0, %s93
    $region4: #{upconv1_forward.1} parent=1 // loop_header_branch
      %14 = sbr.rel (%p12) target = $region8
    $region5: #{upconv1_forward.1} parent=1 // loop_body
      %s16 = ssub.s32 %s11, 1
      %s17 = ssub.s32 %s11, 2
      %s18 = sadd.s32 %s11, 1
      %s19 = ssub.s32 %s11, %s18
      %p20 = scmp.eq.s32.totalorder %s19, 0
      %s22 = sadd.s32 %s21, 1
      %s23 = scalar_select %p20, %s21, %s22
      %p26 = pneg %p20
      %p27 = scmp.eq.s32.totalorder %s11, 1
      %p28 = por %p26, %p27
      %p29 = scmp.ne.s32.totalorder %s21, %s24
      %p30 = scmp.eq.s32.totalorder %s11, 0
      %p31 = por %p29, %p30
      %p32 = scmp.ne.s32.totalorder %s21, %s24
      %p33 = scmp.eq.s32.totalorder %s16, 1
      %p34 = por %p32, %p33
      %p35 = scmp.ne.s32.totalorder %s24, %s25
      %p36 = scmp.eq.s32.totalorder %s16, 0
      %p37 = por %p35, %p36
      %p38 = scmp.ne.s32.totalorder %s24, %s25
      %p39 = scmp.eq.s32.totalorder %s17, 1
      %p40 = por %p38, %p39
      %p42 = scmp.ne.s32.totalorder %s25, %s41
      %p43 = scmp.eq.s32.totalorder %s17, 0
      %p44 = por %p42, %p43
      %s46 = sadd.s32 %s45, 1
      %p49 = scmp.eq.s32.totalorder %s11, 1
      %p50 = scmp.ne.s32.totalorder %s45, %s47
      %p51 = scmp.eq.s32.totalorder %s11, 0
      %p52 = por %p50, %p51
      %p53 = scmp.ne.s32.totalorder %s45, %s47
      %p54 = scmp.eq.s32.totalorder %s16, 1
      %p55 = por %p53, %p54
      %p56 = scmp.ne.s32.totalorder %s47, %s48
      %p57 = scmp.eq.s32.totalorder %s16, 0
      %p58 = por %p56, %p57
      %p59 = scmp.ne.s32.totalorder %s47, %s48
      %p60 = scmp.eq.s32.totalorder %s17, 1
      %p61 = por %p59, %p60
      %p63 = scmp.ne.s32.totalorder %s48, %s62
      %p64 = scmp.eq.s32.totalorder %s17, 0
      %p65 = por %p63, %p64
      %s67 = sadd.s32 %s66, 1
      %p70 = scmp.eq.s32.totalorder %s11, 1
      %p71 = scmp.ne.s32.totalorder %s66, %s68
      %p72 = scmp.eq.s32.totalorder %s11, 0
      %p73 = por %p71, %p72
      %p74 = scmp.ne.s32.totalorder %s66, %s68
      %p75 = scmp.eq.s32.totalorder %s16, 1
      %p76 = por %p74, %p75
      %p77 = scmp.ne.s32.totalorder %s68, %s69
      %p78 = scmp.eq.s32.totalorder %s16, 0
      %p79 = por %p77, %p78
      %p80 = scmp.ne.s32.totalorder %s68, %s69
      %p81 = scmp.eq.s32.totalorder %s17, 1
      %p82 = por %p80, %p81
      %p84 = scmp.ne.s32.totalorder %s69, %s83
      %p85 = scmp.eq.s32.totalorder %s17, 0
      %p86 = por %p84, %p85
      %s87 = ssub.s32 %s11, %s18
      %p88 = scmp.eq.s32.totalorder %s87, 0
      %s90 = sadd.s32 %s89, 1
      %s91 = scalar_select %p88, %s89, %s90
      %p94 = pneg %p88
      %p95 = scmp.eq.s32.totalorder %s11, 1
      %p96 = por %p94, %p95
      %p97 = scmp.ne.s32.totalorder %s89, %s92
      %p98 = scmp.eq.s32.totalorder %s11, 0
      %p99 = por %p97, %p98
      %p100 = scmp.ne.s32.totalorder %s89, %s92
      %p101 = scmp.eq.s32.totalorder %s16, 1
      %p102 = por %p100, %p101
      %p103 = scmp.ne.s32.totalorder %s92, %s93
      %p104 = scmp.eq.s32.totalorder %s16, 0
      %p105 = por %p103, %p104
      %p106 = scmp.ne.s32.totalorder %s92, %s93
      %p107 = scmp.eq.s32.totalorder %s17, 1
      %p108 = por %p106, %p107
      %p110 = scmp.ne.s32.totalorder %s93, %s109
      %p111 = scmp.eq.s32.totalorder %s17, 0
      %p112 = por %p110, %p111
      %p113 = scmp.le.s32.totalorder 1, %s11
      %p114 = scmp.lt.s32.totalorder %s11, 3
      %p115 = pnand %p113, %p114
      %p116 = pneg %p115
      // Predicated region
      $region9: #{upconv1_forward.1} parent=5 // pred_check
        _
      $region10: #{upconv1_forward.1} parent=5 // pred_check_branch
        %118 = sbr.rel (%p115) target = $region12
      $region11: #{upconv1_forward.1} parent=5 // pred_region
        %s119 = ssub.s32 %s11, 1
        // Predicated region
        $region13: #{upconv1_forward.1} parent=11 // pred_check
          %p120 = pneg %p58
        $region14: #{upconv1_forward.1} parent=11 // pred_check_branch
          %122 = sbr.rel (%p120) target = $region16
        $region15: #{upconv1_forward.1} parent=11 // pred_region
          %s124 = ssub.s32 65536, 65536
          %125 = vsyncadd [#allocation3], %s124
          %s126 = sshll.u32 [#allocation2], 4
          %s127 = int_to_ptr.vmem [resolvable:$true] %s126
          %132 = dma.hbm_to_vmem [thread:$0]  %s1, 65536, %s127, [#allocation3], 128, 128, 8
        $region16: #{upconv1_forward.1} parent=11 // pred_fallthru
          _
        // Predicated region
        $region17: #{upconv1_forward.1} parent=11 // pred_check
          %p133 = pneg %p79
        $region18: #{upconv1_forward.1} parent=11 // pred_check_branch
          %135 = sbr.rel (%p133) target = $region20
        $region19: #{upconv1_forward.1} parent=11 // pred_region
          %s137 = ssub.s32 32, 32
          %138 = vsyncadd [#allocation5], %s137
          %s140 = sshll.u32 [#allocation4], 4
          %s141 = int_to_ptr.vmem [resolvable:$true] %s140
          %143 = dma.hbm_to_vmem [thread:$0]  %s2, 32, %s141, [#allocation5]
        $region20: #{upconv1_forward.1} parent=11 // pred_fallthru
          _
      $region12: #{upconv1_forward.1} parent=5 // pred_fallthru
        _
      %p144 = scmp.lt.s32.totalorder %s11, 2
      // Predicated region
      $region21: #{upconv1_forward.1} parent=5 // pred_check
        %p145 = pneg %p144
      $region22: #{upconv1_forward.1} parent=5 // pred_check_branch
        %147 = sbr.rel (%p145) target = $region24
      $region23: #{upconv1_forward.1} parent=5 // pred_region
        // Predicated region
        $region25: #{upconv1_forward.1} parent=23 // pred_check
          %p148 = pneg %p31
        $region26: #{upconv1_forward.1} parent=23 // pred_check_branch
          %150 = sbr.rel (%p148) target = $region28
        $region27: #{upconv1_forward.1} parent=23 // pred_region
          %p151 = scmp.lt.s32.totalorder %s11, 1
          %s152 = scalar_select %p151, %s11, 1
          %s153 = smul.addr %s152, 40
          %s154 = smul.addr %s153, 4
          %s155 = scalar_lea.vmem %s0, %s154
        $region28: #{upconv1_forward.1} parent=23 // pred_fallthru
          _
      $region24: #{upconv1_forward.1} parent=5 // pred_fallthru
        _
      %p156 = scmp.le.s32.totalorder 1, %s11
      %p157 = scmp.lt.s32.totalorder %s11, 3
      %p158 = pnand %p156, %p157
      %p159 = pneg %p158
      // Predicated region
      $region29: #{upconv1_forward.1} parent=5 // pred_check
        _
      $region30: #{upconv1_forward.1} parent=5 // pred_check_branch
        %161 = sbr.rel (%p158) target = $region32
      $region31: #{upconv1_forward.1} parent=5 // pred_region
        %s162 = ssub.s32 %s11, 1
        // Predicated region
        $region33: #{upconv1_forward.1} parent=31 // pred_check
          %p163 = pneg %p58
        $region34: #{upconv1_forward.1} parent=31 // pred_check_branch
          %165 = sbr.rel (%p163) target = $region36
        $region35: #{upconv1_forward.1} parent=31 // pred_region
          %166 = dma.done [#allocation3], 65536
        $region36: #{upconv1_forward.1} parent=31 // pred_fallthru
          _
        // Predicated region
        $region37: #{upconv1_forward.1} parent=31 // pred_check
          %p167 = pneg %p79
        $region38: #{upconv1_forward.1} parent=31 // pred_check_branch
          %169 = sbr.rel (%p167) target = $region40
        $region39: #{upconv1_forward.1} parent=31 // pred_region
          %170 = dma.done [#allocation5], 32
        $region40: #{upconv1_forward.1} parent=31 // pred_fallthru
          _
        %p171 = scmp.lt.s32.totalorder %s16, 1
        %s172 = scalar_select %p171, %s16, 1
        %s173 = smul.addr %s172, 40
        %s174 = smul.addr %s173, 4
        %s175 = scalar_lea.vmem %s0, %s174
        %p176 = pneg %p37
        %p177 = pneg %p34
        %p178 = pneg %p58
        %p179 = pneg %p55
        %p180 = pneg %p79
        %p181 = pneg %p76
        %p182 = pneg %p105
        %p183 = pneg %p102
        %p184 = scmp.lt.s32.totalorder %s16, 1
        %s185 = scalar_select %p184, %s16, 1
        %s186 = smul.addr %s185, 64
        %s187 = smul.addr %s186, 8
        %s188 = scalar_lea.vmem %s3, %s187
        %p189 = scmp.lt.s32.totalorder %s16, 1
        %s190 = scalar_select %p189, %s16, 1
        %s191 = smul.addr %s190, 40
        %s192 = smul.addr %s191, 4
        %s193 = scalar_lea.vmem %s0, %s192
        %p194 = scmp.lt.s32.totalorder %s16, 1
        %s195 = scalar_select %p194, %s16, 1
        %s196 = smul.addr %s195, 64
        %s197 = smul.addr %s196, 8
        %s198 = scalar_lea.vmem %s3, %s197
        %v199 = vld [vmem:[#allocation4] sm:$0x3]
        %v200 = vld [vmem:[%s193] sm:$0xff]
        %v201 = vld [vmem:[%s193 + $0x10] sm:$0xff]
        %v202 = vld [vmem:[%s193 + $0x20] sm:$0xff]
        %v203 = vld [vmem:[%s193 + $0x30] sm:$0xff]
        %v204 = vld [vmem:[%s193 + $0x40] sm:$0xff]
        %v205 = vld [vmem:[%s193 + $0x50] sm:$0xff]
        %v206 = vld [vmem:[%s193 + $0x60] sm:$0xff]
        %v207 = vld [vmem:[%s193 + $0x70] sm:$0xff]
        %v208 = vld [vmem:[%s193 + $0x8] sm:$0x11]
        %v209 = vld [vmem:[%s193 + $0x18] sm:$0x11]
        %v210 = vld [vmem:[%s193 + $0x28] sm:$0x11]
        %v211 = vld [vmem:[%s193 + $0x38] sm:$0x11]
        %v212 = vld [vmem:[%s193 + $0x48] sm:$0x11]
        %v213 = vld [vmem:[%s193 + $0x58] sm:$0x11]
        %v214 = vld [vmem:[%s193 + $0x68] sm:$0x11]
        %v215 = vld [vmem:[%s193 + $0x78] sm:$0x11]
        %vm216 = vsmask.f32 3328
        %vm217 = vsmask.f32 7440
        %vm218 = vmor %vm216, %vm217
        %v220 = vshrl.u32 %v200, 16
        %v222 = vrot.slane %v220, 4
        %v223 = vshll.u32 %v200, 16
        %v225 = vrot.slane %v223, 5
        %v226 = vor.u32 %v222, %v225
        %v227 = vrot.slane %v226, 4
        %v229 = vshll.u32 %v208, 16
        %v231 = vrot.slane %v229, 5
        %v232 = vsel %vm218, %v227, %v231
        %v234 = vshrl.u32 %v201, 16
        %v236 = vrot.slane %v234, 4
        %v237 = vshll.u32 %v201, 16
        %v239 = vrot.slane %v237, 5
        %v240 = vor.u32 %v236, %v239
        %v241 = vrot.slane %v240, 4
        %v243 = vshll.u32 %v209, 16
        %v245 = vrot.slane %v243, 5
        %v246 = vsel %vm218, %v241, %v245
        %v248 = vshrl.u32 %v202, 16
        %v250 = vrot.slane %v248, 4
        %v251 = vshll.u32 %v202, 16
        %v253 = vrot.slane %v251, 5
        %v254 = vor.u32 %v250, %v253
        %v255 = vrot.slane %v254, 4
        %v257 = vshll.u32 %v210, 16
        %v259 = vrot.slane %v257, 5
        %v260 = vsel %vm218, %v255, %v259
        %v262 = vshrl.u32 %v203, 16
        %v264 = vrot.slane %v262, 4
        %v265 = vshll.u32 %v203, 16
        %v267 = vrot.slane %v265, 5
        %v268 = vor.u32 %v264, %v267
        %v269 = vrot.slane %v268, 4
        %v271 = vshll.u32 %v211, 16
        %v273 = vrot.slane %v271, 5
        %v274 = vsel %vm218, %v269, %v273
        %v276 = vshrl.u32 %v204, 16
        %v278 = vrot.slane %v276, 4
        %v279 = vshll.u32 %v204, 16
        %v281 = vrot.slane %v279, 5
        %v282 = vor.u32 %v278, %v281
        %v283 = vrot.slane %v282, 4
        %v285 = vshll.u32 %v212, 16
        %v287 = vrot.slane %v285, 5
        %v288 = vsel %vm218, %v283, %v287
        %v290 = vshrl.u32 %v205, 16
        %v292 = vrot.slane %v290, 4
        %v293 = vshll.u32 %v205, 16
        %v295 = vrot.slane %v293, 5
        %v296 = vor.u32 %v292, %v295
        %v297 = vrot.slane %v296, 4
        %v299 = vshll.u32 %v213, 16
        %v301 = vrot.slane %v299, 5
        %v302 = vsel %vm218, %v297, %v301
        %v304 = vshrl.u32 %v206, 16
        %v306 = vrot.slane %v304, 4
        %v307 = vshll.u32 %v206, 16
        %v309 = vrot.slane %v307, 5
        %v310 = vor.u32 %v306, %v309
        %v311 = vrot.slane %v310, 4
        %v313 = vshll.u32 %v214, 16
        %v315 = vrot.slane %v313, 5
        %v316 = vsel %vm218, %v311, %v315
        %v318 = vshrl.u32 %v207, 16
        %v320 = vrot.slane %v318, 4
        %v321 = vshll.u32 %v207, 16
        %v323 = vrot.slane %v321, 5
        %v324 = vor.u32 %v320, %v323
        %v325 = vrot.slane %v324, 4
        %v327 = vshll.u32 %v215, 16
        %v329 = vrot.slane %v327, 5
        %v330 = vsel %vm218, %v325, %v329
        %v331 = vld [vmem:[%s193] sm:$0xee]
        %v332 = vld [vmem:[%s193 + $0x10] sm:$0xee]
        %v333 = vld [vmem:[%s193 + $0x20] sm:$0xee]
        %v334 = vld [vmem:[%s193 + $0x30] sm:$0xee]
        %v335 = vld [vmem:[%s193 + $0x40] sm:$0xee]
        %v336 = vld [vmem:[%s193 + $0x50] sm:$0xee]
        %v337 = vld [vmem:[%s193 + $0x60] sm:$0xee]
        %v338 = vld [vmem:[%s193 + $0x70] sm:$0xee]
        %vm355 = vcmask 1042432
        %vm356 = vcmask 1046532
        %vm357 = vmor %vm355, %vm356
        %v358 = vrot.slane %v331, 5
        %v359 = vrot.slane %v358, 4
        %v360 = vrot.slane %v208, 5
        %v361 = vsel %vm357, %v359, %v360
        %v362 = vrot.slane %v332, 5
        %v363 = vrot.slane %v362, 4
        %v364 = vrot.slane %v209, 5
        %v365 = vsel %vm357, %v363, %v364
        %v366 = vrot.slane %v333, 5
        %v367 = vrot.slane %v366, 4
        %v368 = vrot.slane %v210, 5
        %v369 = vsel %vm357, %v367, %v368
        %v370 = vrot.slane %v334, 5
        %v371 = vrot.slane %v370, 4
        %v372 = vrot.slane %v211, 5
        %v373 = vsel %vm357, %v371, %v372
        %v374 = vrot.slane %v335, 5
        %v375 = vrot.slane %v374, 4
        %v376 = vrot.slane %v212, 5
        %v377 = vsel %vm357, %v375, %v376
        %v378 = vrot.slane %v336, 5
        %v379 = vrot.slane %v378, 4
        %v380 = vrot.slane %v213, 5
        %v381 = vsel %vm357, %v379, %v380
        %v382 = vrot.slane %v337, 5
        %v383 = vrot.slane %v382, 4
        %v384 = vrot.slane %v214, 5
        %v385 = vsel %vm357, %v383, %v384
        %v386 = vrot.slane %v338, 5
        %v387 = vrot.slane %v386, 4
        %v388 = vrot.slane %v215, 5
        %v389 = vsel %vm357, %v387, %v388
        %s390 = scalar_lea.vmem %s193, 16
        %v391 = vld [vmem:[%s390] sm:$0xff]
        %v392 = vld [vmem:[%s390 + $0x10] sm:$0xff]
        %v393 = vld [vmem:[%s390 + $0x20] sm:$0xff]
        %v394 = vld [vmem:[%s390 + $0x30] sm:$0xff]
        %v395 = vld [vmem:[%s390 + $0x40] sm:$0xff]
        %v396 = vld [vmem:[%s390 + $0x50] sm:$0xff]
        %v397 = vld [vmem:[%s390 + $0x60] sm:$0xff]
        %v398 = vld [vmem:[%s390 + $0x70] sm:$0xff]
        %v399 = vld [vmem:[%s390 + $0x8] sm:$0x11]
        %v400 = vld [vmem:[%s390 + $0x18] sm:$0x11]
        %v401 = vld [vmem:[%s390 + $0x28] sm:$0x11]
        %v402 = vld [vmem:[%s390 + $0x38] sm:$0x11]
        %v403 = vld [vmem:[%s390 + $0x48] sm:$0x11]
        %v404 = vld [vmem:[%s390 + $0x58] sm:$0x11]
        %v405 = vld [vmem:[%s390 + $0x68] sm:$0x11]
        %v406 = vld [vmem:[%s390 + $0x78] sm:$0x11]
        %v408 = vshrl.u32 %v391, 16
        %v410 = vrot.slane %v408, 4
        %v411 = vshll.u32 %v391, 16
        %v413 = vrot.slane %v411, 5
        %v414 = vor.u32 %v410, %v413
        %v415 = vrot.slane %v414, 4
        %v417 = vshll.u32 %v399, 16
        %v419 = vrot.slane %v417, 5
        %v420 = vsel %vm218, %v415, %v419
        %v422 = vshrl.u32 %v392, 16
        %v424 = vrot.slane %v422, 4
        %v425 = vshll.u32 %v392, 16
        %v427 = vrot.slane %v425, 5
        %v428 = vor.u32 %v424, %v427
        %v429 = vrot.slane %v428, 4
        %v431 = vshll.u32 %v400, 16
        %v433 = vrot.slane %v431, 5
        %v434 = vsel %vm218, %v429, %v433
        %v436 = vshrl.u32 %v393, 16
        %v438 = vrot.slane %v436, 4
        %v439 = vshll.u32 %v393, 16
        %v441 = vrot.slane %v439, 5
        %v442 = vor.u32 %v438, %v441
        %v443 = vrot.slane %v442, 4
        %v445 = vshll.u32 %v401, 16
        %v447 = vrot.slane %v445, 5
        %v448 = vsel %vm218, %v443, %v447
        %v450 = vshrl.u32 %v394, 16
        %v452 = vrot.slane %v450, 4
        %v453 = vshll.u32 %v394, 16
        %v455 = vrot.slane %v453, 5
        %v456 = vor.u32 %v452, %v455
        %v457 = vrot.slane %v456, 4
        %v459 = vshll.u32 %v402, 16
        %v461 = vrot.slane %v459, 5
        %v462 = vsel %vm218, %v457, %v461
        %v464 = vshrl.u32 %v395, 16
        %v466 = vrot.slane %v464, 4
        %v467 = vshll.u32 %v395, 16
        %v469 = vrot.slane %v467, 5
        %v470 = vor.u32 %v466, %v469
        %v471 = vrot.slane %v470, 4
        %v473 = vshll.u32 %v403, 16
        %v475 = vrot.slane %v473, 5
        %v476 = vsel %vm218, %v471, %v475
        %v478 = vshrl.u32 %v396, 16
        %v480 = vrot.slane %v478, 4
        %v481 = vshll.u32 %v396, 16
        %v483 = vrot.slane %v481, 5
        %v484 = vor.u32 %v480, %v483
        %v485 = vrot.slane %v484, 4
        %v487 = vshll.u32 %v404, 16
        %v489 = vrot.slane %v487, 5
        %v490 = vsel %vm218, %v485, %v489
        %v492 = vshrl.u32 %v397, 16
        %v494 = vrot.slane %v492, 4
        %v495 = vshll.u32 %v397, 16
        %v497 = vrot.slane %v495, 5
        %v498 = vor.u32 %v494, %v497
        %v499 = vrot.slane %v498, 4
        %v501 = vshll.u32 %v405, 16
        %v503 = vrot.slane %v501, 5
        %v504 = vsel %vm218, %v499, %v503
        %v506 = vshrl.u32 %v398, 16
        %v508 = vrot.slane %v506, 4
        %v509 = vshll.u32 %v398, 16
        %v511 = vrot.slane %v509, 5
        %v512 = vor.u32 %v508, %v511
        %v513 = vrot.slane %v512, 4
        %v515 = vshll.u32 %v406, 16
        %v517 = vrot.slane %v515, 5
        %v518 = vsel %vm218, %v513, %v517
        %v519 = vld [vmem:[%s390] sm:$0xee]
        %v520 = vld [vmem:[%s390 + $0x10] sm:$0xee]
        %v521 = vld [vmem:[%s390 + $0x20] sm:$0xee]
        %v522 = vld [vmem:[%s390 + $0x30] sm:$0xee]
        %v523 = vld [vmem:[%s390 + $0x40] sm:$0xee]
        %v524 = vld [vmem:[%s390 + $0x50] sm:$0xee]
        %v525 = vld [vmem:[%s390 + $0x60] sm:$0xee]
        %v526 = vld [vmem:[%s390 + $0x70] sm:$0xee]
        %v543 = vrot.slane %v519, 5
        %v544 = vrot.slane %v543, 4
        %v545 = vrot.slane %v399, 5
        %v546 = vsel %vm357, %v544, %v545
        %v547 = vrot.slane %v520, 5
        %v548 = vrot.slane %v547, 4
        %v549 = vrot.slane %v400, 5
        %v550 = vsel %vm357, %v548, %v549
        %v551 = vrot.slane %v521, 5
        %v552 = vrot.slane %v551, 4
        %v553 = vrot.slane %v401, 5
        %v554 = vsel %vm357, %v552, %v553
        %v555 = vrot.slane %v522, 5
        %v556 = vrot.slane %v555, 4
        %v557 = vrot.slane %v402, 5
        %v558 = vsel %vm357, %v556, %v557
        %v559 = vrot.slane %v523, 5
        %v560 = vrot.slane %v559, 4
        %v561 = vrot.slane %v403, 5
        %v562 = vsel %vm357, %v560, %v561
        %v563 = vrot.slane %v524, 5
        %v564 = vrot.slane %v563, 4
        %v565 = vrot.slane %v404, 5
        %v566 = vsel %vm357, %v564, %v565
        %v567 = vrot.slane %v525, 5
        %v568 = vrot.slane %v567, 4
        %v569 = vrot.slane %v405, 5
        %v570 = vsel %vm357, %v568, %v569
        %v571 = vrot.slane %v526, 5
        %v572 = vrot.slane %v571, 4
        %v573 = vrot.slane %v406, 5
        %v574 = vsel %vm357, %v572, %v573
        %s575 = scalar_lea.vmem %s193, 32
        %v576 = vld [vmem:[%s575] sm:$0xff]
        %v577 = vld [vmem:[%s575 + $0x10] sm:$0xff]
        %v578 = vld [vmem:[%s575 + $0x20] sm:$0xff]
        %v579 = vld [vmem:[%s575 + $0x30] sm:$0xff]
        %v580 = vld [vmem:[%s575 + $0x40] sm:$0xff]
        %v581 = vld [vmem:[%s575 + $0x50] sm:$0xff]
        %v582 = vld [vmem:[%s575 + $0x60] sm:$0xff]
        %v583 = vld [vmem:[%s575 + $0x70] sm:$0xff]
        %v584 = vld [vmem:[%s575 + $0x8] sm:$0x11]
        %v585 = vld [vmem:[%s575 + $0x18] sm:$0x11]
        %v586 = vld [vmem:[%s575 + $0x28] sm:$0x11]
        %v587 = vld [vmem:[%s575 + $0x38] sm:$0x11]
        %v588 = vld [vmem:[%s575 + $0x48] sm:$0x11]
        %v589 = vld [vmem:[%s575 + $0x58] sm:$0x11]
        %v590 = vld [vmem:[%s575 + $0x68] sm:$0x11]
        %v591 = vld [vmem:[%s575 + $0x78] sm:$0x11]
        %v593 = vshrl.u32 %v576, 16
        %v595 = vrot.slane %v593, 4
        %v596 = vshll.u32 %v576, 16
        %v598 = vrot.slane %v596, 5
        %v599 = vor.u32 %v595, %v598
        %v600 = vrot.slane %v599, 4
        %v602 = vshll.u32 %v584, 16
        %v604 = vrot.slane %v602, 5
        %v605 = vsel %vm218, %v600, %v604
        %v607 = vshrl.u32 %v577, 16
        %v609 = vrot.slane %v607, 4
        %v610 = vshll.u32 %v577, 16
        %v612 = vrot.slane %v610, 5
        %v613 = vor.u32 %v609, %v612
        %v614 = vrot.slane %v613, 4
        %v616 = vshll.u32 %v585, 16
        %v618 = vrot.slane %v616, 5
        %v619 = vsel %vm218, %v614, %v618
        %v621 = vshrl.u32 %v578, 16
        %v623 = vrot.slane %v621, 4
        %v624 = vshll.u32 %v578, 16
        %v626 = vrot.slane %v624, 5
        %v627 = vor.u32 %v623, %v626
        %v628 = vrot.slane %v627, 4
        %v630 = vshll.u32 %v586, 16
        %v632 = vrot.slane %v630, 5
        %v633 = vsel %vm218, %v628, %v632
        %v635 = vshrl.u32 %v579, 16
        %v637 = vrot.slane %v635, 4
        %v638 = vshll.u32 %v579, 16
        %v640 = vrot.slane %v638, 5
        %v641 = vor.u32 %v637, %v640
        %v642 = vrot.slane %v641, 4
        %v644 = vshll.u32 %v587, 16
        %v646 = vrot.slane %v644, 5
        %v647 = vsel %vm218, %v642, %v646
        %v649 = vshrl.u32 %v580, 16
        %v651 = vrot.slane %v649, 4
        %v652 = vshll.u32 %v580, 16
        %v654 = vrot.slane %v652, 5
        %v655 = vor.u32 %v651, %v654
        %v656 = vrot.slane %v655, 4
        %v658 = vshll.u32 %v588, 16
        %v660 = vrot.slane %v658, 5
        %v661 = vsel %vm218, %v656, %v660
        %v663 = vshrl.u32 %v581, 16
        %v665 = vrot.slane %v663, 4
        %v666 = vshll.u32 %v581, 16
        %v668 = vrot.slane %v666, 5
        %v669 = vor.u32 %v665, %v668
        %v670 = vrot.slane %v669, 4
        %v672 = vshll.u32 %v589, 16
        %v674 = vrot.slane %v672, 5
        %v675 = vsel %vm218, %v670, %v674
        %v677 = vshrl.u32 %v582, 16
        %v679 = vrot.slane %v677, 4
        %v680 = vshll.u32 %v582, 16
        %v682 = vrot.slane %v680, 5
        %v683 = vor.u32 %v679, %v682
        %v684 = vrot.slane %v683, 4
        %v686 = vshll.u32 %v590, 16
        %v688 = vrot.slane %v686, 5
        %v689 = vsel %vm218, %v684, %v688
        %v691 = vshrl.u32 %v583, 16
        %v693 = vrot.slane %v691, 4
        %v694 = vshll.u32 %v583, 16
        %v696 = vrot.slane %v694, 5
        %v697 = vor.u32 %v693, %v696
        %v698 = vrot.slane %v697, 4
        %v700 = vshll.u32 %v591, 16
        %v702 = vrot.slane %v700, 5
        %v703 = vsel %vm218, %v698, %v702
        %v704 = vld [vmem:[%s575] sm:$0xee]
        %v705 = vld [vmem:[%s575 + $0x10] sm:$0xee]
        %v706 = vld [vmem:[%s575 + $0x20] sm:$0xee]
        %v707 = vld [vmem:[%s575 + $0x30] sm:$0xee]
        %v708 = vld [vmem:[%s575 + $0x40] sm:$0xee]
        %v709 = vld [vmem:[%s575 + $0x50] sm:$0xee]
        %v710 = vld [vmem:[%s575 + $0x60] sm:$0xee]
        %v711 = vld [vmem:[%s575 + $0x70] sm:$0xee]
        %v728 = vrot.slane %v704, 5
        %v729 = vrot.slane %v728, 4
        %v730 = vrot.slane %v584, 5
        %v731 = vsel %vm357, %v729, %v730
        %v732 = vrot.slane %v705, 5
        %v733 = vrot.slane %v732, 4
        %v734 = vrot.slane %v585, 5
        %v735 = vsel %vm357, %v733, %v734
        %v736 = vrot.slane %v706, 5
        %v737 = vrot.slane %v736, 4
        %v738 = vrot.slane %v586, 5
        %v739 = vsel %vm357, %v737, %v738
        %v740 = vrot.slane %v707, 5
        %v741 = vrot.slane %v740, 4
        %v742 = vrot.slane %v587, 5
        %v743 = vsel %vm357, %v741, %v742
        %v744 = vrot.slane %v708, 5
        %v745 = vrot.slane %v744, 4
        %v746 = vrot.slane %v588, 5
        %v747 = vsel %vm357, %v745, %v746
        %v748 = vrot.slane %v709, 5
        %v749 = vrot.slane %v748, 4
        %v750 = vrot.slane %v589, 5
        %v751 = vsel %vm357, %v749, %v750
        %v752 = vrot.slane %v710, 5
        %v753 = vrot.slane %v752, 4
        %v754 = vrot.slane %v590, 5
        %v755 = vsel %vm357, %v753, %v754
        %v756 = vrot.slane %v711, 5
        %v757 = vrot.slane %v756, 4
        %v758 = vrot.slane %v591, 5
        %v759 = vsel %vm357, %v757, %v758
        %v768 = vunpack.c.l.b16 %v200
        %v769 = vunpack.c.h.b16 %v200
        %v770 = vunpack.c.l.b16 %v201
        %v771 = vunpack.c.h.b16 %v201
        %v772 = vunpack.c.l.b16 %v202
        %v773 = vunpack.c.h.b16 %v202
        %v774 = vunpack.c.l.b16 %v203
        %v775 = vunpack.c.h.b16 %v203
        %v776 = vunpack.c.l.b16 %v204
        %v777 = vunpack.c.h.b16 %v204
        %v778 = vunpack.c.l.b16 %v205
        %v779 = vunpack.c.h.b16 %v205
        %v780 = vunpack.c.l.b16 %v206
        %v781 = vunpack.c.h.b16 %v206
        %v782 = vunpack.c.l.b16 %v207
        %v783 = vunpack.c.h.b16 %v207
        %v784 = vpack.c.b16 %v770, %v768
        %v785 = vpack.c.b16 %v771, %v769
        %v786 = vpack.c.b16 %v774, %v772
        %v787 = vpack.c.b16 %v775, %v773
        %v788 = vpack.c.b16 %v778, %v776
        %v789 = vpack.c.b16 %v779, %v777
        %v790 = vpack.c.b16 %v782, %v780
        %v791 = vpack.c.b16 %v783, %v781
        %v800 = vunpack.c.l.b16 %v232
        %v801 = vunpack.c.h.b16 %v232
        %v802 = vunpack.c.l.b16 %v246
        %v803 = vunpack.c.h.b16 %v246
        %v804 = vunpack.c.l.b16 %v260
        %v805 = vunpack.c.h.b16 %v260
        %v806 = vunpack.c.l.b16 %v274
        %v807 = vunpack.c.h.b16 %v274
        %v808 = vunpack.c.l.b16 %v288
        %v809 = vunpack.c.h.b16 %v288
        %v810 = vunpack.c.l.b16 %v302
        %v811 = vunpack.c.h.b16 %v302
        %v812 = vunpack.c.l.b16 %v316
        %v813 = vunpack.c.h.b16 %v316
        %v814 = vunpack.c.l.b16 %v330
        %v815 = vunpack.c.h.b16 %v330
        %v816 = vpack.c.b16 %v802, %v800
        %v817 = vpack.c.b16 %v803, %v801
        %v818 = vpack.c.b16 %v806, %v804
        %v819 = vpack.c.b16 %v807, %v805
        %v820 = vpack.c.b16 %v810, %v808
        %v821 = vpack.c.b16 %v811, %v809
        %v822 = vpack.c.b16 %v814, %v812
        %v823 = vpack.c.b16 %v815, %v813
        %v840 = vunpack.c.l.b16 %v391
        %v841 = vunpack.c.h.b16 %v391
        %v842 = vunpack.c.l.b16 %v392
        %v843 = vunpack.c.h.b16 %v392
        %v844 = vunpack.c.l.b16 %v393
        %v845 = vunpack.c.h.b16 %v393
        %v846 = vunpack.c.l.b16 %v394
        %v847 = vunpack.c.h.b16 %v394
        %v848 = vunpack.c.l.b16 %v395
        %v849 = vunpack.c.h.b16 %v395
        %v850 = vunpack.c.l.b16 %v396
        %v851 = vunpack.c.h.b16 %v396
        %v852 = vunpack.c.l.b16 %v397
        %v853 = vunpack.c.h.b16 %v397
        %v854 = vunpack.c.l.b16 %v398
        %v855 = vunpack.c.h.b16 %v398
        %v856 = vpack.c.b16 %v842, %v840
        %v857 = vpack.c.b16 %v843, %v841
        %v858 = vpack.c.b16 %v846, %v844
        %v859 = vpack.c.b16 %v847, %v845
        %v860 = vpack.c.b16 %v850, %v848
        %v861 = vpack.c.b16 %v851, %v849
        %v862 = vpack.c.b16 %v854, %v852
        %v863 = vpack.c.b16 %v855, %v853
        %v872 = vunpack.c.l.b16 %v420
        %v873 = vunpack.c.h.b16 %v420
        %v874 = vunpack.c.l.b16 %v434
        %v875 = vunpack.c.h.b16 %v434
        %v876 = vunpack.c.l.b16 %v448
        %v877 = vunpack.c.h.b16 %v448
        %v878 = vunpack.c.l.b16 %v462
        %v879 = vunpack.c.h.b16 %v462
        %v880 = vunpack.c.l.b16 %v476
        %v881 = vunpack.c.h.b16 %v476
        %v882 = vunpack.c.l.b16 %v490
        %v883 = vunpack.c.h.b16 %v490
        %v884 = vunpack.c.l.b16 %v504
        %v885 = vunpack.c.h.b16 %v504
        %v886 = vunpack.c.l.b16 %v518
        %v887 = vunpack.c.h.b16 %v518
        %v888 = vpack.c.b16 %v874, %v872
        %v889 = vpack.c.b16 %v875, %v873
        %v890 = vpack.c.b16 %v878, %v876
        %v891 = vpack.c.b16 %v879, %v877
        %v892 = vpack.c.b16 %v882, %v880
        %v893 = vpack.c.b16 %v883, %v881
        %v894 = vpack.c.b16 %v886, %v884
        %v895 = vpack.c.b16 %v887, %v885
        %v904 = vld [vmem:[#allocation2] sm:$0xff]
        %v905 = vld [vmem:[#allocation2 + $0x8] sm:$0xff]
        %v906 = vld [vmem:[#allocation2 + $0x10] sm:$0xff]
        %v907 = vld [vmem:[#allocation2 + $0x18] sm:$0xff]
        %v908 = vld [vmem:[#allocation2 + $0x20] sm:$0xff]
        %v909 = vld [vmem:[#allocation2 + $0x28] sm:$0xff]
        %v910 = vld [vmem:[#allocation2 + $0x30] sm:$0xff]
        %v911 = vld [vmem:[#allocation2 + $0x38] sm:$0xff]
        %v912 = vld [vmem:[#allocation2 + $0x40] sm:$0xff]
        %v913 = vld [vmem:[#allocation2 + $0x48] sm:$0xff]
        %v914 = vld [vmem:[#allocation2 + $0x50] sm:$0xff]
        %v915 = vld [vmem:[#allocation2 + $0x58] sm:$0xff]
        %v916 = vld [vmem:[#allocation2 + $0x60] sm:$0xff]
        %v917 = vld [vmem:[#allocation2 + $0x68] sm:$0xff]
        %v918 = vld [vmem:[#allocation2 + $0x70] sm:$0xff]
        %v919 = vld [vmem:[#allocation2 + $0x78] sm:$0xff]
        %v920 = vld [vmem:[#allocation2 + $0x80] sm:$0xff]
        %v921 = vld [vmem:[#allocation2 + $0x88] sm:$0xff]
        %v922 = vld [vmem:[#allocation2 + $0x90] sm:$0xff]
        %v923 = vld [vmem:[#allocation2 + $0x98] sm:$0xff]
        %v924 = vld [vmem:[#allocation2 + $0xa0] sm:$0xff]
        %v925 = vld [vmem:[#allocation2 + $0xa8] sm:$0xff]
        %v926 = vld [vmem:[#allocation2 + $0xb0] sm:$0xff]
        %v927 = vld [vmem:[#allocation2 + $0xb8] sm:$0xff]
        %v928 = vld [vmem:[#allocation2 + $0xc0] sm:$0xff]
        %v929 = vld [vmem:[#allocation2 + $0xc8] sm:$0xff]
        %v930 = vld [vmem:[#allocation2 + $0xd0] sm:$0xff]
        %v931 = vld [vmem:[#allocation2 + $0xd8] sm:$0xff]
        %v932 = vld [vmem:[#allocation2 + $0xe0] sm:$0xff]
        %v933 = vld [vmem:[#allocation2 + $0xe8] sm:$0xff]
        %v934 = vld [vmem:[#allocation2 + $0xf0] sm:$0xff]
        %v935 = vld [vmem:[#allocation2 + $0xf8] sm:$0xff]
        %v936 = vld [vmem:[#allocation2 + $0x100] sm:$0xff]
        %v937 = vld [vmem:[#allocation2 + $0x108] sm:$0xff]
        %v938 = vld [vmem:[#allocation2 + $0x110] sm:$0xff]
        %v939 = vld [vmem:[#allocation2 + $0x118] sm:$0xff]
        %v940 = vld [vmem:[#allocation2 + $0x120] sm:$0xff]
        %v941 = vld [vmem:[#allocation2 + $0x128] sm:$0xff]
        %v942 = vld [vmem:[#allocation2 + $0x130] sm:$0xff]
        %v943 = vld [vmem:[#allocation2 + $0x138] sm:$0xff]
        %v944 = vld [vmem:[#allocation2 + $0x140] sm:$0xff]
        %v945 = vld [vmem:[#allocation2 + $0x148] sm:$0xff]
        %v946 = vld [vmem:[#allocation2 + $0x150] sm:$0xff]
        %v947 = vld [vmem:[#allocation2 + $0x158] sm:$0xff]
        %v948 = vld [vmem:[#allocation2 + $0x160] sm:$0xff]
        %v949 = vld [vmem:[#allocation2 + $0x168] sm:$0xff]
        %v950 = vld [vmem:[#allocation2 + $0x170] sm:$0xff]
        %v951 = vld [vmem:[#allocation2 + $0x178] sm:$0xff]
        %v952 = vld [vmem:[#allocation2 + $0x180] sm:$0xff]
        %v953 = vld [vmem:[#allocation2 + $0x188] sm:$0xff]
        %v954 = vld [vmem:[#allocation2 + $0x190] sm:$0xff]
        %v955 = vld [vmem:[#allocation2 + $0x198] sm:$0xff]
        %v956 = vld [vmem:[#allocation2 + $0x1a0] sm:$0xff]
        %v957 = vld [vmem:[#allocation2 + $0x1a8] sm:$0xff]
        %v958 = vld [vmem:[#allocation2 + $0x1b0] sm:$0xff]
        %v959 = vld [vmem:[#allocation2 + $0x1b8] sm:$0xff]
        %v960 = vld [vmem:[#allocation2 + $0x1c0] sm:$0xff]
        %v961 = vld [vmem:[#allocation2 + $0x1c8] sm:$0xff]
        %v962 = vld [vmem:[#allocation2 + $0x1d0] sm:$0xff]
        %v963 = vld [vmem:[#allocation2 + $0x1d8] sm:$0xff]
        %v964 = vld [vmem:[#allocation2 + $0x1e0] sm:$0xff]
        %v965 = vld [vmem:[#allocation2 + $0x1e8] sm:$0xff]
        %v966 = vld [vmem:[#allocation2 + $0x1f0] sm:$0xff]
        %v967 = vld [vmem:[#allocation2 + $0x1f8] sm:$0xff]
        %v968 = vld [vmem:[#allocation2 + $0x200] sm:$0xff]
        %v969 = vld [vmem:[#allocation2 + $0x208] sm:$0xff]
        %v970 = vld [vmem:[#allocation2 + $0x210] sm:$0xff]
        %v971 = vld [vmem:[#allocation2 + $0x218] sm:$0xff]
        %v972 = vld [vmem:[#allocation2 + $0x220] sm:$0xff]
        %v973 = vld [vmem:[#allocation2 + $0x228] sm:$0xff]
        %v974 = vld [vmem:[#allocation2 + $0x230] sm:$0xff]
        %v975 = vld [vmem:[#allocation2 + $0x238] sm:$0xff]
        %v976 = vld [vmem:[#allocation2 + $0x240] sm:$0xff]
        %v977 = vld [vmem:[#allocation2 + $0x248] sm:$0xff]
        %v978 = vld [vmem:[#allocation2 + $0x250] sm:$0xff]
        %v979 = vld [vmem:[#allocation2 + $0x258] sm:$0xff]
        %v980 = vld [vmem:[#allocation2 + $0x260] sm:$0xff]
        %v981 = vld [vmem:[#allocation2 + $0x268] sm:$0xff]
        %v982 = vld [vmem:[#allocation2 + $0x270] sm:$0xff]
        %v983 = vld [vmem:[#allocation2 + $0x278] sm:$0xff]
        %v984 = vld [vmem:[#allocation2 + $0x280] sm:$0xff]
        %v985 = vld [vmem:[#allocation2 + $0x288] sm:$0xff]
        %v986 = vld [vmem:[#allocation2 + $0x290] sm:$0xff]
        %v987 = vld [vmem:[#allocation2 + $0x298] sm:$0xff]
        %v988 = vld [vmem:[#allocation2 + $0x2a0] sm:$0xff]
        %v989 = vld [vmem:[#allocation2 + $0x2a8] sm:$0xff]
        %v990 = vld [vmem:[#allocation2 + $0x2b0] sm:$0xff]
        %v991 = vld [vmem:[#allocation2 + $0x2b8] sm:$0xff]
        %v992 = vld [vmem:[#allocation2 + $0x2c0] sm:$0xff]
        %v993 = vld [vmem:[#allocation2 + $0x2c8] sm:$0xff]
        %v994 = vld [vmem:[#allocation2 + $0x2d0] sm:$0xff]
        %v995 = vld [vmem:[#allocation2 + $0x2d8] sm:$0xff]
        %v996 = vld [vmem:[#allocation2 + $0x2e0] sm:$0xff]
        %v997 = vld [vmem:[#allocation2 + $0x2e8] sm:$0xff]
        %v998 = vld [vmem:[#allocation2 + $0x2f0] sm:$0xff]
        %v999 = vld [vmem:[#allocation2 + $0x2f8] sm:$0xff]
        %v1000 = vld [vmem:[#allocation2 + $0x300] sm:$0xff]
        %v1001 = vld [vmem:[#allocation2 + $0x308] sm:$0xff]
        %v1002 = vld [vmem:[#allocation2 + $0x310] sm:$0xff]
        %v1003 = vld [vmem:[#allocation2 + $0x318] sm:$0xff]
        %v1004 = vld [vmem:[#allocation2 + $0x320] sm:$0xff]
        %v1005 = vld [vmem:[#allocation2 + $0x328] sm:$0xff]
        %v1006 = vld [vmem:[#allocation2 + $0x330] sm:$0xff]
        %v1007 = vld [vmem:[#allocation2 + $0x338] sm:$0xff]
        %v1008 = vld [vmem:[#allocation2 + $0x340] sm:$0xff]
        %v1009 = vld [vmem:[#allocation2 + $0x348] sm:$0xff]
        %v1010 = vld [vmem:[#allocation2 + $0x350] sm:$0xff]
        %v1011 = vld [vmem:[#allocation2 + $0x358] sm:$0xff]
        %v1012 = vld [vmem:[#allocation2 + $0x360] sm:$0xff]
        %v1013 = vld [vmem:[#allocation2 + $0x368] sm:$0xff]
        %v1014 = vld [vmem:[#allocation2 + $0x370] sm:$0xff]
        %v1015 = vld [vmem:[#allocation2 + $0x378] sm:$0xff]
        %v1016 = vld [vmem:[#allocation2 + $0x380] sm:$0xff]
        %v1017 = vld [vmem:[#allocation2 + $0x388] sm:$0xff]
        %v1018 = vld [vmem:[#allocation2 + $0x390] sm:$0xff]
        %v1019 = vld [vmem:[#allocation2 + $0x398] sm:$0xff]
        %v1020 = vld [vmem:[#allocation2 + $0x3a0] sm:$0xff]
        %v1021 = vld [vmem:[#allocation2 + $0x3a8] sm:$0xff]
        %v1022 = vld [vmem:[#allocation2 + $0x3b0] sm:$0xff]
        %v1023 = vld [vmem:[#allocation2 + $0x3b8] sm:$0xff]
        %v1024 = vld [vmem:[#allocation2 + $0x3c0] sm:$0xff]
        %v1025 = vld [vmem:[#allocation2 + $0x3c8] sm:$0xff]
        %v1026 = vld [vmem:[#allocation2 + $0x3d0] sm:$0xff]
        %v1027 = vld [vmem:[#allocation2 + $0x3d8] sm:$0xff]
        %v1028 = vld [vmem:[#allocation2 + $0x3e0] sm:$0xff]
        %v1029 = vld [vmem:[#allocation2 + $0x3e8] sm:$0xff]
        %v1030 = vld [vmem:[#allocation2 + $0x3f0] sm:$0xff]
        %v1031 = vld [vmem:[#allocation2 + $0x3f8] sm:$0xff]
        %v1033 = vlaneseq
        %v1034 = vshrl.u32 %v1033, 7
        %v1035 = vsub.s32 0, %v1034
        %v1036 = vrot.slane %v199, %v1035
        %v1037 = vlaneseq
        %v1038 = vshrl.u32 %v1037, 7
        %v1039 = vsub.s32 1, %v1038
        %v1040 = vrot.slane %v199, %v1039
        %v1171 = vunpack.c.l.b16 %v904
        %v1172 = vunpack.c.h.b16 %v904
        %v1173 = vunpack.c.l.b16 %v905
        %v1174 = vunpack.c.h.b16 %v905
        %v1175 = vunpack.c.l.b16 %v906
        %v1176 = vunpack.c.h.b16 %v906
        %v1177 = vunpack.c.l.b16 %v907
        %v1178 = vunpack.c.h.b16 %v907
        %v1179 = vunpack.c.l.b16 %v908
        %v1180 = vunpack.c.h.b16 %v908
        %v1181 = vunpack.c.l.b16 %v909
        %v1182 = vunpack.c.h.b16 %v909
        %v1183 = vunpack.c.l.b16 %v910
        %v1184 = vunpack.c.h.b16 %v910
        %v1185 = vunpack.c.l.b16 %v911
        %v1186 = vunpack.c.h.b16 %v911
        %v1187 = vunpack.c.l.b16 %v912
        %v1188 = vunpack.c.h.b16 %v912
        %v1189 = vunpack.c.l.b16 %v913
        %v1190 = vunpack.c.h.b16 %v913
        %v1191 = vunpack.c.l.b16 %v914
        %v1192 = vunpack.c.h.b16 %v914
        %v1193 = vunpack.c.l.b16 %v915
        %v1194 = vunpack.c.h.b16 %v915
        %v1195 = vunpack.c.l.b16 %v916
        %v1196 = vunpack.c.h.b16 %v916
        %v1197 = vunpack.c.l.b16 %v917
        %v1198 = vunpack.c.h.b16 %v917
        %v1199 = vunpack.c.l.b16 %v918
        %v1200 = vunpack.c.h.b16 %v918
        %v1201 = vunpack.c.l.b16 %v919
        %v1202 = vunpack.c.h.b16 %v919
        %v1203 = vunpack.c.l.b16 %v920
        %v1204 = vunpack.c.h.b16 %v920
        %v1205 = vunpack.c.l.b16 %v921
        %v1206 = vunpack.c.h.b16 %v921
        %v1207 = vunpack.c.l.b16 %v922
        %v1208 = vunpack.c.h.b16 %v922
        %v1209 = vunpack.c.l.b16 %v923
        %v1210 = vunpack.c.h.b16 %v923
        %v1211 = vunpack.c.l.b16 %v924
        %v1212 = vunpack.c.h.b16 %v924
        %v1213 = vunpack.c.l.b16 %v925
        %v1214 = vunpack.c.h.b16 %v925
        %v1215 = vunpack.c.l.b16 %v926
        %v1216 = vunpack.c.h.b16 %v926
        %v1217 = vunpack.c.l.b16 %v927
        %v1218 = vunpack.c.h.b16 %v927
        %v1219 = vunpack.c.l.b16 %v928
        %v1220 = vunpack.c.h.b16 %v928
        %v1221 = vunpack.c.l.b16 %v929
        %v1222 = vunpack.c.h.b16 %v929
        %v1223 = vunpack.c.l.b16 %v930
        %v1224 = vunpack.c.h.b16 %v930
        %v1225 = vunpack.c.l.b16 %v931
        %v1226 = vunpack.c.h.b16 %v931
        %v1227 = vunpack.c.l.b16 %v932
        %v1228 = vunpack.c.h.b16 %v932
        %v1229 = vunpack.c.l.b16 %v933
        %v1230 = vunpack.c.h.b16 %v933
        %v1231 = vunpack.c.l.b16 %v934
        %v1232 = vunpack.c.h.b16 %v934
        %v1233 = vunpack.c.l.b16 %v935
        %v1234 = vunpack.c.h.b16 %v935
        %v1235 = vunpack.c.l.b16 %v936
        %v1236 = vunpack.c.h.b16 %v936
        %v1237 = vunpack.c.l.b16 %v937
        %v1238 = vunpack.c.h.b16 %v937
        %v1239 = vunpack.c.l.b16 %v938
        %v1240 = vunpack.c.h.b16 %v938
        %v1241 = vunpack.c.l.b16 %v939
        %v1242 = vunpack.c.h.b16 %v939
        %v1243 = vunpack.c.l.b16 %v940
        %v1244 = vunpack.c.h.b16 %v940
        %v1245 = vunpack.c.l.b16 %v941
        %v1246 = vunpack.c.h.b16 %v941
        %v1247 = vunpack.c.l.b16 %v942
        %v1248 = vunpack.c.h.b16 %v942
        %v1249 = vunpack.c.l.b16 %v943
        %v1250 = vunpack.c.h.b16 %v943
        %v1251 = vunpack.c.l.b16 %v944
        %v1252 = vunpack.c.h.b16 %v944
        %v1253 = vunpack.c.l.b16 %v945
        %v1254 = vunpack.c.h.b16 %v945
        %v1255 = vunpack.c.l.b16 %v946
        %v1256 = vunpack.c.h.b16 %v946
        %v1257 = vunpack.c.l.b16 %v947
        %v1258 = vunpack.c.h.b16 %v947
        %v1259 = vunpack.c.l.b16 %v948
        %v1260 = vunpack.c.h.b16 %v948
        %v1261 = vunpack.c.l.b16 %v949
        %v1262 = vunpack.c.h.b16 %v949
        %v1263 = vunpack.c.l.b16 %v950
        %v1264 = vunpack.c.h.b16 %v950
        %v1265 = vunpack.c.l.b16 %v951
        %v1266 = vunpack.c.h.b16 %v951
        %v1267 = vunpack.c.l.b16 %v952
        %v1268 = vunpack.c.h.b16 %v952
        %v1269 = vunpack.c.l.b16 %v953
        %v1270 = vunpack.c.h.b16 %v953
        %v1271 = vunpack.c.l.b16 %v954
        %v1272 = vunpack.c.h.b16 %v954
        %v1273 = vunpack.c.l.b16 %v955
        %v1274 = vunpack.c.h.b16 %v955
        %v1275 = vunpack.c.l.b16 %v956
        %v1276 = vunpack.c.h.b16 %v956
        %v1277 = vunpack.c.l.b16 %v957
        %v1278 = vunpack.c.h.b16 %v957
        %v1279 = vunpack.c.l.b16 %v958
        %v1280 = vunpack.c.h.b16 %v958
        %v1281 = vunpack.c.l.b16 %v959
        %v1282 = vunpack.c.h.b16 %v959
        %v1283 = vunpack.c.l.b16 %v960
        %v1284 = vunpack.c.h.b16 %v960
        %v1285 = vunpack.c.l.b16 %v961
        %v1286 = vunpack.c.h.b16 %v961
        %v1287 = vunpack.c.l.b16 %v962
        %v1288 = vunpack.c.h.b16 %v962
        %v1289 = vunpack.c.l.b16 %v963
        %v1290 = vunpack.c.h.b16 %v963
        %v1291 = vunpack.c.l.b16 %v964
        %v1292 = vunpack.c.h.b16 %v964
        %v1293 = vunpack.c.l.b16 %v965
        %v1294 = vunpack.c.h.b16 %v965
        %v1295 = vunpack.c.l.b16 %v966
        %v1296 = vunpack.c.h.b16 %v966
        %v1297 = vunpack.c.l.b16 %v967
        %v1298 = vunpack.c.h.b16 %v967
        %v1299 = vunpack.c.l.b16 %v968
        %v1300 = vunpack.c.h.b16 %v968
        %v1301 = vunpack.c.l.b16 %v969
        %v1302 = vunpack.c.h.b16 %v969
        %v1303 = vunpack.c.l.b16 %v970
        %v1304 = vunpack.c.h.b16 %v970
        %v1305 = vunpack.c.l.b16 %v971
        %v1306 = vunpack.c.h.b16 %v971
        %v1307 = vunpack.c.l.b16 %v972
        %v1308 = vunpack.c.h.b16 %v972
        %v1309 = vunpack.c.l.b16 %v973
        %v1310 = vunpack.c.h.b16 %v973
        %v1311 = vunpack.c.l.b16 %v974
        %v1312 = vunpack.c.h.b16 %v974
        %v1313 = vunpack.c.l.b16 %v975
        %v1314 = vunpack.c.h.b16 %v975
        %v1315 = vunpack.c.l.b16 %v976
        %v1316 = vunpack.c.h.b16 %v976
        %v1317 = vunpack.c.l.b16 %v977
        %v1318 = vunpack.c.h.b16 %v977
        %v1319 = vunpack.c.l.b16 %v978
        %v1320 = vunpack.c.h.b16 %v978
        %v1321 = vunpack.c.l.b16 %v979
        %v1322 = vunpack.c.h.b16 %v979
        %v1323 = vunpack.c.l.b16 %v980
        %v1324 = vunpack.c.h.b16 %v980
        %v1325 = vunpack.c.l.b16 %v981
        %v1326 = vunpack.c.h.b16 %v981
        %v1327 = vunpack.c.l.b16 %v982
        %v1328 = vunpack.c.h.b16 %v982
        %v1329 = vunpack.c.l.b16 %v983
        %v1330 = vunpack.c.h.b16 %v983
        %v1331 = vunpack.c.l.b16 %v984
        %v1332 = vunpack.c.h.b16 %v984
        %v1333 = vunpack.c.l.b16 %v985
        %v1334 = vunpack.c.h.b16 %v985
        %v1335 = vunpack.c.l.b16 %v986
        %v1336 = vunpack.c.h.b16 %v986
        %v1337 = vunpack.c.l.b16 %v987
        %v1338 = vunpack.c.h.b16 %v987
        %v1339 = vunpack.c.l.b16 %v988
        %v1340 = vunpack.c.h.b16 %v988
        %v1341 = vunpack.c.l.b16 %v989
        %v1342 = vunpack.c.h.b16 %v989
        %v1343 = vunpack.c.l.b16 %v990
        %v1344 = vunpack.c.h.b16 %v990
        %v1345 = vunpack.c.l.b16 %v991
        %v1346 = vunpack.c.h.b16 %v991
        %v1347 = vunpack.c.l.b16 %v992
        %v1348 = vunpack.c.h.b16 %v992
        %v1349 = vunpack.c.l.b16 %v993
        %v1350 = vunpack.c.h.b16 %v993
        %v1351 = vunpack.c.l.b16 %v994
        %v1352 = vunpack.c.h.b16 %v994
        %v1353 = vunpack.c.l.b16 %v995
        %v1354 = vunpack.c.h.b16 %v995
        %v1355 = vunpack.c.l.b16 %v996
        %v1356 = vunpack.c.h.b16 %v996
        %v1357 = vunpack.c.l.b16 %v997
        %v1358 = vunpack.c.h.b16 %v997
        %v1359 = vunpack.c.l.b16 %v998
        %v1360 = vunpack.c.h.b16 %v998
        %v1361 = vunpack.c.l.b16 %v999
        %v1362 = vunpack.c.h.b16 %v999
        %v1363 = vunpack.c.l.b16 %v1000
        %v1364 = vunpack.c.h.b16 %v1000
        %v1365 = vunpack.c.l.b16 %v1001
        %v1366 = vunpack.c.h.b16 %v1001
        %v1367 = vunpack.c.l.b16 %v1002
        %v1368 = vunpack.c.h.b16 %v1002
        %v1369 = vunpack.c.l.b16 %v1003
        %v1370 = vunpack.c.h.b16 %v1003
        %v1371 = vunpack.c.l.b16 %v1004
        %v1372 = vunpack.c.h.b16 %v1004
        %v1373 = vunpack.c.l.b16 %v1005
        %v1374 = vunpack.c.h.b16 %v1005
        %v1375 = vunpack.c.l.b16 %v1006
        %v1376 = vunpack.c.h.b16 %v1006
        %v1377 = vunpack.c.l.b16 %v1007
        %v1378 = vunpack.c.h.b16 %v1007
        %v1379 = vunpack.c.l.b16 %v1008
        %v1380 = vunpack.c.h.b16 %v1008
        %v1381 = vunpack.c.l.b16 %v1009
        %v1382 = vunpack.c.h.b16 %v1009
        %v1383 = vunpack.c.l.b16 %v1010
        %v1384 = vunpack.c.h.b16 %v1010
        %v1385 = vunpack.c.l.b16 %v1011
        %v1386 = vunpack.c.h.b16 %v1011
        %v1387 = vunpack.c.l.b16 %v1012
        %v1388 = vunpack.c.h.b16 %v1012
        %v1389 = vunpack.c.l.b16 %v1013
        %v1390 = vunpack.c.h.b16 %v1013
        %v1391 = vunpack.c.l.b16 %v1014
        %v1392 = vunpack.c.h.b16 %v1014
        %v1393 = vunpack.c.l.b16 %v1015
        %v1394 = vunpack.c.h.b16 %v1015
        %v1395 = vunpack.c.l.b16 %v1016
        %v1396 = vunpack.c.h.b16 %v1016
        %v1397 = vunpack.c.l.b16 %v1017
        %v1398 = vunpack.c.h.b16 %v1017
        %v1399 = vunpack.c.l.b16 %v1018
        %v1400 = vunpack.c.h.b16 %v1018
        %v1401 = vunpack.c.l.b16 %v1019
        %v1402 = vunpack.c.h.b16 %v1019
        %v1403 = vunpack.c.l.b16 %v1020
        %v1404 = vunpack.c.h.b16 %v1020
        %v1405 = vunpack.c.l.b16 %v1021
        %v1406 = vunpack.c.h.b16 %v1021
        %v1407 = vunpack.c.l.b16 %v1022
        %v1408 = vunpack.c.h.b16 %v1022
        %v1409 = vunpack.c.l.b16 %v1023
        %v1410 = vunpack.c.h.b16 %v1023
        %v1411 = vunpack.c.l.b16 %v1024
        %v1412 = vunpack.c.h.b16 %v1024
        %v1413 = vunpack.c.l.b16 %v1025
        %v1414 = vunpack.c.h.b16 %v1025
        %v1415 = vunpack.c.l.b16 %v1026
        %v1416 = vunpack.c.h.b16 %v1026
        %v1417 = vunpack.c.l.b16 %v1027
        %v1418 = vunpack.c.h.b16 %v1027
        %v1419 = vunpack.c.l.b16 %v1028
        %v1420 = vunpack.c.h.b16 %v1028
        %v1421 = vunpack.c.l.b16 %v1029
        %v1422 = vunpack.c.h.b16 %v1029
        %v1423 = vunpack.c.l.b16 %v1030
        %v1424 = vunpack.c.h.b16 %v1030
        %v1425 = vunpack.c.l.b16 %v1031
        %v1426 = vunpack.c.h.b16 %v1031
        %v1427 = vpack.c.b16 %v1173, %v1171
        %v1428 = vpack.c.b16 %v1174, %v1172
        %v1429 = vpack.c.b16 %v1177, %v1175
        %v1430 = vpack.c.b16 %v1178, %v1176
        %v1431 = vpack.c.b16 %v1181, %v1179
        %v1432 = vpack.c.b16 %v1182, %v1180
        %v1433 = vpack.c.b16 %v1185, %v1183
        %v1434 = vpack.c.b16 %v1186, %v1184
        %v1435 = vpack.c.b16 %v1189, %v1187
        %v1436 = vpack.c.b16 %v1190, %v1188
        %v1437 = vpack.c.b16 %v1193, %v1191
        %v1438 = vpack.c.b16 %v1194, %v1192
        %v1439 = vpack.c.b16 %v1197, %v1195
        %v1440 = vpack.c.b16 %v1198, %v1196
        %v1441 = vpack.c.b16 %v1201, %v1199
        %v1442 = vpack.c.b16 %v1202, %v1200
        %v1443 = vpack.c.b16 %v1205, %v1203
        %v1444 = vpack.c.b16 %v1206, %v1204
        %v1445 = vpack.c.b16 %v1209, %v1207
        %v1446 = vpack.c.b16 %v1210, %v1208
        %v1447 = vpack.c.b16 %v1213, %v1211
        %v1448 = vpack.c.b16 %v1214, %v1212
        %v1449 = vpack.c.b16 %v1217, %v1215
        %v1450 = vpack.c.b16 %v1218, %v1216
        %v1451 = vpack.c.b16 %v1221, %v1219
        %v1452 = vpack.c.b16 %v1222, %v1220
        %v1453 = vpack.c.b16 %v1225, %v1223
        %v1454 = vpack.c.b16 %v1226, %v1224
        %v1455 = vpack.c.b16 %v1229, %v1227
        %v1456 = vpack.c.b16 %v1230, %v1228
        %v1457 = vpack.c.b16 %v1233, %v1231
        %v1458 = vpack.c.b16 %v1234, %v1232
        %v1459 = vpack.c.b16 %v1237, %v1235
        %v1460 = vpack.c.b16 %v1238, %v1236
        %v1461 = vpack.c.b16 %v1241, %v1239
        %v1462 = vpack.c.b16 %v1242, %v1240
        %v1463 = vpack.c.b16 %v1245, %v1243
        %v1464 = vpack.c.b16 %v1246, %v1244
        %v1465 = vpack.c.b16 %v1249, %v1247
        %v1466 = vpack.c.b16 %v1250, %v1248
        %v1467 = vpack.c.b16 %v1253, %v1251
        %v1468 = vpack.c.b16 %v1254, %v1252
        %v1469 = vpack.c.b16 %v1257, %v1255
        %v1470 = vpack.c.b16 %v1258, %v1256
        %v1471 = vpack.c.b16 %v1261, %v1259
        %v1472 = vpack.c.b16 %v1262, %v1260
        %v1473 = vpack.c.b16 %v1265, %v1263
        %v1474 = vpack.c.b16 %v1266, %v1264
        %v1475 = vpack.c.b16 %v1269, %v1267
        %v1476 = vpack.c.b16 %v1270, %v1268
        %v1477 = vpack.c.b16 %v1273, %v1271
        %v1478 = vpack.c.b16 %v1274, %v1272
        %v1479 = vpack.c.b16 %v1277, %v1275
        %v1480 = vpack.c.b16 %v1278, %v1276
        %v1481 = vpack.c.b16 %v1281, %v1279
        %v1482 = vpack.c.b16 %v1282, %v1280
        %v1483 = vpack.c.b16 %v1285, %v1283
        %v1484 = vpack.c.b16 %v1286, %v1284
        %v1485 = vpack.c.b16 %v1289, %v1287
        %v1486 = vpack.c.b16 %v1290, %v1288
        %v1487 = vpack.c.b16 %v1293, %v1291
        %v1488 = vpack.c.b16 %v1294, %v1292
        %v1489 = vpack.c.b16 %v1297, %v1295
        %v1490 = vpack.c.b16 %v1298, %v1296
        %v1491 = vpack.c.b16 %v1301, %v1299
        %v1492 = vpack.c.b16 %v1302, %v1300
        %v1493 = vpack.c.b16 %v1305, %v1303
        %v1494 = vpack.c.b16 %v1306, %v1304
        %v1495 = vpack.c.b16 %v1309, %v1307
        %v1496 = vpack.c.b16 %v1310, %v1308
        %v1497 = vpack.c.b16 %v1313, %v1311
        %v1498 = vpack.c.b16 %v1314, %v1312
        %v1499 = vpack.c.b16 %v1317, %v1315
        %v1500 = vpack.c.b16 %v1318, %v1316
        %v1501 = vpack.c.b16 %v1321, %v1319
        %v1502 = vpack.c.b16 %v1322, %v1320
        %v1503 = vpack.c.b16 %v1325, %v1323
        %v1504 = vpack.c.b16 %v1326, %v1324
        %v1505 = vpack.c.b16 %v1329, %v1327
        %v1506 = vpack.c.b16 %v1330, %v1328
        %v1507 = vpack.c.b16 %v1333, %v1331
        %v1508 = vpack.c.b16 %v1334, %v1332
        %v1509 = vpack.c.b16 %v1337, %v1335
        %v1510 = vpack.c.b16 %v1338, %v1336
        %v1511 = vpack.c.b16 %v1341, %v1339
        %v1512 = vpack.c.b16 %v1342, %v1340
        %v1513 = vpack.c.b16 %v1345, %v1343
        %v1514 = vpack.c.b16 %v1346, %v1344
        %v1515 = vpack.c.b16 %v1349, %v1347
        %v1516 = vpack.c.b16 %v1350, %v1348
        %v1517 = vpack.c.b16 %v1353, %v1351
        %v1518 = vpack.c.b16 %v1354, %v1352
        %v1519 = vpack.c.b16 %v1357, %v1355
        %v1520 = vpack.c.b16 %v1358, %v1356
        %v1521 = vpack.c.b16 %v1361, %v1359
        %v1522 = vpack.c.b16 %v1362, %v1360
        %v1523 = vpack.c.b16 %v1365, %v1363
        %v1524 = vpack.c.b16 %v1366, %v1364
        %v1525 = vpack.c.b16 %v1369, %v1367
        %v1526 = vpack.c.b16 %v1370, %v1368
        %v1527 = vpack.c.b16 %v1373, %v1371
        %v1528 = vpack.c.b16 %v1374, %v1372
        %v1529 = vpack.c.b16 %v1377, %v1375
        %v1530 = vpack.c.b16 %v1378, %v1376
        %v1531 = vpack.c.b16 %v1381, %v1379
        %v1532 = vpack.c.b16 %v1382, %v1380
        %v1533 = vpack.c.b16 %v1385, %v1383
        %v1534 = vpack.c.b16 %v1386, %v1384
        %v1535 = vpack.c.b16 %v1389, %v1387
        %v1536 = vpack.c.b16 %v1390, %v1388
        %v1537 = vpack.c.b16 %v1393, %v1391
        %v1538 = vpack.c.b16 %v1394, %v1392
        %v1539 = vpack.c.b16 %v1397, %v1395
        %v1540 = vpack.c.b16 %v1398, %v1396
        %v1541 = vpack.c.b16 %v1401, %v1399
        %v1542 = vpack.c.b16 %v1402, %v1400
        %v1543 = vpack.c.b16 %v1405, %v1403
        %v1544 = vpack.c.b16 %v1406, %v1404
        %v1545 = vpack.c.b16 %v1409, %v1407
        %v1546 = vpack.c.b16 %v1410, %v1408
        %v1547 = vpack.c.b16 %v1413, %v1411
        %v1548 = vpack.c.b16 %v1414, %v1412
        %v1549 = vpack.c.b16 %v1417, %v1415
        %v1550 = vpack.c.b16 %v1418, %v1416
        %v1551 = vpack.c.b16 %v1421, %v1419
        %v1552 = vpack.c.b16 %v1422, %v1420
        %v1553 = vpack.c.b16 %v1425, %v1423
        %v1554 = vpack.c.b16 %v1426, %v1424
        %1683 = vmatprep.subr.bf16.mxu0 %v1428
        %1684 = vmatpush1.bf16.msra.mxu0 %v1427
        %1685 = vmatprep.subr.bf16.mxu0 %v1430
        %1686 = vmatpush1.bf16.msra.mxu0 %v1429
        %1687 = vmatprep.subr.bf16.mxu0 %v1432
        %1688 = vmatpush1.bf16.msra.mxu0 %v1431
        %1689 = vmatprep.subr.bf16.mxu0 %v1434
        %1690 = vmatpush1.bf16.msra.mxu0 %v1433
        %1691 = vmatprep.subr.bf16.mxu0 %v1436
        %1692 = vmatpush1.bf16.msra.mxu0 %v1435
        %1693 = vmatprep.subr.bf16.mxu0 %v1438
        %1694 = vmatpush1.bf16.msra.mxu0 %v1437
        %1695 = vmatprep.subr.bf16.mxu0 %v1440
        %1696 = vmatpush1.bf16.msra.mxu0 %v1439
        %1697 = vmatprep.subr.bf16.mxu0 %v1442
        %1698 = vmatpush1.bf16.msra.mxu0 %v1441
        %1699 = vmatprep.subr.bf16.mxu0 %v1444
        %1700 = vmatpush1.bf16.msra.mxu0 %v1443
        %1701 = vmatprep.subr.bf16.mxu0 %v1446
        %1702 = vmatpush1.bf16.msra.mxu0 %v1445
        %1703 = vmatprep.subr.bf16.mxu0 %v1448
        %1704 = vmatpush1.bf16.msra.mxu0 %v1447
        %1705 = vmatprep.subr.bf16.mxu0 %v1450
        %1706 = vmatpush1.bf16.msra.mxu0 %v1449
        %1707 = vmatprep.subr.bf16.mxu0 %v1452
        %1708 = vmatpush1.bf16.msra.mxu0 %v1451
        %1709 = vmatprep.subr.bf16.mxu0 %v1454
        %1710 = vmatpush1.bf16.msra.mxu0 %v1453
        %1711 = vmatprep.subr.bf16.mxu0 %v1456
        %1712 = vmatpush1.bf16.msra.mxu0 %v1455
        %1713 = vmatprep.subr.bf16.mxu0 %v1458
        %1714 = vmatpush1.bf16.msra.mxu0 %v1457
        %1715 = vmatprep.mubr.bf16.mxu0 %v785
        %1716 = vmatmul.mubr.bf16.gmra.mrb[0].mxu0 %v784
        %v1717 = vpop.f32.mrb[0].mxu0
        %v1718 = vadd.f32 %v1036, %v1717
        %v1719 = vpop.f32.mrb[0].mxu0
        %v1720 = vadd.f32 %v1040, %v1719
        %v1721 = vpop.f32.mrb[0].mxu0
        %v1722 = vadd.f32 %v1036, %v1721
        %v1723 = vpop.f32.mrb[0].mxu0
        %v1724 = vadd.f32 %v1040, %v1723
        %1725 = vmatprep.mubr.bf16.mxu0 %v787
        %1726 = vmatmul.mubr.bf16.gmra.mrb[0].mxu0 %v786
        %v1727 = vpop.f32.mrb[0].mxu0
        %v1728 = vadd.f32 %v1036, %v1727
        %v1729 = vpop.f32.mrb[0].mxu0
        %v1730 = vadd.f32 %v1040, %v1729
        %v1731 = vpop.f32.mrb[0].mxu0
        %v1732 = vadd.f32 %v1036, %v1731
        %v1733 = vpop.f32.mrb[0].mxu0
        %v1734 = vadd.f32 %v1040, %v1733
        %1735 = vmatprep.mubr.bf16.mxu0 %v789
        %1736 = vmatmul.mubr.bf16.gmra.mrb[0].mxu0 %v788
        %v1737 = vpop.f32.mrb[0].mxu0
        %v1738 = vadd.f32 %v1036, %v1737
        %v1739 = vpop.f32.mrb[0].mxu0
        %v1740 = vadd.f32 %v1040, %v1739
        %v1741 = vpop.f32.mrb[0].mxu0
        %v1742 = vadd.f32 %v1036, %v1741
        %v1743 = vpop.f32.mrb[0].mxu0
        %v1744 = vadd.f32 %v1040, %v1743
        %1745 = vmatprep.mubr.bf16.mxu0 %v791
        %1746 = vmatmul.mubr.bf16.gmra.mrb[0].mxu0 %v790
        %v1747 = vpop.f32.mrb[0].mxu0
        %v1748 = vadd.f32 %v1036, %v1747
        %v1749 = vpop.f32.mrb[0].mxu0
        %v1750 = vadd.f32 %v1040, %v1749
        %v1751 = vpop.f32.mrb[0].mxu0
        %v1752 = vadd.f32 %v1036, %v1751
        %v1753 = vpop.f32.mrb[0].mxu0
        %v1754 = vadd.f32 %v1040, %v1753
        %1755 = vdwg.mxu0
        %1756 = vmatprep.subr.bf16.mxu0 %v1460
        %1757 = vmatpush1.bf16.msra.mxu0 %v1459
        %1758 = vmatprep.subr.bf16.mxu0 %v1462
        %1759 = vmatpush1.bf16.msra.mxu0 %v1461
        %1760 = vmatprep.subr.bf16.mxu0 %v1464
        %1761 = vmatpush1.bf16.msra.mxu0 %v1463
        %1762 = vmatprep.subr.bf16.mxu0 %v1466
        %1763 = vmatpush1.bf16.msra.mxu0 %v1465
        %1764 = vmatprep.subr.bf16.mxu0 %v1468
        %1765 = vmatpush1.bf16.msra.mxu0 %v1467
        %1766 = vmatprep.subr.bf16.mxu0 %v1470
        %1767 = vmatpush1.bf16.msra.mxu0 %v1469
        %1768 = vmatprep.subr.bf16.mxu0 %v1472
        %1769 = vmatpush1.bf16.msra.mxu0 %v1471
        %1770 = vmatprep.subr.bf16.mxu0 %v1474
        %1771 = vmatpush1.bf16.msra.mxu0 %v1473
        %1772 = vmatprep.subr.bf16.mxu0 %v1476
        %1773 = vmatpush1.bf16.msra.mxu0 %v1475
        %1774 = vmatprep.subr.bf16.mxu0 %v1478
        %1775 = vmatpush1.bf16.msra.mxu0 %v1477
        %1776 = vmatprep.subr.bf16.mxu0 %v1480
        %1777 = vmatpush1.bf16.msra.mxu0 %v1479
        %1778 = vmatprep.subr.bf16.mxu0 %v1482
        %1779 = vmatpush1.bf16.msra.mxu0 %v1481
        %1780 = vmatprep.subr.bf16.mxu0 %v1484
        %1781 = vmatpush1.bf16.msra.mxu0 %v1483
        %1782 = vmatprep.subr.bf16.mxu0 %v1486
        %1783 = vmatpush1.bf16.msra.mxu0 %v1485
        %1784 = vmatprep.subr.bf16.mxu0 %v1488
        %1785 = vmatpush1.bf16.msra.mxu0 %v1487
        %1786 = vmatprep.subr.bf16.mxu0 %v1490
        %1787 = vmatpush1.bf16.msra.mxu0 %v1489
        %1788 = vmatprep.mubr.bf16.mxu0 %v817
        %1789 = vmatmul.mubr.bf16.gmra.mrb[0].mxu0 %v816
        %v1790 = vpop.f32.mrb[0].mxu0
        %v1791 = vadd.f32 %v1718, %v1790
        %v1792 = vpop.f32.mrb[0].mxu0
        %v1793 = vadd.f32 %v1720, %v1792
        %v1794 = vpop.f32.mrb[0].mxu0
        %v1795 = vadd.f32 %v1722, %v1794
        %v1796 = vpop.f32.mrb[0].mxu0
        %v1797 = vadd.f32 %v1724, %v1796
        %1798 = vmatprep.mubr.bf16.mxu0 %v819
        %1799 = vmatmul.mubr.bf16.gmra.mrb[0].mxu0 %v818
        %v1800 = vpop.f32.mrb[0].mxu0
        %v1801 = vadd.f32 %v1728, %v1800
        %v1802 = vpop.f32.mrb[0].mxu0
        %v1803 = vadd.f32 %v1730, %v1802
        %v1804 = vpop.f32.mrb[0].mxu0
        %v1805 = vadd.f32 %v1732, %v1804
        %v1806 = vpop.f32.mrb[0].mxu0
        %v1807 = vadd.f32 %v1734, %v1806
        %1808 = vmatprep.mubr.bf16.mxu0 %v821
        %1809 = vmatmul.mubr.bf16.gmra.mrb[0].mxu0 %v820
        %v1810 = vpop.f32.mrb[0].mxu0
        %v1811 = vadd.f32 %v1738, %v1810
        %v1812 = vpop.f32.mrb[0].mxu0
        %v1813 = vadd.f32 %v1740, %v1812
        %v1814 = vpop.f32.mrb[0].mxu0
        %v1815 = vadd.f32 %v1742, %v1814
        %v1816 = vpop.f32.mrb[0].mxu0
        %v1817 = vadd.f32 %v1744, %v1816
        %1818 = vmatprep.mubr.bf16.mxu0 %v823
        %1819 = vmatmul.mubr.bf16.gmra.mrb[0].mxu0 %v822
        %v1820 = vpop.f32.mrb[0].mxu0
        %v1821 = vadd.f32 %v1748, %v1820
        %v1822 = vpop.f32.mrb[0].mxu0
        %v1823 = vadd.f32 %v1750, %v1822
        %v1824 = vpop.f32.mrb[0].mxu0
        %v1825 = vadd.f32 %v1752, %v1824
        %v1826 = vpop.f32.mrb[0].mxu0
        %v1827 = vadd.f32 %v1754, %v1826
        %1828 = vdwg.mxu0
        %1829 = vmatprep.subr.bf16.mxu0 %v1492
        %1830 = vmatpush1.bf16.msra.mxu0 %v1491
        %1831 = vmatprep.subr.bf16.mxu0 %v1494
        %1832 = vmatpush1.bf16.msra.mxu0 %v1493
        %1833 = vmatprep.subr.bf16.mxu0 %v1496
        %1834 = vmatpush1.bf16.msra.mxu0 %v1495
        %1835 = vmatprep.subr.bf16.mxu0 %v1498
        %1836 = vmatpush1.bf16.msra.mxu0 %v1497
        %1837 = vmatprep.subr.bf16.mxu0 %v1500
        %1838 = vmatpush1.bf16.msra.mxu0 %v1499
        %1839 = vmatprep.subr.bf16.mxu0 %v1502
        %1840 = vmatpush1.bf16.msra.mxu0 %v1501
        %1841 = vmatprep.subr.bf16.mxu0 %v1504
        %1842 = vmatpush1.bf16.msra.mxu0 %v1503
        %1843 = vmatprep.subr.bf16.mxu0 %v1506
        %1844 = vmatpush1.bf16.msra.mxu0 %v1505
        %1845 = vmatprep.subr.bf16.mxu0 %v1508
        %1846 = vmatpush1.bf16.msra.mxu0 %v1507
        %1847 = vmatprep.subr.bf16.mxu0 %v1510
        %1848 = vmatpush1.bf16.msra.mxu0 %v1509
        %1849 = vmatprep.subr.bf16.mxu0 %v1512
        %1850 = vmatpush1.bf16.msra.mxu0 %v1511
        %1851 = vmatprep.subr.bf16.mxu0 %v1514
        %1852 = vmatpush1.bf16.msra.mxu0 %v1513
        %1853 = vmatprep.subr.bf16.mxu0 %v1516
        %1854 = vmatpush1.bf16.msra.mxu0 %v1515
        %1855 = vmatprep.subr.bf16.mxu0 %v1518
        %1856 = vmatpush1.bf16.msra.mxu0 %v1517
        %1857 = vmatprep.subr.bf16.mxu0 %v1520
        %1858 = vmatpush1.bf16.msra.mxu0 %v1519
        %1859 = vmatprep.subr.bf16.mxu0 %v1522
        %1860 = vmatpush1.bf16.msra.mxu0 %v1521
        %1861 = vmatprep.mubr.bf16.mxu0 %v857
        %1862 = vmatmul.mubr.bf16.gmra.mrb[0].mxu0 %v856
        %v1863 = vpop.f32.mrb[0].mxu0
        %v1864 = vadd.f32 %v1791, %v1863
        %v1865 = vpop.f32.mrb[0].mxu0
        %v1866 = vadd.f32 %v1793, %v1865
        %v1867 = vpop.f32.mrb[0].mxu0
        %v1868 = vadd.f32 %v1795, %v1867
        %v1869 = vpop.f32.mrb[0].mxu0
        %v1870 = vadd.f32 %v1797, %v1869
        %1871 = vmatprep.mubr.bf16.mxu0 %v859
        %1872 = vmatmul.mubr.bf16.gmra.mrb[0].mxu0 %v858
        %v1873 = vpop.f32.mrb[0].mxu0
        %v1874 = vadd.f32 %v1801, %v1873
        %v1875 = vpop.f32.mrb[0].mxu0
        %v1876 = vadd.f32 %v1803, %v1875
        %v1877 = vpop.f32.mrb[0].mxu0
        %v1878 = vadd.f32 %v1805, %v1877
        %v1879 = vpop.f32.mrb[0].mxu0
        %v1880 = vadd.f32 %v1807, %v1879
        %1881 = vmatprep.mubr.bf16.mxu0 %v861
        %1882 = vmatmul.mubr.bf16.gmra.mrb[0].mxu0 %v860
        %v1883 = vpop.f32.mrb[0].mxu0
        %v1884 = vadd.f32 %v1811, %v1883
        %v1885 = vpop.f32.mrb[0].mxu0
        %v1886 = vadd.f32 %v1813, %v1885
        %v1887 = vpop.f32.mrb[0].mxu0
        %v1888 = vadd.f32 %v1815, %v1887
        %v1889 = vpop.f32.mrb[0].mxu0
        %v1890 = vadd.f32 %v1817, %v1889
        %1891 = vmatprep.mubr.bf16.mxu0 %v863
        %1892 = vmatmul.mubr.bf16.gmra.mrb[0].mxu0 %v862
        %v1893 = vpop.f32.mrb[0].mxu0
        %v1894 = vadd.f32 %v1821, %v1893
        %v1895 = vpop.f32.mrb[0].mxu0
        %v1896 = vadd.f32 %v1823, %v1895
        %v1897 = vpop.f32.mrb[0].mxu0
        %v1898 = vadd.f32 %v1825, %v1897
        %v1899 = vpop.f32.mrb[0].mxu0
        %v1900 = vadd.f32 %v1827, %v1899
        %1901 = vdwg.mxu0
        %1902 = vmatprep.subr.bf16.mxu0 %v1524
        %1903 = vmatpush1.bf16.msra.mxu0 %v1523
        %1904 = vmatprep.subr.bf16.mxu0 %v1526
        %1905 = vmatpush1.bf16.msra.mxu0 %v1525
        %1906 = vmatprep.subr.bf16.mxu0 %v1528
        %1907 = vmatpush1.bf16.msra.mxu0 %v1527
        %1908 = vmatprep.subr.bf16.mxu0 %v1530
        %1909 = vmatpush1.bf16.msra.mxu0 %v1529
        %1910 = vmatprep.subr.bf16.mxu0 %v1532
        %1911 = vmatpush1.bf16.msra.mxu0 %v1531
        %1912 = vmatprep.subr.bf16.mxu0 %v1534
        %1913 = vmatpush1.bf16.msra.mxu0 %v1533
        %1914 = vmatprep.subr.bf16.mxu0 %v1536
        %1915 = vmatpush1.bf16.msra.mxu0 %v1535
        %1916 = vmatprep.subr.bf16.mxu0 %v1538
        %1917 = vmatpush1.bf16.msra.mxu0 %v1537
        %1918 = vmatprep.subr.bf16.mxu0 %v1540
        %1919 = vmatpush1.bf16.msra.mxu0 %v1539
        %1920 = vmatprep.subr.bf16.mxu0 %v1542
        %1921 = vmatpush1.bf16.msra.mxu0 %v1541
        %1922 = vmatprep.subr.bf16.mxu0 %v1544
        %1923 = vmatpush1.bf16.msra.mxu0 %v1543
        %1924 = vmatprep.subr.bf16.mxu0 %v1546
        %1925 = vmatpush1.bf16.msra.mxu0 %v1545
        %1926 = vmatprep.subr.bf16.mxu0 %v1548
        %1927 = vmatpush1.bf16.msra.mxu0 %v1547
        %1928 = vmatprep.subr.bf16.mxu0 %v1550
        %1929 = vmatpush1.bf16.msra.mxu0 %v1549
        %1930 = vmatprep.subr.bf16.mxu0 %v1552
        %1931 = vmatpush1.bf16.msra.mxu0 %v1551
        %1932 = vmatprep.subr.bf16.mxu0 %v1554
        %1933 = vmatpush1.bf16.msra.mxu0 %v1553
        %1934 = vmatprep.mubr.bf16.mxu0 %v889
        %1935 = vmatmul.mubr.bf16.gmra.mrb[0].mxu0 %v888
        %v1936 = vpop.f32.mrb[0].mxu0
        %v1937 = vadd.f32 %v1864, %v1936
        %v1938 = vpop.f32.mrb[0].mxu0
        %v1939 = vadd.f32 %v1866, %v1938
        %v1940 = vpop.f32.mrb[0].mxu0
        %v1941 = vadd.f32 %v1868, %v1940
        %v1942 = vpop.f32.mrb[0].mxu0
        %v1943 = vadd.f32 %v1870, %v1942
        %1944 = vmatprep.mubr.bf16.mxu0 %v891
        %1945 = vmatmul.mubr.bf16.gmra.mrb[0].mxu0 %v890
        %v1946 = vpop.f32.mrb[0].mxu0
        %v1947 = vadd.f32 %v1874, %v1946
        %v1948 = vpop.f32.mrb[0].mxu0
        %v1949 = vadd.f32 %v1876, %v1948
        %v1950 = vpop.f32.mrb[0].mxu0
        %v1951 = vadd.f32 %v1878, %v1950
        %v1952 = vpop.f32.mrb[0].mxu0
        %v1953 = vadd.f32 %v1880, %v1952
        %1954 = vmatprep.mubr.bf16.mxu0 %v893
        %1955 = vmatmul.mubr.bf16.gmra.mrb[0].mxu0 %v892
        %v1956 = vpop.f32.mrb[0].mxu0
        %v1957 = vadd.f32 %v1884, %v1956
        %v1958 = vpop.f32.mrb[0].mxu0
        %v1959 = vadd.f32 %v1886, %v1958
        %v1960 = vpop.f32.mrb[0].mxu0
        %v1961 = vadd.f32 %v1888, %v1960
        %v1962 = vpop.f32.mrb[0].mxu0
        %v1963 = vadd.f32 %v1890, %v1962
        %1964 = vmatprep.mubr.bf16.mxu0 %v895
        %1965 = vmatmul.mubr.bf16.gmra.mrb[0].mxu0 %v894
        %v1966 = vpop.f32.mrb[0].mxu0
        %v1967 = vadd.f32 %v1894, %v1966
        %v1968 = vpop.f32.mrb[0].mxu0
        %v1969 = vadd.f32 %v1896, %v1968
        %v1970 = vpop.f32.mrb[0].mxu0
        %v1971 = vadd.f32 %v1898, %v1970
        %v1972 = vpop.f32.mrb[0].mxu0
        %v1973 = vadd.f32 %v1900, %v1972
        %1974 = vdwg.mxu0
        %v1975 = vmax.f32 %v1937, 0.0
        %v1976 = vmax.f32 %v1939, 0.0
        %v1977 = vmax.f32 %v1941, 0.0
        %v1978 = vmax.f32 %v1943, 0.0
        %v1979 = vmax.f32 %v1947, 0.0
        %v1980 = vmax.f32 %v1949, 0.0
        %v1981 = vmax.f32 %v1951, 0.0
        %v1982 = vmax.f32 %v1953, 0.0
        %v1983 = vmax.f32 %v1957, 0.0
        %v1984 = vmax.f32 %v1959, 0.0
        %v1985 = vmax.f32 %v1961, 0.0
        %v1986 = vmax.f32 %v1963, 0.0
        %v1987 = vmax.f32 %v1967, 0.0
        %v1988 = vmax.f32 %v1969, 0.0
        %v1989 = vmax.f32 %v1971, 0.0
        %v1990 = vmax.f32 %v1973, 0.0
        %1991 = vst [vmem:[%s198] sm:$0xff] %v1975
        %1992 = vst [vmem:[%s198 + $0x8] sm:$0xff] %v1976
        %1993 = vst [vmem:[%s198 + $0x10] sm:$0xff] %v1977
        %1994 = vst [vmem:[%s198 + $0x18] sm:$0xff] %v1978
        %1995 = vst [vmem:[%s198 + $0x20] sm:$0xff] %v1979
        %1996 = vst [vmem:[%s198 + $0x28] sm:$0xff] %v1980
        %1997 = vst [vmem:[%s198 + $0x30] sm:$0xff] %v1981
        %1998 = vst [vmem:[%s198 + $0x38] sm:$0xff] %v1982
        %1999 = vst [vmem:[%s198 + $0x40] sm:$0xff] %v1983
        %2000 = vst [vmem:[%s198 + $0x48] sm:$0xff] %v1984
        %2001 = vst [vmem:[%s198 + $0x50] sm:$0xff] %v1985
        %2002 = vst [vmem:[%s198 + $0x58] sm:$0xff] %v1986
        %2003 = vst [vmem:[%s198 + $0x60] sm:$0xff] %v1987
        %2004 = vst [vmem:[%s198 + $0x68] sm:$0xff] %v1988
        %2005 = vst [vmem:[%s198 + $0x70] sm:$0xff] %v1989
        %2006 = vst [vmem:[%s198 + $0x78] sm:$0xff] %v1990
        %v2007 = vunpack.c.l.b16 %v361
        %v2008 = vunpack.c.h.b16 %v361
        %v2009 = vunpack.c.l.b16 %v365
        %v2010 = vunpack.c.h.b16 %v365
        %v2011 = vunpack.c.l.b16 %v369
        %v2012 = vunpack.c.h.b16 %v369
        %v2013 = vunpack.c.l.b16 %v373
        %v2014 = vunpack.c.h.b16 %v373
        %v2015 = vunpack.c.l.b16 %v377
        %v2016 = vunpack.c.h.b16 %v377
        %v2017 = vunpack.c.l.b16 %v381
        %v2018 = vunpack.c.h.b16 %v381
        %v2019 = vunpack.c.l.b16 %v385
        %v2020 = vunpack.c.h.b16 %v385
        %v2021 = vunpack.c.l.b16 %v389
        %v2022 = vunpack.c.h.b16 %v389
        %v2023 = vpack.c.b16 %v2009, %v2007
        %v2024 = vpack.c.b16 %v2010, %v2008
        %v2025 = vpack.c.b16 %v2013, %v2011
        %v2026 = vpack.c.b16 %v2014, %v2012
        %v2027 = vpack.c.b16 %v2017, %v2015
        %v2028 = vpack.c.b16 %v2018, %v2016
        %v2029 = vpack.c.b16 %v2021, %v2019
        %v2030 = vpack.c.b16 %v2022, %v2020
        %v2039 = vunpack.c.l.b16 %v546
        %v2040 = vunpack.c.h.b16 %v546
        %v2041 = vunpack.c.l.b16 %v550
        %v2042 = vunpack.c.h.b16 %v550
        %v2043 = vunpack.c.l.b16 %v554
        %v2044 = vunpack.c.h.b16 %v554
        %v2045 = vunpack.c.l.b16 %v558
        %v2046 = vunpack.c.h.b16 %v558
        %v2047 = vunpack.c.l.b16 %v562
        %v2048 = vunpack.c.h.b16 %v562
        %v2049 = vunpack.c.l.b16 %v566
        %v2050 = vunpack.c.h.b16 %v566
        %v2051 = vunpack.c.l.b16 %v570
        %v2052 = vunpack.c.h.b16 %v570
        %v2053 = vunpack.c.l.b16 %v574
        %v2054 = vunpack.c.h.b16 %v574
        %v2055 = vpack.c.b16 %v2041, %v2039
        %v2056 = vpack.c.b16 %v2042, %v2040
        %v2057 = vpack.c.b16 %v2045, %v2043
        %v2058 = vpack.c.b16 %v2046, %v2044
        %v2059 = vpack.c.b16 %v2049, %v2047
        %v2060 = vpack.c.b16 %v2050, %v2048
        %v2061 = vpack.c.b16 %v2053, %v2051
        %v2062 = vpack.c.b16 %v2054, %v2052
        %s2071 = scalar_lea.vmem [#allocation2], 1024
        %v2072 = vld [vmem:[%s2071] sm:$0xff]
        %v2073 = vld [vmem:[%s2071 + $0x8] sm:$0xff]
        %v2074 = vld [vmem:[%s2071 + $0x10] sm:$0xff]
        %v2075 = vld [vmem:[%s2071 + $0x18] sm:$0xff]
        %v2076 = vld [vmem:[%s2071 + $0x20] sm:$0xff]
        %v2077 = vld [vmem:[%s2071 + $0x28] sm:$0xff]
        %v2078 = vld [vmem:[%s2071 + $0x30] sm:$0xff]
        %v2079 = vld [vmem:[%s2071 + $0x38] sm:$0xff]
        %v2080 = vld [vmem:[%s2071 + $0x40] sm:$0xff]
        %v2081 = vld [vmem:[%s2071 + $0x48] sm:$0xff]
        %v2082 = vld [vmem:[%s2071 + $0x50] sm:$0xff]
        %v2083 = vld [vmem:[%s2071 + $0x58] sm:$0xff]
        %v2084 = vld [vmem:[%s2071 + $0x60] sm:$0xff]
        %v2085 = vld [vmem:[%s2071 + $0x68] sm:$0xff]
        %v2086 = vld [vmem:[%s2071 + $0x70] sm:$0xff]
        %v2087 = vld [vmem:[%s2071 + $0x78] sm:$0xff]
        %v2088 = vld [vmem:[%s2071 + $0x80] sm:$0xff]
        %v2089 = vld [vmem:[%s2071 + $0x88] sm:$0xff]
        %v2090 = vld [vmem:[%s2071 + $0x90] sm:$0xff]
        %v2091 = vld [vmem:[%s2071 + $0x98] sm:$0xff]
        %v2092 = vld [vmem:[%s2071 + $0xa0] sm:$0xff]
        %v2093 = vld [vmem:[%s2071 + $0xa8] sm:$0xff]
        %v2094 = vld [vmem:[%s2071 + $0xb0] sm:$0xff]
        %v2095 = vld [vmem:[%s2071 + $0xb8] sm:$0xff]
        %v2096 = vld [vmem:[%s2071 + $0xc0] sm:$0xff]
        %v2097 = vld [vmem:[%s2071 + $0xc8] sm:$0xff]
        %v2098 = vld [vmem:[%s2071 + $0xd0] sm:$0xff]
        %v2099 = vld [vmem:[%s2071 + $0xd8] sm:$0xff]
        %v2100 = vld [vmem:[%s2071 + $0xe0] sm:$0xff]
        %v2101 = vld [vmem:[%s2071 + $0xe8] sm:$0xff]
        %v2102 = vld [vmem:[%s2071 + $0xf0] sm:$0xff]
        %v2103 = vld [vmem:[%s2071 + $0xf8] sm:$0xff]
        %v2104 = vld [vmem:[%s2071 + $0x100] sm:$0xff]
        %v2105 = vld [vmem:[%s2071 + $0x108] sm:$0xff]
        %v2106 = vld [vmem:[%s2071 + $0x110] sm:$0xff]
        %v2107 = vld [vmem:[%s2071 + $0x118] sm:$0xff]
        %v2108 = vld [vmem:[%s2071 + $0x120] sm:$0xff]
        %v2109 = vld [vmem:[%s2071 + $0x128] sm:$0xff]
        %v2110 = vld [vmem:[%s2071 + $0x130] sm:$0xff]
        %v2111 = vld [vmem:[%s2071 + $0x138] sm:$0xff]
        %v2112 = vld [vmem:[%s2071 + $0x140] sm:$0xff]
        %v2113 = vld [vmem:[%s2071 + $0x148] sm:$0xff]
        %v2114 = vld [vmem:[%s2071 + $0x150] sm:$0xff]
        %v2115 = vld [vmem:[%s2071 + $0x158] sm:$0xff]
        %v2116 = vld [vmem:[%s2071 + $0x160] sm:$0xff]
        %v2117 = vld [vmem:[%s2071 + $0x168] sm:$0xff]
        %v2118 = vld [vmem:[%s2071 + $0x170] sm:$0xff]
        %v2119 = vld [vmem:[%s2071 + $0x178] sm:$0xff]
        %v2120 = vld [vmem:[%s2071 + $0x180] sm:$0xff]
        %v2121 = vld [vmem:[%s2071 + $0x188] sm:$0xff]
        %v2122 = vld [vmem:[%s2071 + $0x190] sm:$0xff]
        %v2123 = vld [vmem:[%s2071 + $0x198] sm:$0xff]
        %v2124 = vld [vmem:[%s2071 + $0x1a0] sm:$0xff]
        %v2125 = vld [vmem:[%s2071 + $0x1a8] sm:$0xff]
        %v2126 = vld [vmem:[%s2071 + $0x1b0] sm:$0xff]
        %v2127 = vld [vmem:[%s2071 + $0x1b8] sm:$0xff]
        %v2128 = vld [vmem:[%s2071 + $0x1c0] sm:$0xff]
        %v2129 = vld [vmem:[%s2071 + $0x1c8] sm:$0xff]
        %v2130 = vld [vmem:[%s2071 + $0x1d0] sm:$0xff]
        %v2131 = vld [vmem:[%s2071 + $0x1d8] sm:$0xff]
        %v2132 = vld [vmem:[%s2071 + $0x1e0] sm:$0xff]
        %v2133 = vld [vmem:[%s2071 + $0x1e8] sm:$0xff]
        %v2134 = vld [vmem:[%s2071 + $0x1f0] sm:$0xff]
        %v2135 = vld [vmem:[%s2071 + $0x1f8] sm:$0xff]
        %v2136 = vld [vmem:[%s2071 + $0x200] sm:$0xff]
        %v2137 = vld [vmem:[%s2071 + $0x208] sm:$0xff]
        %v2138 = vld [vmem:[%s2071 + $0x210] sm:$0xff]
        %v2139 = vld [vmem:[%s2071 + $0x218] sm:$0xff]
        %v2140 = vld [vmem:[%s2071 + $0x220] sm:$0xff]
        %v2141 = vld [vmem:[%s2071 + $0x228] sm:$0xff]
        %v2142 = vld [vmem:[%s2071 + $0x230] sm:$0xff]
        %v2143 = vld [vmem:[%s2071 + $0x238] sm:$0xff]
        %v2144 = vld [vmem:[%s2071 + $0x240] sm:$0xff]
        %v2145 = vld [vmem:[%s2071 + $0x248] sm:$0xff]
        %v2146 = vld [vmem:[%s2071 + $0x250] sm:$0xff]
        %v2147 = vld [vmem:[%s2071 + $0x258] sm:$0xff]
        %v2148 = vld [vmem:[%s2071 + $0x260] sm:$0xff]
        %v2149 = vld [vmem:[%s2071 + $0x268] sm:$0xff]
        %v2150 = vld [vmem:[%s2071 + $0x270] sm:$0xff]
        %v2151 = vld [vmem:[%s2071 + $0x278] sm:$0xff]
        %v2152 = vld [vmem:[%s2071 + $0x280] sm:$0xff]
        %v2153 = vld [vmem:[%s2071 + $0x288] sm:$0xff]
        %v2154 = vld [vmem:[%s2071 + $0x290] sm:$0xff]
        %v2155 = vld [vmem:[%s2071 + $0x298] sm:$0xff]
        %v2156 = vld [vmem:[%s2071 + $0x2a0] sm:$0xff]
        %v2157 = vld [vmem:[%s2071 + $0x2a8] sm:$0xff]
        %v2158 = vld [vmem:[%s2071 + $0x2b0] sm:$0xff]
        %v2159 = vld [vmem:[%s2071 + $0x2b8] sm:$0xff]
        %v2160 = vld [vmem:[%s2071 + $0x2c0] sm:$0xff]
        %v2161 = vld [vmem:[%s2071 + $0x2c8] sm:$0xff]
        %v2162 = vld [vmem:[%s2071 + $0x2d0] sm:$0xff]
        %v2163 = vld [vmem:[%s2071 + $0x2d8] sm:$0xff]
        %v2164 = vld [vmem:[%s2071 + $0x2e0] sm:$0xff]
        %v2165 = vld [vmem:[%s2071 + $0x2e8] sm:$0xff]
        %v2166 = vld [vmem:[%s2071 + $0x2f0] sm:$0xff]
        %v2167 = vld [vmem:[%s2071 + $0x2f8] sm:$0xff]
        %v2168 = vld [vmem:[%s2071 + $0x300] sm:$0xff]
        %v2169 = vld [vmem:[%s2071 + $0x308] sm:$0xff]
        %v2170 = vld [vmem:[%s2071 + $0x310] sm:$0xff]
        %v2171 = vld [vmem:[%s2071 + $0x318] sm:$0xff]
        %v2172 = vld [vmem:[%s2071 + $0x320] sm:$0xff]
        %v2173 = vld [vmem:[%s2071 + $0x328] sm:$0xff]
        %v2174 = vld [vmem:[%s2071 + $0x330] sm:$0xff]
        %v2175 = vld [vmem:[%s2071 + $0x338] sm:$0xff]
        %v2176 = vld [vmem:[%s2071 + $0x340] sm:$0xff]
        %v2177 = vld [vmem:[%s2071 + $0x348] sm:$0xff]
        %v2178 = vld [vmem:[%s2071 + $0x350] sm:$0xff]
        %v2179 = vld [vmem:[%s2071 + $0x358] sm:$0xff]
        %v2180 = vld [vmem:[%s2071 + $0x360] sm:$0xff]
        %v2181 = vld [vmem:[%s2071 + $0x368] sm:$0xff]
        %v2182 = vld [vmem:[%s2071 + $0x370] sm:$0xff]
        %v2183 = vld [vmem:[%s2071 + $0x378] sm:$0xff]
        %v2184 = vld [vmem:[%s2071 + $0x380] sm:$0xff]
        %v2185 = vld [vmem:[%s2071 + $0x388] sm:$0xff]
        %v2186 = vld [vmem:[%s2071 + $0x390] sm:$0xff]
        %v2187 = vld [vmem:[%s2071 + $0x398] sm:$0xff]
        %v2188 = vld [vmem:[%s2071 + $0x3a0] sm:$0xff]
        %v2189 = vld [vmem:[%s2071 + $0x3a8] sm:$0xff]
        %v2190 = vld [vmem:[%s2071 + $0x3b0] sm:$0xff]
        %v2191 = vld [vmem:[%s2071 + $0x3b8] sm:$0xff]
        %v2192 = vld [vmem:[%s2071 + $0x3c0] sm:$0xff]
        %v2193 = vld [vmem:[%s2071 + $0x3c8] sm:$0xff]
        %v2194 = vld [vmem:[%s2071 + $0x3d0] sm:$0xff]
        %v2195 = vld [vmem:[%s2071 + $0x3d8] sm:$0xff]
        %v2196 = vld [vmem:[%s2071 + $0x3e0] sm:$0xff]
        %v2197 = vld [vmem:[%s2071 + $0x3e8] sm:$0xff]
        %v2198 = vld [vmem:[%s2071 + $0x3f0] sm:$0xff]
        %v2199 = vld [vmem:[%s2071 + $0x3f8] sm:$0xff]
        %v2328 = vunpack.c.l.b16 %v2072
        %v2329 = vunpack.c.h.b16 %v2072
        %v2330 = vunpack.c.l.b16 %v2073
        %v2331 = vunpack.c.h.b16 %v2073
        %v2332 = vunpack.c.l.b16 %v2074
        %v2333 = vunpack.c.h.b16 %v2074
        %v2334 = vunpack.c.l.b16 %v2075
        %v2335 = vunpack.c.h.b16 %v2075
        %v2336 = vunpack.c.l.b16 %v2076
        %v2337 = vunpack.c.h.b16 %v2076
        %v2338 = vunpack.c.l.b16 %v2077
        %v2339 = vunpack.c.h.b16 %v2077
        %v2340 = vunpack.c.l.b16 %v2078
        %v2341 = vunpack.c.h.b16 %v2078
        %v2342 = vunpack.c.l.b16 %v2079
        %v2343 = vunpack.c.h.b16 %v2079
        %v2344 = vunpack.c.l.b16 %v2080
        %v2345 = vunpack.c.h.b16 %v2080
        %v2346 = vunpack.c.l.b16 %v2081
        %v2347 = vunpack.c.h.b16 %v2081
        %v2348 = vunpack.c.l.b16 %v2082
        %v2349 = vunpack.c.h.b16 %v2082
        %v2350 = vunpack.c.l.b16 %v2083
        %v2351 = vunpack.c.h.b16 %v2083
        %v2352 = vunpack.c.l.b16 %v2084
        %v2353 = vunpack.c.h.b16 %v2084
        %v2354 = vunpack.c.l.b16 %v2085
        %v2355 = vunpack.c.h.b16 %v2085
        %v2356 = vunpack.c.l.b16 %v2086
        %v2357 = vunpack.c.h.b16 %v2086
        %v2358 = vunpack.c.l.b16 %v2087
        %v2359 = vunpack.c.h.b16 %v2087
        %v2360 = vunpack.c.l.b16 %v2088
        %v2361 = vunpack.c.h.b16 %v2088
        %v2362 = vunpack.c.l.b16 %v2089
        %v2363 = vunpack.c.h.b16 %v2089
        %v2364 = vunpack.c.l.b16 %v2090
        %v2365 = vunpack.c.h.b16 %v2090
        %v2366 = vunpack.c.l.b16 %v2091
        %v2367 = vunpack.c.h.b16 %v2091
        %v2368 = vunpack.c.l.b16 %v2092
        %v2369 = vunpack.c.h.b16 %v2092
        %v2370 = vunpack.c.l.b16 %v2093
        %v2371 = vunpack.c.h.b16 %v2093
        %v2372 = vunpack.c.l.b16 %v2094
        %v2373 = vunpack.c.h.b16 %v2094
        %v2374 = vunpack.c.l.b16 %v2095
        %v2375 = vunpack.c.h.b16 %v2095
        %v2376 = vunpack.c.l.b16 %v2096
        %v2377 = vunpack.c.h.b16 %v2096
        %v2378 = vunpack.c.l.b16 %v2097
        %v2379 = vunpack.c.h.b16 %v2097
        %v2380 = vunpack.c.l.b16 %v2098
        %v2381 = vunpack.c.h.b16 %v2098
        %v2382 = vunpack.c.l.b16 %v2099
        %v2383 = vunpack.c.h.b16 %v2099
        %v2384 = vunpack.c.l.b16 %v2100
        %v2385 = vunpack.c.h.b16 %v2100
        %v2386 = vunpack.c.l.b16 %v2101
        %v2387 = vunpack.c.h.b16 %v2101
        %v2388 = vunpack.c.l.b16 %v2102
        %v2389 = vunpack.c.h.b16 %v2102
        %v2390 = vunpack.c.l.b16 %v2103
        %v2391 = vunpack.c.h.b16 %v2103
        %v2392 = vunpack.c.l.b16 %v2104
        %v2393 = vunpack.c.h.b16 %v2104
        %v2394 = vunpack.c.l.b16 %v2105
        %v2395 = vunpack.c.h.b16 %v2105
        %v2396 = vunpack.c.l.b16 %v2106
        %v2397 = vunpack.c.h.b16 %v2106
        %v2398 = vunpack.c.l.b16 %v2107
        %v2399 = vunpack.c.h.b16 %v2107
        %v2400 = vunpack.c.l.b16 %v2108
        %v2401 = vunpack.c.h.b16 %v2108
        %v2402 = vunpack.c.l.b16 %v2109
        %v2403 = vunpack.c.h.b16 %v2109
        %v2404 = vunpack.c.l.b16 %v2110
        %v2405 = vunpack.c.h.b16 %v2110
        %v2406 = vunpack.c.l.b16 %v2111
        %v2407 = vunpack.c.h.b16 %v2111
        %v2408 = vunpack.c.l.b16 %v2112
        %v2409 = vunpack.c.h.b16 %v2112
        %v2410 = vunpack.c.l.b16 %v2113
        %v2411 = vunpack.c.h.b16 %v2113
        %v2412 = vunpack.c.l.b16 %v2114
        %v2413 = vunpack.c.h.b16 %v2114
        %v2414 = vunpack.c.l.b16 %v2115
        %v2415 = vunpack.c.h.b16 %v2115
        %v2416 = vunpack.c.l.b16 %v2116
        %v2417 = vunpack.c.h.b16 %v2116
        %v2418 = vunpack.c.l.b16 %v2117
        %v2419 = vunpack.c.h.b16 %v2117
        %v2420 = vunpack.c.l.b16 %v2118
        %v2421 = vunpack.c.h.b16 %v2118
        %v2422 = vunpack.c.l.b16 %v2119
        %v2423 = vunpack.c.h.b16 %v2119
        %v2424 = vunpack.c.l.b16 %v2120
        %v2425 = vunpack.c.h.b16 %v2120
        %v2426 = vunpack.c.l.b16 %v2121
        %v2427 = vunpack.c.h.b16 %v2121
        %v2428 = vunpack.c.l.b16 %v2122
        %v2429 = vunpack.c.h.b16 %v2122
        %v2430 = vunpack.c.l.b16 %v2123
        %v2431 = vunpack.c.h.b16 %v2123
        %v2432 = vunpack.c.l.b16 %v2124
        %v2433 = vunpack.c.h.b16 %v2124
        %v2434 = vunpack.c.l.b16 %v2125
        %v2435 = vunpack.c.h.b16 %v2125
        %v2436 = vunpack.c.l.b16 %v2126
        %v2437 = vunpack.c.h.b16 %v2126
        %v2438 = vunpack.c.l.b16 %v2127
        %v2439 = vunpack.c.h.b16 %v2127
        %v2440 = vunpack.c.l.b16 %v2128
        %v2441 = vunpack.c.h.b16 %v2128
        %v2442 = vunpack.c.l.b16 %v2129
        %v2443 = vunpack.c.h.b16 %v2129
        %v2444 = vunpack.c.l.b16 %v2130
        %v2445 = vunpack.c.h.b16 %v2130
        %v2446 = vunpack.c.l.b16 %v2131
        %v2447 = vunpack.c.h.b16 %v2131
        %v2448 = vunpack.c.l.b16 %v2132
        %v2449 = vunpack.c.h.b16 %v2132
        %v2450 = vunpack.c.l.b16 %v2133
        %v2451 = vunpack.c.h.b16 %v2133
        %v2452 = vunpack.c.l.b16 %v2134
        %v2453 = vunpack.c.h.b16 %v2134
        %v2454 = vunpack.c.l.b16 %v2135
        %v2455 = vunpack.c.h.b16 %v2135
        %v2456 = vunpack.c.l.b16 %v2136
        %v2457 = vunpack.c.h.b16 %v2136
        %v2458 = vunpack.c.l.b16 %v2137
        %v2459 = vunpack.c.h.b16 %v2137
        %v2460 = vunpack.c.l.b16 %v2138
        %v2461 = vunpack.c.h.b16 %v2138
        %v2462 = vunpack.c.l.b16 %v2139
        %v2463 = vunpack.c.h.b16 %v2139
        %v2464 = vunpack.c.l.b16 %v2140
        %v2465 = vunpack.c.h.b16 %v2140
        %v2466 = vunpack.c.l.b16 %v2141
        %v2467 = vunpack.c.h.b16 %v2141
        %v2468 = vunpack.c.l.b16 %v2142
        %v2469 = vunpack.c.h.b16 %v2142
        %v2470 = vunpack.c.l.b16 %v2143
        %v2471 = vunpack.c.h.b16 %v2143
        %v2472 = vunpack.c.l.b16 %v2144
        %v2473 = vunpack.c.h.b16 %v2144
        %v2474 = vunpack.c.l.b16 %v2145
        %v2475 = vunpack.c.h.b16 %v2145
        %v2476 = vunpack.c.l.b16 %v2146
        %v2477 = vunpack.c.h.b16 %v2146
        %v2478 = vunpack.c.l.b16 %v2147
        %v2479 = vunpack.c.h.b16 %v2147
        %v2480 = vunpack.c.l.b16 %v2148
        %v2481 = vunpack.c.h.b16 %v2148
        %v2482 = vunpack.c.l.b16 %v2149
        %v2483 = vunpack.c.h.b16 %v2149
        %v2484 = vunpack.c.l.b16 %v2150
        %v2485 = vunpack.c.h.b16 %v2150
        %v2486 = vunpack.c.l.b16 %v2151
        %v2487 = vunpack.c.h.b16 %v2151
        %v2488 = vunpack.c.l.b16 %v2152
        %v2489 = vunpack.c.h.b16 %v2152
        %v2490 = vunpack.c.l.b16 %v2153
        %v2491 = vunpack.c.h.b16 %v2153
        %v2492 = vunpack.c.l.b16 %v2154
        %v2493 = vunpack.c.h.b16 %v2154
        %v2494 = vunpack.c.l.b16 %v2155
        %v2495 = vunpack.c.h.b16 %v2155
        %v2496 = vunpack.c.l.b16 %v2156
        %v2497 = vunpack.c.h.b16 %v2156
        %v2498 = vunpack.c.l.b16 %v2157
        %v2499 = vunpack.c.h.b16 %v2157
        %v2500 = vunpack.c.l.b16 %v2158
        %v2501 = vunpack.c.h.b16 %v2158
        %v2502 = vunpack.c.l.b16 %v2159
        %v2503 = vunpack.c.h.b16 %v2159
        %v2504 = vunpack.c.l.b16 %v2160
        %v2505 = vunpack.c.h.b16 %v2160
        %v2506 = vunpack.c.l.b16 %v2161
        %v2507 = vunpack.c.h.b16 %v2161
        %v2508 = vunpack.c.l.b16 %v2162
        %v2509 = vunpack.c.h.b16 %v2162
        %v2510 = vunpack.c.l.b16 %v2163
        %v2511 = vunpack.c.h.b16 %v2163
        %v2512 = vunpack.c.l.b16 %v2164
        %v2513 = vunpack.c.h.b16 %v2164
        %v2514 = vunpack.c.l.b16 %v2165
        %v2515 = vunpack.c.h.b16 %v2165
        %v2516 = vunpack.c.l.b16 %v2166
        %v2517 = vunpack.c.h.b16 %v2166
        %v2518 = vunpack.c.l.b16 %v2167
        %v2519 = vunpack.c.h.b16 %v2167
        %v2520 = vunpack.c.l.b16 %v2168
        %v2521 = vunpack.c.h.b16 %v2168
        %v2522 = vunpack.c.l.b16 %v2169
        %v2523 = vunpack.c.h.b16 %v2169
        %v2524 = vunpack.c.l.b16 %v2170
        %v2525 = vunpack.c.h.b16 %v2170
        %v2526 = vunpack.c.l.b16 %v2171
        %v2527 = vunpack.c.h.b16 %v2171
        %v2528 = vunpack.c.l.b16 %v2172
        %v2529 = vunpack.c.h.b16 %v2172
        %v2530 = vunpack.c.l.b16 %v2173
        %v2531 = vunpack.c.h.b16 %v2173
        %v2532 = vunpack.c.l.b16 %v2174
        %v2533 = vunpack.c.h.b16 %v2174
        %v2534 = vunpack.c.l.b16 %v2175
        %v2535 = vunpack.c.h.b16 %v2175
        %v2536 = vunpack.c.l.b16 %v2176
        %v2537 = vunpack.c.h.b16 %v2176
        %v2538 = vunpack.c.l.b16 %v2177
        %v2539 = vunpack.c.h.b16 %v2177
        %v2540 = vunpack.c.l.b16 %v2178
        %v2541 = vunpack.c.h.b16 %v2178
        %v2542 = vunpack.c.l.b16 %v2179
        %v2543 = vunpack.c.h.b16 %v2179
        %v2544 = vunpack.c.l.b16 %v2180
        %v2545 = vunpack.c.h.b16 %v2180
        %v2546 = vunpack.c.l.b16 %v2181
        %v2547 = vunpack.c.h.b16 %v2181
        %v2548 = vunpack.c.l.b16 %v2182
        %v2549 = vunpack.c.h.b16 %v2182
        %v2550 = vunpack.c.l.b16 %v2183
        %v2551 = vunpack.c.h.b16 %v2183
        %v2552 = vunpack.c.l.b16 %v2184
        %v2553 = vunpack.c.h.b16 %v2184
        %v2554 = vunpack.c.l.b16 %v2185
        %v2555 = vunpack.c.h.b16 %v2185
        %v2556 = vunpack.c.l.b16 %v2186
        %v2557 = vunpack.c.h.b16 %v2186
        %v2558 = vunpack.c.l.b16 %v2187
        %v2559 = vunpack.c.h.b16 %v2187
        %v2560 = vunpack.c.l.b16 %v2188
        %v2561 = vunpack.c.h.b16 %v2188
        %v2562 = vunpack.c.l.b16 %v2189
        %v2563 = vunpack.c.h.b16 %v2189
        %v2564 = vunpack.c.l.b16 %v2190
        %v2565 = vunpack.c.h.b16 %v2190
        %v2566 = vunpack.c.l.b16 %v2191
        %v2567 = vunpack.c.h.b16 %v2191
        %v2568 = vunpack.c.l.b16 %v2192
        %v2569 = vunpack.c.h.b16 %v2192
        %v2570 = vunpack.c.l.b16 %v2193
        %v2571 = vunpack.c.h.b16 %v2193
        %v2572 = vunpack.c.l.b16 %v2194
        %v2573 = vunpack.c.h.b16 %v2194
        %v2574 = vunpack.c.l.b16 %v2195
        %v2575 = vunpack.c.h.b16 %v2195
        %v2576 = vunpack.c.l.b16 %v2196
        %v2577 = vunpack.c.h.b16 %v2196
        %v2578 = vunpack.c.l.b16 %v2197
        %v2579 = vunpack.c.h.b16 %v2197
        %v2580 = vunpack.c.l.b16 %v2198
        %v2581 = vunpack.c.h.b16 %v2198
        %v2582 = vunpack.c.l.b16 %v2199
        %v2583 = vunpack.c.h.b16 %v2199
        %v2584 = vpack.c.b16 %v2330, %v2328
        %v2585 = vpack.c.b16 %v2331, %v2329
        %v2586 = vpack.c.b16 %v2334, %v2332
        %v2587 = vpack.c.b16 %v2335, %v2333
        %v2588 = vpack.c.b16 %v2338, %v2336
        %v2589 = vpack.c.b16 %v2339, %v2337
        %v2590 = vpack.c.b16 %v2342, %v2340
        %v2591 = vpack.c.b16 %v2343, %v2341
        %v2592 = vpack.c.b16 %v2346, %v2344
        %v2593 = vpack.c.b16 %v2347, %v2345
        %v2594 = vpack.c.b16 %v2350, %v2348
        %v2595 = vpack.c.b16 %v2351, %v2349
        %v2596 = vpack.c.b16 %v2354, %v2352
        %v2597 = vpack.c.b16 %v2355, %v2353
        %v2598 = vpack.c.b16 %v2358, %v2356
        %v2599 = vpack.c.b16 %v2359, %v2357
        %v2600 = vpack.c.b16 %v2362, %v2360
        %v2601 = vpack.c.b16 %v2363, %v2361
        %v2602 = vpack.c.b16 %v2366, %v2364
        %v2603 = vpack.c.b16 %v2367, %v2365
        %v2604 = vpack.c.b16 %v2370, %v2368
        %v2605 = vpack.c.b16 %v2371, %v2369
        %v2606 = vpack.c.b16 %v2374, %v2372
        %v2607 = vpack.c.b16 %v2375, %v2373
        %v2608 = vpack.c.b16 %v2378, %v2376
        %v2609 = vpack.c.b16 %v2379, %v2377
        %v2610 = vpack.c.b16 %v2382, %v2380
        %v2611 = vpack.c.b16 %v2383, %v2381
        %v2612 = vpack.c.b16 %v2386, %v2384
        %v2613 = vpack.c.b16 %v2387, %v2385
        %v2614 = vpack.c.b16 %v2390, %v2388
        %v2615 = vpack.c.b16 %v2391, %v2389
        %v2616 = vpack.c.b16 %v2394, %v2392
        %v2617 = vpack.c.b16 %v2395, %v2393
        %v2618 = vpack.c.b16 %v2398, %v2396
        %v2619 = vpack.c.b16 %v2399, %v2397
        %v2620 = vpack.c.b16 %v2402, %v2400
        %v2621 = vpack.c.b16 %v2403, %v2401
        %v2622 = vpack.c.b16 %v2406, %v2404
        %v2623 = vpack.c.b16 %v2407, %v2405
        %v2624 = vpack.c.b16 %v2410, %v2408
        %v2625 = vpack.c.b16 %v2411, %v2409
        %v2626 = vpack.c.b16 %v2414, %v2412
        %v2627 = vpack.c.b16 %v2415, %v2413
        %v2628 = vpack.c.b16 %v2418, %v2416
        %v2629 = vpack.c.b16 %v2419, %v2417
        %v2630 = vpack.c.b16 %v2422, %v2420
        %v2631 = vpack.c.b16 %v2423, %v2421
        %v2632 = vpack.c.b16 %v2426, %v2424
        %v2633 = vpack.c.b16 %v2427, %v2425
        %v2634 = vpack.c.b16 %v2430, %v2428
        %v2635 = vpack.c.b16 %v2431, %v2429
        %v2636 = vpack.c.b16 %v2434, %v2432
        %v2637 = vpack.c.b16 %v2435, %v2433
        %v2638 = vpack.c.b16 %v2438, %v2436
        %v2639 = vpack.c.b16 %v2439, %v2437
        %v2640 = vpack.c.b16 %v2442, %v2440
        %v2641 = vpack.c.b16 %v2443, %v2441
        %v2642 = vpack.c.b16 %v2446, %v2444
        %v2643 = vpack.c.b16 %v2447, %v2445
        %v2644 = vpack.c.b16 %v2450, %v2448
        %v2645 = vpack.c.b16 %v2451, %v2449
        %v2646 = vpack.c.b16 %v2454, %v2452
        %v2647 = vpack.c.b16 %v2455, %v2453
        %v2648 = vpack.c.b16 %v2458, %v2456
        %v2649 = vpack.c.b16 %v2459, %v2457
        %v2650 = vpack.c.b16 %v2462, %v2460
        %v2651 = vpack.c.b16 %v2463, %v2461
        %v2652 = vpack.c.b16 %v2466, %v2464
        %v2653 = vpack.c.b16 %v2467, %v2465
        %v2654 = vpack.c.b16 %v2470, %v2468
        %v2655 = vpack.c.b16 %v2471, %v2469
        %v2656 = vpack.c.b16 %v2474, %v2472
        %v2657 = vpack.c.b16 %v2475, %v2473
        %v2658 = vpack.c.b16 %v2478, %v2476
        %v2659 = vpack.c.b16 %v2479, %v2477
        %v2660 = vpack.c.b16 %v2482, %v2480
        %v2661 = vpack.c.b16 %v2483, %v2481
        %v2662 = vpack.c.b16 %v2486, %v2484
        %v2663 = vpack.c.b16 %v2487, %v2485
        %v2664 = vpack.c.b16 %v2490, %v2488
        %v2665 = vpack.c.b16 %v2491, %v2489
        %v2666 = vpack.c.b16 %v2494, %v2492
        %v2667 = vpack.c.b16 %v2495, %v2493
        %v2668 = vpack.c.b16 %v2498, %v2496
        %v2669 = vpack.c.b16 %v2499, %v2497
        %v2670 = vpack.c.b16 %v2502, %v2500
        %v2671 = vpack.c.b16 %v2503, %v2501
        %v2672 = vpack.c.b16 %v2506, %v2504
        %v2673 = vpack.c.b16 %v2507, %v2505
        %v2674 = vpack.c.b16 %v2510, %v2508
        %v2675 = vpack.c.b16 %v2511, %v2509
        %v2676 = vpack.c.b16 %v2514, %v2512
        %v2677 = vpack.c.b16 %v2515, %v2513
        %v2678 = vpack.c.b16 %v2518, %v2516
        %v2679 = vpack.c.b16 %v2519, %v2517
        %v2680 = vpack.c.b16 %v2522, %v2520
        %v2681 = vpack.c.b16 %v2523, %v2521
        %v2682 = vpack.c.b16 %v2526, %v2524
        %v2683 = vpack.c.b16 %v2527, %v2525
        %v2684 = vpack.c.b16 %v2530, %v2528
        %v2685 = vpack.c.b16 %v2531, %v2529
        %v2686 = vpack.c.b16 %v2534, %v2532
        %v2687 = vpack.c.b16 %v2535, %v2533
        %v2688 = vpack.c.b16 %v2538, %v2536
        %v2689 = vpack.c.b16 %v2539, %v2537
        %v2690 = vpack.c.b16 %v2542, %v2540
        %v2691 = vpack.c.b16 %v2543, %v2541
        %v2692 = vpack.c.b16 %v2546, %v2544
        %v2693 = vpack.c.b16 %v2547, %v2545
        %v2694 = vpack.c.b16 %v2550, %v2548
        %v2695 = vpack.c.b16 %v2551, %v2549
        %v2696 = vpack.c.b16 %v2554, %v2552
        %v2697 = vpack.c.b16 %v2555, %v2553
        %v2698 = vpack.c.b16 %v2558, %v2556
        %v2699 = vpack.c.b16 %v2559, %v2557
        %v2700 = vpack.c.b16 %v2562, %v2560
        %v2701 = vpack.c.b16 %v2563, %v2561
        %v2702 = vpack.c.b16 %v2566, %v2564
        %v2703 = vpack.c.b16 %v2567, %v2565
        %v2704 = vpack.c.b16 %v2570, %v2568
        %v2705 = vpack.c.b16 %v2571, %v2569
        %v2706 = vpack.c.b16 %v2574, %v2572
        %v2707 = vpack.c.b16 %v2575, %v2573
        %v2708 = vpack.c.b16 %v2578, %v2576
        %v2709 = vpack.c.b16 %v2579, %v2577
        %v2710 = vpack.c.b16 %v2582, %v2580
        %v2711 = vpack.c.b16 %v2583, %v2581
        %2840 = vmatprep.subr.bf16.mxu0 %v2585
        %2841 = vmatpush1.bf16.msra.mxu0 %v2584
        %2842 = vmatprep.subr.bf16.mxu0 %v2587
        %2843 = vmatpush1.bf16.msra.mxu0 %v2586
        %2844 = vmatprep.subr.bf16.mxu0 %v2589
        %2845 = vmatpush1.bf16.msra.mxu0 %v2588
        %2846 = vmatprep.subr.bf16.mxu0 %v2591
        %2847 = vmatpush1.bf16.msra.mxu0 %v2590
        %2848 = vmatprep.subr.bf16.mxu0 %v2593
        %2849 = vmatpush1.bf16.msra.mxu0 %v2592
        %2850 = vmatprep.subr.bf16.mxu0 %v2595
        %2851 = vmatpush1.bf16.msra.mxu0 %v2594
        %2852 = vmatprep.subr.bf16.mxu0 %v2597
        %2853 = vmatpush1.bf16.msra.mxu0 %v2596
        %2854 = vmatprep.subr.bf16.mxu0 %v2599
        %2855 = vmatpush1.bf16.msra.mxu0 %v2598
        %2856 = vmatprep.subr.bf16.mxu0 %v2601
        %2857 = vmatpush1.bf16.msra.mxu0 %v2600
        %2858 = vmatprep.subr.bf16.mxu0 %v2603
        %2859 = vmatpush1.bf16.msra.mxu0 %v2602
        %2860 = vmatprep.subr.bf16.mxu0 %v2605
        %2861 = vmatpush1.bf16.msra.mxu0 %v2604
        %2862 = vmatprep.subr.bf16.mxu0 %v2607
        %2863 = vmatpush1.bf16.msra.mxu0 %v2606
        %2864 = vmatprep.subr.bf16.mxu0 %v2609
        %2865 = vmatpush1.bf16.msra.mxu0 %v2608
        %2866 = vmatprep.subr.bf16.mxu0 %v2611
        %2867 = vmatpush1.bf16.msra.mxu0 %v2610
        %2868 = vmatprep.subr.bf16.mxu0 %v2613
        %2869 = vmatpush1.bf16.msra.mxu0 %v2612
        %2870 = vmatprep.subr.bf16.mxu0 %v2615
        %2871 = vmatpush1.bf16.msra.mxu0 %v2614
        %2872 = vmatprep.mubr.bf16.mxu0 %v817
        %2873 = vmatmul.mubr.bf16.gmra.mrb[0].mxu0 %v816
        %v2874 = vpop.f32.mrb[0].mxu0
        %v2875 = vadd.f32 %v1036, %v2874
        %v2876 = vpop.f32.mrb[0].mxu0
        %v2877 = vadd.f32 %v1040, %v2876
        %v2878 = vpop.f32.mrb[0].mxu0
        %v2879 = vadd.f32 %v1036, %v2878
        %v2880 = vpop.f32.mrb[0].mxu0
        %v2881 = vadd.f32 %v1040, %v2880
        %2882 = vmatprep.mubr.bf16.mxu0 %v819
        %2883 = vmatmul.mubr.bf16.gmra.mrb[0].mxu0 %v818
        %v2884 = vpop.f32.mrb[0].mxu0
        %v2885 = vadd.f32 %v1036, %v2884
        %v2886 = vpop.f32.mrb[0].mxu0
        %v2887 = vadd.f32 %v1040, %v2886
        %v2888 = vpop.f32.mrb[0].mxu0
        %v2889 = vadd.f32 %v1036, %v2888
        %v2890 = vpop.f32.mrb[0].mxu0
        %v2891 = vadd.f32 %v1040, %v2890
        %2892 = vmatprep.mubr.bf16.mxu0 %v821
        %2893 = vmatmul.mubr.bf16.gmra.mrb[0].mxu0 %v820
        %v2894 = vpop.f32.mrb[0].mxu0
        %v2895 = vadd.f32 %v1036, %v2894
        %v2896 = vpop.f32.mrb[0].mxu0
        %v2897 = vadd.f32 %v1040, %v2896
        %v2898 = vpop.f32.mrb[0].mxu0
        %v2899 = vadd.f32 %v1036, %v2898
        %v2900 = vpop.f32.mrb[0].mxu0
        %v2901 = vadd.f32 %v1040, %v2900
        %2902 = vmatprep.mubr.bf16.mxu0 %v823
        %2903 = vmatmul.mubr.bf16.gmra.mrb[0].mxu0 %v822
        %v2904 = vpop.f32.mrb[0].mxu0
        %v2905 = vadd.f32 %v1036, %v2904
        %v2906 = vpop.f32.mrb[0].mxu0
        %v2907 = vadd.f32 %v1040, %v2906
        %v2908 = vpop.f32.mrb[0].mxu0
        %v2909 = vadd.f32 %v1036, %v2908
        %v2910 = vpop.f32.mrb[0].mxu0
        %v2911 = vadd.f32 %v1040, %v2910
        %2912 = vdwg.mxu0
        %2913 = vmatprep.subr.bf16.mxu0 %v2617
        %2914 = vmatpush1.bf16.msra.mxu0 %v2616
        %2915 = vmatprep.subr.bf16.mxu0 %v2619
        %2916 = vmatpush1.bf16.msra.mxu0 %v2618
        %2917 = vmatprep.subr.bf16.mxu0 %v2621
        %2918 = vmatpush1.bf16.msra.mxu0 %v2620
        %2919 = vmatprep.subr.bf16.mxu0 %v2623
        %2920 = vmatpush1.bf16.msra.mxu0 %v2622
        %2921 = vmatprep.subr.bf16.mxu0 %v2625
        %2922 = vmatpush1.bf16.msra.mxu0 %v2624
        %2923 = vmatprep.subr.bf16.mxu0 %v2627
        %2924 = vmatpush1.bf16.msra.mxu0 %v2626
        %2925 = vmatprep.subr.bf16.mxu0 %v2629
        %2926 = vmatpush1.bf16.msra.mxu0 %v2628
        %2927 = vmatprep.subr.bf16.mxu0 %v2631
        %2928 = vmatpush1.bf16.msra.mxu0 %v2630
        %2929 = vmatprep.subr.bf16.mxu0 %v2633
        %2930 = vmatpush1.bf16.msra.mxu0 %v2632
        %2931 = vmatprep.subr.bf16.mxu0 %v2635
        %2932 = vmatpush1.bf16.msra.mxu0 %v2634
        %2933 = vmatprep.subr.bf16.mxu0 %v2637
        %2934 = vmatpush1.bf16.msra.mxu0 %v2636
        %2935 = vmatprep.subr.bf16.mxu0 %v2639
        %2936 = vmatpush1.bf16.msra.mxu0 %v2638
        %2937 = vmatprep.subr.bf16.mxu0 %v2641
        %2938 = vmatpush1.bf16.msra.mxu0 %v2640
        %2939 = vmatprep.subr.bf16.mxu0 %v2643
        %2940 = vmatpush1.bf16.msra.mxu0 %v2642
        %2941 = vmatprep.subr.bf16.mxu0 %v2645
        %2942 = vmatpush1.bf16.msra.mxu0 %v2644
        %2943 = vmatprep.subr.bf16.mxu0 %v2647
        %2944 = vmatpush1.bf16.msra.mxu0 %v2646
        %2945 = vmatprep.mubr.bf16.mxu0 %v2024
        %2946 = vmatmul.mubr.bf16.gmra.mrb[0].mxu0 %v2023
        %v2947 = vpop.f32.mrb[0].mxu0
        %v2948 = vadd.f32 %v2875, %v2947
        %v2949 = vpop.f32.mrb[0].mxu0
        %v2950 = vadd.f32 %v2877, %v2949
        %v2951 = vpop.f32.mrb[0].mxu0
        %v2952 = vadd.f32 %v2879, %v2951
        %v2953 = vpop.f32.mrb[0].mxu0
        %v2954 = vadd.f32 %v2881, %v2953
        %2955 = vmatprep.mubr.bf16.mxu0 %v2026
        %2956 = vmatmul.mubr.bf16.gmra.mrb[0].mxu0 %v2025
        %v2957 = vpop.f32.mrb[0].mxu0
        %v2958 = vadd.f32 %v2885, %v2957
        %v2959 = vpop.f32.mrb[0].mxu0
        %v2960 = vadd.f32 %v2887, %v2959
        %v2961 = vpop.f32.mrb[0].mxu0
        %v2962 = vadd.f32 %v2889, %v2961
        %v2963 = vpop.f32.mrb[0].mxu0
        %v2964 = vadd.f32 %v2891, %v2963
        %2965 = vmatprep.mubr.bf16.mxu0 %v2028
        %2966 = vmatmul.mubr.bf16.gmra.mrb[0].mxu0 %v2027
        %v2967 = vpop.f32.mrb[0].mxu0
        %v2968 = vadd.f32 %v2895, %v2967
        %v2969 = vpop.f32.mrb[0].mxu0
        %v2970 = vadd.f32 %v2897, %v2969
        %v2971 = vpop.f32.mrb[0].mxu0
        %v2972 = vadd.f32 %v2899, %v2971
        %v2973 = vpop.f32.mrb[0].mxu0
        %v2974 = vadd.f32 %v2901, %v2973
        %2975 = vmatprep.mubr.bf16.mxu0 %v2030
        %2976 = vmatmul.mubr.bf16.gmra.mrb[0].mxu0 %v2029
        %v2977 = vpop.f32.mrb[0].mxu0
        %v2978 = vadd.f32 %v2905, %v2977
        %v2979 = vpop.f32.mrb[0].mxu0
        %v2980 = vadd.f32 %v2907, %v2979
        %v2981 = vpop.f32.mrb[0].mxu0
        %v2982 = vadd.f32 %v2909, %v2981
        %v2983 = vpop.f32.mrb[0].mxu0
        %v2984 = vadd.f32 %v2911, %v2983
        %2985 = vdwg.mxu0
        %2986 = vmatprep.subr.bf16.mxu0 %v2649
        %2987 = vmatpush1.bf16.msra.mxu0 %v2648
        %2988 = vmatprep.subr.bf16.mxu0 %v2651
        %2989 = vmatpush1.bf16.msra.mxu0 %v2650
        %2990 = vmatprep.subr.bf16.mxu0 %v2653
        %2991 = vmatpush1.bf16.msra.mxu0 %v2652
        %2992 = vmatprep.subr.bf16.mxu0 %v2655
        %2993 = vmatpush1.bf16.msra.mxu0 %v2654
        %2994 = vmatprep.subr.bf16.mxu0 %v2657
        %2995 = vmatpush1.bf16.msra.mxu0 %v2656
        %2996 = vmatprep.subr.bf16.mxu0 %v2659
        %2997 = vmatpush1.bf16.msra.mxu0 %v2658
        %2998 = vmatprep.subr.bf16.mxu0 %v2661
        %2999 = vmatpush1.bf16.msra.mxu0 %v2660
        %3000 = vmatprep.subr.bf16.mxu0 %v2663
        %3001 = vmatpush1.bf16.msra.mxu0 %v2662
        %3002 = vmatprep.subr.bf16.mxu0 %v2665
        %3003 = vmatpush1.bf16.msra.mxu0 %v2664
        %3004 = vmatprep.subr.bf16.mxu0 %v2667
        %3005 = vmatpush1.bf16.msra.mxu0 %v2666
        %3006 = vmatprep.subr.bf16.mxu0 %v2669
        %3007 = vmatpush1.bf16.msra.mxu0 %v2668
        %3008 = vmatprep.subr.bf16.mxu0 %v2671
        %3009 = vmatpush1.bf16.msra.mxu0 %v2670
        %3010 = vmatprep.subr.bf16.mxu0 %v2673
        %3011 = vmatpush1.bf16.msra.mxu0 %v2672
        %3012 = vmatprep.subr.bf16.mxu0 %v2675
        %3013 = vmatpush1.bf16.msra.mxu0 %v2674
        %3014 = vmatprep.subr.bf16.mxu0 %v2677
        %3015 = vmatpush1.bf16.msra.mxu0 %v2676
        %3016 = vmatprep.subr.bf16.mxu0 %v2679
        %3017 = vmatpush1.bf16.msra.mxu0 %v2678
        %3018 = vmatprep.mubr.bf16.mxu0 %v889
        %3019 = vmatmul.mubr.bf16.gmra.mrb[0].mxu0 %v888
        %v3020 = vpop.f32.mrb[0].mxu0
        %v3021 = vadd.f32 %v2948, %v3020
        %v3022 = vpop.f32.mrb[0].mxu0
        %v3023 = vadd.f32 %v2950, %v3022
        %v3024 = vpop.f32.mrb[0].mxu0
        %v3025 = vadd.f32 %v2952, %v3024
        %v3026 = vpop.f32.mrb[0].mxu0
        %v3027 = vadd.f32 %v2954, %v3026
        %3028 = vmatprep.mubr.bf16.mxu0 %v891
        %3029 = vmatmul.mubr.bf16.gmra.mrb[0].mxu0 %v890
        %v3030 = vpop.f32.mrb[0].mxu0
        %v3031 = vadd.f32 %v2958, %v3030
        %v3032 = vpop.f32.mrb[0].mxu0
        %v3033 = vadd.f32 %v2960, %v3032
        %v3034 = vpop.f32.mrb[0].mxu0
        %v3035 = vadd.f32 %v2962, %v3034
        %v3036 = vpop.f32.mrb[0].mxu0
        %v3037 = vadd.f32 %v2964, %v3036
        %3038 = vmatprep.mubr.bf16.mxu0 %v893
        %3039 = vmatmul.mubr.bf16.gmra.mrb[0].mxu0 %v892
        %v3040 = vpop.f32.mrb[0].mxu0
        %v3041 = vadd.f32 %v2968, %v3040
        %v3042 = vpop.f32.mrb[0].mxu0
        %v3043 = vadd.f32 %v2970, %v3042
        %v3044 = vpop.f32.mrb[0].mxu0
        %v3045 = vadd.f32 %v2972, %v3044
        %v3046 = vpop.f32.mrb[0].mxu0
        %v3047 = vadd.f32 %v2974, %v3046
        %3048 = vmatprep.mubr.bf16.mxu0 %v895
        %3049 = vmatmul.mubr.bf16.gmra.mrb[0].mxu0 %v894
        %v3050 = vpop.f32.mrb[0].mxu0
        %v3051 = vadd.f32 %v2978, %v3050
        %v3052 = vpop.f32.mrb[0].mxu0
        %v3053 = vadd.f32 %v2980, %v3052
        %v3054 = vpop.f32.mrb[0].mxu0
        %v3055 = vadd.f32 %v2982, %v3054
        %v3056 = vpop.f32.mrb[0].mxu0
        %v3057 = vadd.f32 %v2984, %v3056
        %3058 = vdwg.mxu0
        %3059 = vmatprep.subr.bf16.mxu0 %v2681
        %3060 = vmatpush1.bf16.msra.mxu0 %v2680
        %3061 = vmatprep.subr.bf16.mxu0 %v2683
        %3062 = vmatpush1.bf16.msra.mxu0 %v2682
        %3063 = vmatprep.subr.bf16.mxu0 %v2685
        %3064 = vmatpush1.bf16.msra.mxu0 %v2684
        %3065 = vmatprep.subr.bf16.mxu0 %v2687
        %3066 = vmatpush1.bf16.msra.mxu0 %v2686
        %3067 = vmatprep.subr.bf16.mxu0 %v2689
        %3068 = vmatpush1.bf16.msra.mxu0 %v2688
        %3069 = vmatprep.subr.bf16.mxu0 %v2691
        %3070 = vmatpush1.bf16.msra.mxu0 %v2690
        %3071 = vmatprep.subr.bf16.mxu0 %v2693
        %3072 = vmatpush1.bf16.msra.mxu0 %v2692
        %3073 = vmatprep.subr.bf16.mxu0 %v2695
        %3074 = vmatpush1.bf16.msra.mxu0 %v2694
        %3075 = vmatprep.subr.bf16.mxu0 %v2697
        %3076 = vmatpush1.bf16.msra.mxu0 %v2696
        %3077 = vmatprep.subr.bf16.mxu0 %v2699
        %3078 = vmatpush1.bf16.msra.mxu0 %v2698
        %3079 = vmatprep.subr.bf16.mxu0 %v2701
        %3080 = vmatpush1.bf16.msra.mxu0 %v2700
        %3081 = vmatprep.subr.bf16.mxu0 %v2703
        %3082 = vmatpush1.bf16.msra.mxu0 %v2702
        %3083 = vmatprep.subr.bf16.mxu0 %v2705
        %3084 = vmatpush1.bf16.msra.mxu0 %v2704
        %3085 = vmatprep.subr.bf16.mxu0 %v2707
        %3086 = vmatpush1.bf16.msra.mxu0 %v2706
        %3087 = vmatprep.subr.bf16.mxu0 %v2709
        %3088 = vmatpush1.bf16.msra.mxu0 %v2708
        %3089 = vmatprep.subr.bf16.mxu0 %v2711
        %3090 = vmatpush1.bf16.msra.mxu0 %v2710
        %3091 = vmatprep.mubr.bf16.mxu0 %v2056
        %3092 = vmatmul.mubr.bf16.gmra.mrb[0].mxu0 %v2055
        %v3093 = vpop.f32.mrb[0].mxu0
        %v3094 = vadd.f32 %v3021, %v3093
        %v3095 = vpop.f32.mrb[0].mxu0
        %v3096 = vadd.f32 %v3023, %v3095
        %v3097 = vpop.f32.mrb[0].mxu0
        %v3098 = vadd.f32 %v3025, %v3097
        %v3099 = vpop.f32.mrb[0].mxu0
        %v3100 = vadd.f32 %v3027, %v3099
        %3101 = vmatprep.mubr.bf16.mxu0 %v2058
        %3102 = vmatmul.mubr.bf16.gmra.mrb[0].mxu0 %v2057
        %v3103 = vpop.f32.mrb[0].mxu0
        %v3104 = vadd.f32 %v3031, %v3103
        %v3105 = vpop.f32.mrb[0].mxu0
        %v3106 = vadd.f32 %v3033, %v3105
        %v3107 = vpop.f32.mrb[0].mxu0
        %v3108 = vadd.f32 %v3035, %v3107
        %v3109 = vpop.f32.mrb[0].mxu0
        %v3110 = vadd.f32 %v3037, %v3109
        %3111 = vmatprep.mubr.bf16.mxu0 %v2060
        %3112 = vmatmul.mubr.bf16.gmra.mrb[0].mxu0 %v2059
        %v3113 = vpop.f32.mrb[0].mxu0
        %v3114 = vadd.f32 %v3041, %v3113
        %v3115 = vpop.f32.mrb[0].mxu0
        %v3116 = vadd.f32 %v3043, %v3115
        %v3117 = vpop.f32.mrb[0].mxu0
        %v3118 = vadd.f32 %v3045, %v3117
        %v3119 = vpop.f32.mrb[0].mxu0
        %v3120 = vadd.f32 %v3047, %v3119
        %3121 = vmatprep.mubr.bf16.mxu0 %v2062
        %3122 = vmatmul.mubr.bf16.gmra.mrb[0].mxu0 %v2061
        %v3123 = vpop.f32.mrb[0].mxu0
        %v3124 = vadd.f32 %v3051, %v3123
        %v3125 = vpop.f32.mrb[0].mxu0
        %v3126 = vadd.f32 %v3053, %v3125
        %v3127 = vpop.f32.mrb[0].mxu0
        %v3128 = vadd.f32 %v3055, %v3127
        %v3129 = vpop.f32.mrb[0].mxu0
        %v3130 = vadd.f32 %v3057, %v3129
        %3131 = vdwg.mxu0
        %v3132 = vmax.f32 %v3094, 0.0
        %v3133 = vmax.f32 %v3096, 0.0
        %v3134 = vmax.f32 %v3098, 0.0
        %v3135 = vmax.f32 %v3100, 0.0
        %v3136 = vmax.f32 %v3104, 0.0
        %v3137 = vmax.f32 %v3106, 0.0
        %v3138 = vmax.f32 %v3108, 0.0
        %v3139 = vmax.f32 %v3110, 0.0
        %v3140 = vmax.f32 %v3114, 0.0
        %v3141 = vmax.f32 %v3116, 0.0
        %v3142 = vmax.f32 %v3118, 0.0
        %v3143 = vmax.f32 %v3120, 0.0
        %v3144 = vmax.f32 %v3124, 0.0
        %v3145 = vmax.f32 %v3126, 0.0
        %v3146 = vmax.f32 %v3128, 0.0
        %v3147 = vmax.f32 %v3130, 0.0
        %s3148 = scalar_lea.vmem %s198, 128
        %3149 = vst [vmem:[%s3148] sm:$0xff] %v3132
        %3150 = vst [vmem:[%s3148 + $0x8] sm:$0xff] %v3133
        %3151 = vst [vmem:[%s3148 + $0x10] sm:$0xff] %v3134
        %3152 = vst [vmem:[%s3148 + $0x18] sm:$0xff] %v3135
        %3153 = vst [vmem:[%s3148 + $0x20] sm:$0xff] %v3136
        %3154 = vst [vmem:[%s3148 + $0x28] sm:$0xff] %v3137
        %3155 = vst [vmem:[%s3148 + $0x30] sm:$0xff] %v3138
        %3156 = vst [vmem:[%s3148 + $0x38] sm:$0xff] %v3139
        %3157 = vst [vmem:[%s3148 + $0x40] sm:$0xff] %v3140
        %3158 = vst [vmem:[%s3148 + $0x48] sm:$0xff] %v3141
        %3159 = vst [vmem:[%s3148 + $0x50] sm:$0xff] %v3142
        %3160 = vst [vmem:[%s3148 + $0x58] sm:$0xff] %v3143
        %3161 = vst [vmem:[%s3148 + $0x60] sm:$0xff] %v3144
        %3162 = vst [vmem:[%s3148 + $0x68] sm:$0xff] %v3145
        %3163 = vst [vmem:[%s3148 + $0x70] sm:$0xff] %v3146
        %3164 = vst [vmem:[%s3148 + $0x78] sm:$0xff] %v3147
        %v3173 = vunpack.c.l.b16 %v576
        %v3174 = vunpack.c.h.b16 %v576
        %v3175 = vunpack.c.l.b16 %v577
        %v3176 = vunpack.c.h.b16 %v577
        %v3177 = vunpack.c.l.b16 %v578
        %v3178 = vunpack.c.h.b16 %v578
        %v3179 = vunpack.c.l.b16 %v579
        %v3180 = vunpack.c.h.b16 %v579
        %v3181 = vunpack.c.l.b16 %v580
        %v3182 = vunpack.c.h.b16 %v580
        %v3183 = vunpack.c.l.b16 %v581
        %v3184 = vunpack.c.h.b16 %v581
        %v3185 = vunpack.c.l.b16 %v582
        %v3186 = vunpack.c.h.b16 %v582
        %v3187 = vunpack.c.l.b16 %v583
        %v3188 = vunpack.c.h.b16 %v583
        %v3189 = vpack.c.b16 %v3175, %v3173
        %v3190 = vpack.c.b16 %v3176, %v3174
        %v3191 = vpack.c.b16 %v3179, %v3177
        %v3192 = vpack.c.b16 %v3180, %v3178
        %v3193 = vpack.c.b16 %v3183, %v3181
        %v3194 = vpack.c.b16 %v3184, %v3182
        %v3195 = vpack.c.b16 %v3187, %v3185
        %v3196 = vpack.c.b16 %v3188, %v3186
        %v3205 = vunpack.c.l.b16 %v605
        %v3206 = vunpack.c.h.b16 %v605
        %v3207 = vunpack.c.l.b16 %v619
        %v3208 = vunpack.c.h.b16 %v619
        %v3209 = vunpack.c.l.b16 %v633
        %v3210 = vunpack.c.h.b16 %v633
        %v3211 = vunpack.c.l.b16 %v647
        %v3212 = vunpack.c.h.b16 %v647
        %v3213 = vunpack.c.l.b16 %v661
        %v3214 = vunpack.c.h.b16 %v661
        %v3215 = vunpack.c.l.b16 %v675
        %v3216 = vunpack.c.h.b16 %v675
        %v3217 = vunpack.c.l.b16 %v689
        %v3218 = vunpack.c.h.b16 %v689
        %v3219 = vunpack.c.l.b16 %v703
        %v3220 = vunpack.c.h.b16 %v703
        %v3221 = vpack.c.b16 %v3207, %v3205
        %v3222 = vpack.c.b16 %v3208, %v3206
        %v3223 = vpack.c.b16 %v3211, %v3209
        %v3224 = vpack.c.b16 %v3212, %v3210
        %v3225 = vpack.c.b16 %v3215, %v3213
        %v3226 = vpack.c.b16 %v3216, %v3214
        %v3227 = vpack.c.b16 %v3219, %v3217
        %v3228 = vpack.c.b16 %v3220, %v3218
        %s3237 = scalar_lea.vmem [#allocation2], 2048
        %v3238 = vld [vmem:[%s3237] sm:$0xff]
        %v3239 = vld [vmem:[%s3237 + $0x8] sm:$0xff]
        %v3240 = vld [vmem:[%s3237 + $0x10] sm:$0xff]
        %v3241 = vld [vmem:[%s3237 + $0x18] sm:$0xff]
        %v3242 = vld [vmem:[%s3237 + $0x20] sm:$0xff]
        %v3243 = vld [vmem:[%s3237 + $0x28] sm:$0xff]
        %v3244 = vld [vmem:[%s3237 + $0x30] sm:$0xff]
        %v3245 = vld [vmem:[%s3237 + $0x38] sm:$0xff]
        %v3246 = vld [vmem:[%s3237 + $0x40] sm:$0xff]
        %v3247 = vld [vmem:[%s3237 + $0x48] sm:$0xff]
        %v3248 = vld [vmem:[%s3237 + $0x50] sm:$0xff]
        %v3249 = vld [vmem:[%s3237 + $0x58] sm:$0xff]
        %v3250 = vld [vmem:[%s3237 + $0x60] sm:$0xff]
        %v3251 = vld [vmem:[%s3237 + $0x68] sm:$0xff]
        %v3252 = vld [vmem:[%s3237 + $0x70] sm:$0xff]
        %v3253 = vld [vmem:[%s3237 + $0x78] sm:$0xff]
        %v3254 = vld [vmem:[%s3237 + $0x80] sm:$0xff]
        %v3255 = vld [vmem:[%s3237 + $0x88] sm:$0xff]
        %v3256 = vld [vmem:[%s3237 + $0x90] sm:$0xff]
        %v3257 = vld [vmem:[%s3237 + $0x98] sm:$0xff]
        %v3258 = vld [vmem:[%s3237 + $0xa0] sm:$0xff]
        %v3259 = vld [vmem:[%s3237 + $0xa8] sm:$0xff]
        %v3260 = vld [vmem:[%s3237 + $0xb0] sm:$0xff]
        %v3261 = vld [vmem:[%s3237 + $0xb8] sm:$0xff]
        %v3262 = vld [vmem:[%s3237 + $0xc0] sm:$0xff]
        %v3263 = vld [vmem:[%s3237 + $0xc8] sm:$0xff]
        %v3264 = vld [vmem:[%s3237 + $0xd0] sm:$0xff]
        %v3265 = vld [vmem:[%s3237 + $0xd8] sm:$0xff]
        %v3266 = vld [vmem:[%s3237 + $0xe0] sm:$0xff]
        %v3267 = vld [vmem:[%s3237 + $0xe8] sm:$0xff]
        %v3268 = vld [vmem:[%s3237 + $0xf0] sm:$0xff]
        %v3269 = vld [vmem:[%s3237 + $0xf8] sm:$0xff]
        %v3270 = vld [vmem:[%s3237 + $0x100] sm:$0xff]
        %v3271 = vld [vmem:[%s3237 + $0x108] sm:$0xff]
        %v3272 = vld [vmem:[%s3237 + $0x110] sm:$0xff]
        %v3273 = vld [vmem:[%s3237 + $0x118] sm:$0xff]
        %v3274 = vld [vmem:[%s3237 + $0x120] sm:$0xff]
        %v3275 = vld [vmem:[%s3237 + $0x128] sm:$0xff]
        %v3276 = vld [vmem:[%s3237 + $0x130] sm:$0xff]
        %v3277 = vld [vmem:[%s3237 + $0x138] sm:$0xff]
        %v3278 = vld [vmem:[%s3237 + $0x140] sm:$0xff]
        %v3279 = vld [vmem:[%s3237 + $0x148] sm:$0xff]
        %v3280 = vld [vmem:[%s3237 + $0x150] sm:$0xff]
        %v3281 = vld [vmem:[%s3237 + $0x158] sm:$0xff]
        %v3282 = vld [vmem:[%s3237 + $0x160] sm:$0xff]
        %v3283 = vld [vmem:[%s3237 + $0x168] sm:$0xff]
        %v3284 = vld [vmem:[%s3237 + $0x170] sm:$0xff]
        %v3285 = vld [vmem:[%s3237 + $0x178] sm:$0xff]
        %v3286 = vld [vmem:[%s3237 + $0x180] sm:$0xff]
        %v3287 = vld [vmem:[%s3237 + $0x188] sm:$0xff]
        %v3288 = vld [vmem:[%s3237 + $0x190] sm:$0xff]
        %v3289 = vld [vmem:[%s3237 + $0x198] sm:$0xff]
        %v3290 = vld [vmem:[%s3237 + $0x1a0] sm:$0xff]
        %v3291 = vld [vmem:[%s3237 + $0x1a8] sm:$0xff]
        %v3292 = vld [vmem:[%s3237 + $0x1b0] sm:$0xff]
        %v3293 = vld [vmem:[%s3237 + $0x1b8] sm:$0xff]
        %v3294 = vld [vmem:[%s3237 + $0x1c0] sm:$0xff]
        %v3295 = vld [vmem:[%s3237 + $0x1c8] sm:$0xff]
        %v3296 = vld [vmem:[%s3237 + $0x1d0] sm:$0xff]
        %v3297 = vld [vmem:[%s3237 + $0x1d8] sm:$0xff]
        %v3298 = vld [vmem:[%s3237 + $0x1e0] sm:$0xff]
        %v3299 = vld [vmem:[%s3237 + $0x1e8] sm:$0xff]
        %v3300 = vld [vmem:[%s3237 + $0x1f0] sm:$0xff]
        %v3301 = vld [vmem:[%s3237 + $0x1f8] sm:$0xff]
        %v3302 = vld [vmem:[%s3237 + $0x200] sm:$0xff]
        %v3303 = vld [vmem:[%s3237 + $0x208] sm:$0xff]
        %v3304 = vld [vmem:[%s3237 + $0x210] sm:$0xff]
        %v3305 = vld [vmem:[%s3237 + $0x218] sm:$0xff]
        %v3306 = vld [vmem:[%s3237 + $0x220] sm:$0xff]
        %v3307 = vld [vmem:[%s3237 + $0x228] sm:$0xff]
        %v3308 = vld [vmem:[%s3237 + $0x230] sm:$0xff]
        %v3309 = vld [vmem:[%s3237 + $0x238] sm:$0xff]
        %v3310 = vld [vmem:[%s3237 + $0x240] sm:$0xff]
        %v3311 = vld [vmem:[%s3237 + $0x248] sm:$0xff]
        %v3312 = vld [vmem:[%s3237 + $0x250] sm:$0xff]
        %v3313 = vld [vmem:[%s3237 + $0x258] sm:$0xff]
        %v3314 = vld [vmem:[%s3237 + $0x260] sm:$0xff]
        %v3315 = vld [vmem:[%s3237 + $0x268] sm:$0xff]
        %v3316 = vld [vmem:[%s3237 + $0x270] sm:$0xff]
        %v3317 = vld [vmem:[%s3237 + $0x278] sm:$0xff]
        %v3318 = vld [vmem:[%s3237 + $0x280] sm:$0xff]
        %v3319 = vld [vmem:[%s3237 + $0x288] sm:$0xff]
        %v3320 = vld [vmem:[%s3237 + $0x290] sm:$0xff]
        %v3321 = vld [vmem:[%s3237 + $0x298] sm:$0xff]
        %v3322 = vld [vmem:[%s3237 + $0x2a0] sm:$0xff]
        %v3323 = vld [vmem:[%s3237 + $0x2a8] sm:$0xff]
        %v3324 = vld [vmem:[%s3237 + $0x2b0] sm:$0xff]
        %v3325 = vld [vmem:[%s3237 + $0x2b8] sm:$0xff]
        %v3326 = vld [vmem:[%s3237 + $0x2c0] sm:$0xff]
        %v3327 = vld [vmem:[%s3237 + $0x2c8] sm:$0xff]
        %v3328 = vld [vmem:[%s3237 + $0x2d0] sm:$0xff]
        %v3329 = vld [vmem:[%s3237 + $0x2d8] sm:$0xff]
        %v3330 = vld [vmem:[%s3237 + $0x2e0] sm:$0xff]
        %v3331 = vld [vmem:[%s3237 + $0x2e8] sm:$0xff]
        %v3332 = vld [vmem:[%s3237 + $0x2f0] sm:$0xff]
        %v3333 = vld [vmem:[%s3237 + $0x2f8] sm:$0xff]
        %v3334 = vld [vmem:[%s3237 + $0x300] sm:$0xff]
        %v3335 = vld [vmem:[%s3237 + $0x308] sm:$0xff]
        %v3336 = vld [vmem:[%s3237 + $0x310] sm:$0xff]
        %v3337 = vld [vmem:[%s3237 + $0x318] sm:$0xff]
        %v3338 = vld [vmem:[%s3237 + $0x320] sm:$0xff]
        %v3339 = vld [vmem:[%s3237 + $0x328] sm:$0xff]
        %v3340 = vld [vmem:[%s3237 + $0x330] sm:$0xff]
        %v3341 = vld [vmem:[%s3237 + $0x338] sm:$0xff]
        %v3342 = vld [vmem:[%s3237 + $0x340] sm:$0xff]
        %v3343 = vld [vmem:[%s3237 + $0x348] sm:$0xff]
        %v3344 = vld [vmem:[%s3237 + $0x350] sm:$0xff]
        %v3345 = vld [vmem:[%s3237 + $0x358] sm:$0xff]
        %v3346 = vld [vmem:[%s3237 + $0x360] sm:$0xff]
        %v3347 = vld [vmem:[%s3237 + $0x368] sm:$0xff]
        %v3348 = vld [vmem:[%s3237 + $0x370] sm:$0xff]
        %v3349 = vld [vmem:[%s3237 + $0x378] sm:$0xff]
        %v3350 = vld [vmem:[%s3237 + $0x380] sm:$0xff]
        %v3351 = vld [vmem:[%s3237 + $0x388] sm:$0xff]
        %v3352 = vld [vmem:[%s3237 + $0x390] sm:$0xff]
        %v3353 = vld [vmem:[%s3237 + $0x398] sm:$0xff]
        %v3354 = vld [vmem:[%s3237 + $0x3a0] sm:$0xff]
        %v3355 = vld [vmem:[%s3237 + $0x3a8] sm:$0xff]
        %v3356 = vld [vmem:[%s3237 + $0x3b0] sm:$0xff]
        %v3357 = vld [vmem:[%s3237 + $0x3b8] sm:$0xff]
        %v3358 = vld [vmem:[%s3237 + $0x3c0] sm:$0xff]
        %v3359 = vld [vmem:[%s3237 + $0x3c8] sm:$0xff]
        %v3360 = vld [vmem:[%s3237 + $0x3d0] sm:$0xff]
        %v3361 = vld [vmem:[%s3237 + $0x3d8] sm:$0xff]
        %v3362 = vld [vmem:[%s3237 + $0x3e0] sm:$0xff]
        %v3363 = vld [vmem:[%s3237 + $0x3e8] sm:$0xff]
        %v3364 = vld [vmem:[%s3237 + $0x3f0] sm:$0xff]
        %v3365 = vld [vmem:[%s3237 + $0x3f8] sm:$0xff]
        %v3494 = vunpack.c.l.b16 %v3238
        %v3495 = vunpack.c.h.b16 %v3238
        %v3496 = vunpack.c.l.b16 %v3239
        %v3497 = vunpack.c.h.b16 %v3239
        %v3498 = vunpack.c.l.b16 %v3240
        %v3499 = vunpack.c.h.b16 %v3240
        %v3500 = vunpack.c.l.b16 %v3241
        %v3501 = vunpack.c.h.b16 %v3241
        %v3502 = vunpack.c.l.b16 %v3242
        %v3503 = vunpack.c.h.b16 %v3242
        %v3504 = vunpack.c.l.b16 %v3243
        %v3505 = vunpack.c.h.b16 %v3243
        %v3506 = vunpack.c.l.b16 %v3244
        %v3507 = vunpack.c.h.b16 %v3244
        %v3508 = vunpack.c.l.b16 %v3245
        %v3509 = vunpack.c.h.b16 %v3245
        %v3510 = vunpack.c.l.b16 %v3246
        %v3511 = vunpack.c.h.b16 %v3246
        %v3512 = vunpack.c.l.b16 %v3247
        %v3513 = vunpack.c.h.b16 %v3247
        %v3514 = vunpack.c.l.b16 %v3248
        %v3515 = vunpack.c.h.b16 %v3248
        %v3516 = vunpack.c.l.b16 %v3249
        %v3517 = vunpack.c.h.b16 %v3249
        %v3518 = vunpack.c.l.b16 %v3250
        %v3519 = vunpack.c.h.b16 %v3250
        %v3520 = vunpack.c.l.b16 %v3251
        %v3521 = vunpack.c.h.b16 %v3251
        %v3522 = vunpack.c.l.b16 %v3252
        %v3523 = vunpack.c.h.b16 %v3252
        %v3524 = vunpack.c.l.b16 %v3253
        %v3525 = vunpack.c.h.b16 %v3253
        %v3526 = vunpack.c.l.b16 %v3254
        %v3527 = vunpack.c.h.b16 %v3254
        %v3528 = vunpack.c.l.b16 %v3255
        %v3529 = vunpack.c.h.b16 %v3255
        %v3530 = vunpack.c.l.b16 %v3256
        %v3531 = vunpack.c.h.b16 %v3256
        %v3532 = vunpack.c.l.b16 %v3257
        %v3533 = vunpack.c.h.b16 %v3257
        %v3534 = vunpack.c.l.b16 %v3258
        %v3535 = vunpack.c.h.b16 %v3258
        %v3536 = vunpack.c.l.b16 %v3259
        %v3537 = vunpack.c.h.b16 %v3259
        %v3538 = vunpack.c.l.b16 %v3260
        %v3539 = vunpack.c.h.b16 %v3260
        %v3540 = vunpack.c.l.b16 %v3261
        %v3541 = vunpack.c.h.b16 %v3261
        %v3542 = vunpack.c.l.b16 %v3262
        %v3543 = vunpack.c.h.b16 %v3262
        %v3544 = vunpack.c.l.b16 %v3263
        %v3545 = vunpack.c.h.b16 %v3263
        %v3546 = vunpack.c.l.b16 %v3264
        %v3547 = vunpack.c.h.b16 %v3264
        %v3548 = vunpack.c.l.b16 %v3265
        %v3549 = vunpack.c.h.b16 %v3265
        %v3550 = vunpack.c.l.b16 %v3266
        %v3551 = vunpack.c.h.b16 %v3266
        %v3552 = vunpack.c.l.b16 %v3267
        %v3553 = vunpack.c.h.b16 %v3267
        %v3554 = vunpack.c.l.b16 %v3268
        %v3555 = vunpack.c.h.b16 %v3268
        %v3556 = vunpack.c.l.b16 %v3269
        %v3557 = vunpack.c.h.b16 %v3269
        %v3558 = vunpack.c.l.b16 %v3270
        %v3559 = vunpack.c.h.b16 %v3270
        %v3560 = vunpack.c.l.b16 %v3271
        %v3561 = vunpack.c.h.b16 %v3271
        %v3562 = vunpack.c.l.b16 %v3272
        %v3563 = vunpack.c.h.b16 %v3272
        %v3564 = vunpack.c.l.b16 %v3273
        %v3565 = vunpack.c.h.b16 %v3273
        %v3566 = vunpack.c.l.b16 %v3274
        %v3567 = vunpack.c.h.b16 %v3274
        %v3568 = vunpack.c.l.b16 %v3275
        %v3569 = vunpack.c.h.b16 %v3275
        %v3570 = vunpack.c.l.b16 %v3276
        %v3571 = vunpack.c.h.b16 %v3276
        %v3572 = vunpack.c.l.b16 %v3277
        %v3573 = vunpack.c.h.b16 %v3277
        %v3574 = vunpack.c.l.b16 %v3278
        %v3575 = vunpack.c.h.b16 %v3278
        %v3576 = vunpack.c.l.b16 %v3279
        %v3577 = vunpack.c.h.b16 %v3279
        %v3578 = vunpack.c.l.b16 %v3280
        %v3579 = vunpack.c.h.b16 %v3280
        %v3580 = vunpack.c.l.b16 %v3281
        %v3581 = vunpack.c.h.b16 %v3281
        %v3582 = vunpack.c.l.b16 %v3282
        %v3583 = vunpack.c.h.b16 %v3282
        %v3584 = vunpack.c.l.b16 %v3283
        %v3585 = vunpack.c.h.b16 %v3283
        %v3586 = vunpack.c.l.b16 %v3284
        %v3587 = vunpack.c.h.b16 %v3284
        %v3588 = vunpack.c.l.b16 %v3285
        %v3589 = vunpack.c.h.b16 %v3285
        %v3590 = vunpack.c.l.b16 %v3286
        %v3591 = vunpack.c.h.b16 %v3286
        %v3592 = vunpack.c.l.b16 %v3287
        %v3593 = vunpack.c.h.b16 %v3287
        %v3594 = vunpack.c.l.b16 %v3288
        %v3595 = vunpack.c.h.b16 %v3288
        %v3596 = vunpack.c.l.b16 %v3289
        %v3597 = vunpack.c.h.b16 %v3289
        %v3598 = vunpack.c.l.b16 %v3290
        %v3599 = vunpack.c.h.b16 %v3290
        %v3600 = vunpack.c.l.b16 %v3291
        %v3601 = vunpack.c.h.b16 %v3291
        %v3602 = vunpack.c.l.b16 %v3292
        %v3603 = vunpack.c.h.b16 %v3292
        %v3604 = vunpack.c.l.b16 %v3293
        %v3605 = vunpack.c.h.b16 %v3293
        %v3606 = vunpack.c.l.b16 %v3294
        %v3607 = vunpack.c.h.b16 %v3294
        %v3608 = vunpack.c.l.b16 %v3295
        %v3609 = vunpack.c.h.b16 %v3295
        %v3610 = vunpack.c.l.b16 %v3296
        %v3611 = vunpack.c.h.b16 %v3296
        %v3612 = vunpack.c.l.b16 %v3297
        %v3613 = vunpack.c.h.b16 %v3297
        %v3614 = vunpack.c.l.b16 %v3298
        %v3615 = vunpack.c.h.b16 %v3298
        %v3616 = vunpack.c.l.b16 %v3299
        %v3617 = vunpack.c.h.b16 %v3299
        %v3618 = vunpack.c.l.b16 %v3300
        %v3619 = vunpack.c.h.b16 %v3300
        %v3620 = vunpack.c.l.b16 %v3301
        %v3621 = vunpack.c.h.b16 %v3301
        %v3622 = vunpack.c.l.b16 %v3302
        %v3623 = vunpack.c.h.b16 %v3302
        %v3624 = vunpack.c.l.b16 %v3303
        %v3625 = vunpack.c.h.b16 %v3303
        %v3626 = vunpack.c.l.b16 %v3304
        %v3627 = vunpack.c.h.b16 %v3304
        %v3628 = vunpack.c.l.b16 %v3305
        %v3629 = vunpack.c.h.b16 %v3305
        %v3630 = vunpack.c.l.b16 %v3306
        %v3631 = vunpack.c.h.b16 %v3306
        %v3632 = vunpack.c.l.b16 %v3307
        %v3633 = vunpack.c.h.b16 %v3307
        %v3634 = vunpack.c.l.b16 %v3308
        %v3635 = vunpack.c.h.b16 %v3308
        %v3636 = vunpack.c.l.b16 %v3309
        %v3637 = vunpack.c.h.b16 %v3309
        %v3638 = vunpack.c.l.b16 %v3310
        %v3639 = vunpack.c.h.b16 %v3310
        %v3640 = vunpack.c.l.b16 %v3311
        %v3641 = vunpack.c.h.b16 %v3311
        %v3642 = vunpack.c.l.b16 %v3312
        %v3643 = vunpack.c.h.b16 %v3312
        %v3644 = vunpack.c.l.b16 %v3313
        %v3645 = vunpack.c.h.b16 %v3313
        %v3646 = vunpack.c.l.b16 %v3314
        %v3647 = vunpack.c.h.b16 %v3314
        %v3648 = vunpack.c.l.b16 %v3315
        %v3649 = vunpack.c.h.b16 %v3315
        %v3650 = vunpack.c.l.b16 %v3316
        %v3651 = vunpack.c.h.b16 %v3316
        %v3652 = vunpack.c.l.b16 %v3317
        %v3653 = vunpack.c.h.b16 %v3317
        %v3654 = vunpack.c.l.b16 %v3318
        %v3655 = vunpack.c.h.b16 %v3318
        %v3656 = vunpack.c.l.b16 %v3319
        %v3657 = vunpack.c.h.b16 %v3319
        %v3658 = vunpack.c.l.b16 %v3320
        %v3659 = vunpack.c.h.b16 %v3320
        %v3660 = vunpack.c.l.b16 %v3321
        %v3661 = vunpack.c.h.b16 %v3321
        %v3662 = vunpack.c.l.b16 %v3322
        %v3663 = vunpack.c.h.b16 %v3322
        %v3664 = vunpack.c.l.b16 %v3323
        %v3665 = vunpack.c.h.b16 %v3323
        %v3666 = vunpack.c.l.b16 %v3324
        %v3667 = vunpack.c.h.b16 %v3324
        %v3668 = vunpack.c.l.b16 %v3325
        %v3669 = vunpack.c.h.b16 %v3325
        %v3670 = vunpack.c.l.b16 %v3326
        %v3671 = vunpack.c.h.b16 %v3326
        %v3672 = vunpack.c.l.b16 %v3327
        %v3673 = vunpack.c.h.b16 %v3327
        %v3674 = vunpack.c.l.b16 %v3328
        %v3675 = vunpack.c.h.b16 %v3328
        %v3676 = vunpack.c.l.b16 %v3329
        %v3677 = vunpack.c.h.b16 %v3329
        %v3678 = vunpack.c.l.b16 %v3330
        %v3679 = vunpack.c.h.b16 %v3330
        %v3680 = vunpack.c.l.b16 %v3331
        %v3681 = vunpack.c.h.b16 %v3331
        %v3682 = vunpack.c.l.b16 %v3332
        %v3683 = vunpack.c.h.b16 %v3332
        %v3684 = vunpack.c.l.b16 %v3333
        %v3685 = vunpack.c.h.b16 %v3333
        %v3686 = vunpack.c.l.b16 %v3334
        %v3687 = vunpack.c.h.b16 %v3334
        %v3688 = vunpack.c.l.b16 %v3335
        %v3689 = vunpack.c.h.b16 %v3335
        %v3690 = vunpack.c.l.b16 %v3336
        %v3691 = vunpack.c.h.b16 %v3336
        %v3692 = vunpack.c.l.b16 %v3337
        %v3693 = vunpack.c.h.b16 %v3337
        %v3694 = vunpack.c.l.b16 %v3338
        %v3695 = vunpack.c.h.b16 %v3338
        %v3696 = vunpack.c.l.b16 %v3339
        %v3697 = vunpack.c.h.b16 %v3339
        %v3698 = vunpack.c.l.b16 %v3340
        %v3699 = vunpack.c.h.b16 %v3340
        %v3700 = vunpack.c.l.b16 %v3341
        %v3701 = vunpack.c.h.b16 %v3341
        %v3702 = vunpack.c.l.b16 %v3342
        %v3703 = vunpack.c.h.b16 %v3342
        %v3704 = vunpack.c.l.b16 %v3343
        %v3705 = vunpack.c.h.b16 %v3343
        %v3706 = vunpack.c.l.b16 %v3344
        %v3707 = vunpack.c.h.b16 %v3344
        %v3708 = vunpack.c.l.b16 %v3345
        %v3709 = vunpack.c.h.b16 %v3345
        %v3710 = vunpack.c.l.b16 %v3346
        %v3711 = vunpack.c.h.b16 %v3346
        %v3712 = vunpack.c.l.b16 %v3347
        %v3713 = vunpack.c.h.b16 %v3347
        %v3714 = vunpack.c.l.b16 %v3348
        %v3715 = vunpack.c.h.b16 %v3348
        %v3716 = vunpack.c.l.b16 %v3349
        %v3717 = vunpack.c.h.b16 %v3349
        %v3718 = vunpack.c.l.b16 %v3350
        %v3719 = vunpack.c.h.b16 %v3350
        %v3720 = vunpack.c.l.b16 %v3351
        %v3721 = vunpack.c.h.b16 %v3351
        %v3722 = vunpack.c.l.b16 %v3352
        %v3723 = vunpack.c.h.b16 %v3352
        %v3724 = vunpack.c.l.b16 %v3353
        %v3725 = vunpack.c.h.b16 %v3353
        %v3726 = vunpack.c.l.b16 %v3354
        %v3727 = vunpack.c.h.b16 %v3354
        %v3728 = vunpack.c.l.b16 %v3355
        %v3729 = vunpack.c.h.b16 %v3355
        %v3730 = vunpack.c.l.b16 %v3356
        %v3731 = vunpack.c.h.b16 %v3356
        %v3732 = vunpack.c.l.b16 %v3357
        %v3733 = vunpack.c.h.b16 %v3357
        %v3734 = vunpack.c.l.b16 %v3358
        %v3735 = vunpack.c.h.b16 %v3358
        %v3736 = vunpack.c.l.b16 %v3359
        %v3737 = vunpack.c.h.b16 %v3359
        %v3738 = vunpack.c.l.b16 %v3360
        %v3739 = vunpack.c.h.b16 %v3360
        %v3740 = vunpack.c.l.b16 %v3361
        %v3741 = vunpack.c.h.b16 %v3361
        %v3742 = vunpack.c.l.b16 %v3362
        %v3743 = vunpack.c.h.b16 %v3362
        %v3744 = vunpack.c.l.b16 %v3363
        %v3745 = vunpack.c.h.b16 %v3363
        %v3746 = vunpack.c.l.b16 %v3364
        %v3747 = vunpack.c.h.b16 %v3364
        %v3748 = vunpack.c.l.b16 %v3365
        %v3749 = vunpack.c.h.b16 %v3365
        %v3750 = vpack.c.b16 %v3496, %v3494
        %v3751 = vpack.c.b16 %v3497, %v3495
        %v3752 = vpack.c.b16 %v3500, %v3498
        %v3753 = vpack.c.b16 %v3501, %v3499
        %v3754 = vpack.c.b16 %v3504, %v3502
        %v3755 = vpack.c.b16 %v3505, %v3503
        %v3756 = vpack.c.b16 %v3508, %v3506
        %v3757 = vpack.c.b16 %v3509, %v3507
        %v3758 = vpack.c.b16 %v3512, %v3510
        %v3759 = vpack.c.b16 %v3513, %v3511
        %v3760 = vpack.c.b16 %v3516, %v3514
        %v3761 = vpack.c.b16 %v3517, %v3515
        %v3762 = vpack.c.b16 %v3520, %v3518
        %v3763 = vpack.c.b16 %v3521, %v3519
        %v3764 = vpack.c.b16 %v3524, %v3522
        %v3765 = vpack.c.b16 %v3525, %v3523
        %v3766 = vpack.c.b16 %v3528, %v3526
        %v3767 = vpack.c.b16 %v3529, %v3527
        %v3768 = vpack.c.b16 %v3532, %v3530
        %v3769 = vpack.c.b16 %v3533, %v3531
        %v3770 = vpack.c.b16 %v3536, %v3534
        %v3771 = vpack.c.b16 %v3537, %v3535
        %v3772 = vpack.c.b16 %v3540, %v3538
        %v3773 = vpack.c.b16 %v3541, %v3539
        %v3774 = vpack.c.b16 %v3544, %v3542
        %v3775 = vpack.c.b16 %v3545, %v3543
        %v3776 = vpack.c.b16 %v3548, %v3546
        %v3777 = vpack.c.b16 %v3549, %v3547
        %v3778 = vpack.c.b16 %v3552, %v3550
        %v3779 = vpack.c.b16 %v3553, %v3551
        %v3780 = vpack.c.b16 %v3556, %v3554
        %v3781 = vpack.c.b16 %v3557, %v3555
        %v3782 = vpack.c.b16 %v3560, %v3558
        %v3783 = vpack.c.b16 %v3561, %v3559
        %v3784 = vpack.c.b16 %v3564, %v3562
        %v3785 = vpack.c.b16 %v3565, %v3563
        %v3786 = vpack.c.b16 %v3568, %v3566
        %v3787 = vpack.c.b16 %v3569, %v3567
        %v3788 = vpack.c.b16 %v3572, %v3570
        %v3789 = vpack.c.b16 %v3573, %v3571
        %v3790 = vpack.c.b16 %v3576, %v3574
        %v3791 = vpack.c.b16 %v3577, %v3575
        %v3792 = vpack.c.b16 %v3580, %v3578
        %v3793 = vpack.c.b16 %v3581, %v3579
        %v3794 = vpack.c.b16 %v3584, %v3582
        %v3795 = vpack.c.b16 %v3585, %v3583
        %v3796 = vpack.c.b16 %v3588, %v3586
        %v3797 = vpack.c.b16 %v3589, %v3587
        %v3798 = vpack.c.b16 %v3592, %v3590
        %v3799 = vpack.c.b16 %v3593, %v3591
        %v3800 = vpack.c.b16 %v3596, %v3594
        %v3801 = vpack.c.b16 %v3597, %v3595
        %v3802 = vpack.c.b16 %v3600, %v3598
        %v3803 = vpack.c.b16 %v3601, %v3599
        %v3804 = vpack.c.b16 %v3604, %v3602
        %v3805 = vpack.c.b16 %v3605, %v3603
        %v3806 = vpack.c.b16 %v3608, %v3606
        %v3807 = vpack.c.b16 %v3609, %v3607
        %v3808 = vpack.c.b16 %v3612, %v3610
        %v3809 = vpack.c.b16 %v3613, %v3611
        %v3810 = vpack.c.b16 %v3616, %v3614
        %v3811 = vpack.c.b16 %v3617, %v3615
        %v3812 = vpack.c.b16 %v3620, %v3618
        %v3813 = vpack.c.b16 %v3621, %v3619
        %v3814 = vpack.c.b16 %v3624, %v3622
        %v3815 = vpack.c.b16 %v3625, %v3623
        %v3816 = vpack.c.b16 %v3628, %v3626
        %v3817 = vpack.c.b16 %v3629, %v3627
        %v3818 = vpack.c.b16 %v3632, %v3630
        %v3819 = vpack.c.b16 %v3633, %v3631
        %v3820 = vpack.c.b16 %v3636, %v3634
        %v3821 = vpack.c.b16 %v3637, %v3635
        %v3822 = vpack.c.b16 %v3640, %v3638
        %v3823 = vpack.c.b16 %v3641, %v3639
        %v3824 = vpack.c.b16 %v3644, %v3642
        %v3825 = vpack.c.b16 %v3645, %v3643
        %v3826 = vpack.c.b16 %v3648, %v3646
        %v3827 = vpack.c.b16 %v3649, %v3647
        %v3828 = vpack.c.b16 %v3652, %v3650
        %v3829 = vpack.c.b16 %v3653, %v3651
        %v3830 = vpack.c.b16 %v3656, %v3654
        %v3831 = vpack.c.b16 %v3657, %v3655
        %v3832 = vpack.c.b16 %v3660, %v3658
        %v3833 = vpack.c.b16 %v3661, %v3659
        %v3834 = vpack.c.b16 %v3664, %v3662
        %v3835 = vpack.c.b16 %v3665, %v3663
        %v3836 = vpack.c.b16 %v3668, %v3666
        %v3837 = vpack.c.b16 %v3669, %v3667
        %v3838 = vpack.c.b16 %v3672, %v3670
        %v3839 = vpack.c.b16 %v3673, %v3671
        %v3840 = vpack.c.b16 %v3676, %v3674
        %v3841 = vpack.c.b16 %v3677, %v3675
        %v3842 = vpack.c.b16 %v3680, %v3678
        %v3843 = vpack.c.b16 %v3681, %v3679
        %v3844 = vpack.c.b16 %v3684, %v3682
        %v3845 = vpack.c.b16 %v3685, %v3683
        %v3846 = vpack.c.b16 %v3688, %v3686
        %v3847 = vpack.c.b16 %v3689, %v3687
        %v3848 = vpack.c.b16 %v3692, %v3690
        %v3849 = vpack.c.b16 %v3693, %v3691
        %v3850 = vpack.c.b16 %v3696, %v3694
        %v3851 = vpack.c.b16 %v3697, %v3695
        %v3852 = vpack.c.b16 %v3700, %v3698
        %v3853 = vpack.c.b16 %v3701, %v3699
        %v3854 = vpack.c.b16 %v3704, %v3702
        %v3855 = vpack.c.b16 %v3705, %v3703
        %v3856 = vpack.c.b16 %v3708, %v3706
        %v3857 = vpack.c.b16 %v3709, %v3707
        %v3858 = vpack.c.b16 %v3712, %v3710
        %v3859 = vpack.c.b16 %v3713, %v3711
        %v3860 = vpack.c.b16 %v3716, %v3714
        %v3861 = vpack.c.b16 %v3717, %v3715
        %v3862 = vpack.c.b16 %v3720, %v3718
        %v3863 = vpack.c.b16 %v3721, %v3719
        %v3864 = vpack.c.b16 %v3724, %v3722
        %v3865 = vpack.c.b16 %v3725, %v3723
        %v3866 = vpack.c.b16 %v3728, %v3726
        %v3867 = vpack.c.b16 %v3729, %v3727
        %v3868 = vpack.c.b16 %v3732, %v3730
        %v3869 = vpack.c.b16 %v3733, %v3731
        %v3870 = vpack.c.b16 %v3736, %v3734
        %v3871 = vpack.c.b16 %v3737, %v3735
        %v3872 = vpack.c.b16 %v3740, %v3738
        %v3873 = vpack.c.b16 %v3741, %v3739
        %v3874 = vpack.c.b16 %v3744, %v3742
        %v3875 = vpack.c.b16 %v3745, %v3743
        %v3876 = vpack.c.b16 %v3748, %v3746
        %v3877 = vpack.c.b16 %v3749, %v3747
        %4006 = vmatprep.subr.bf16.mxu0 %v3751
        %4007 = vmatpush1.bf16.msra.mxu0 %v3750
        %4008 = vmatprep.subr.bf16.mxu0 %v3753
        %4009 = vmatpush1.bf16.msra.mxu0 %v3752
        %4010 = vmatprep.subr.bf16.mxu0 %v3755
        %4011 = vmatpush1.bf16.msra.mxu0 %v3754
        %4012 = vmatprep.subr.bf16.mxu0 %v3757
        %4013 = vmatpush1.bf16.msra.mxu0 %v3756
        %4014 = vmatprep.subr.bf16.mxu0 %v3759
        %4015 = vmatpush1.bf16.msra.mxu0 %v3758
        %4016 = vmatprep.subr.bf16.mxu0 %v3761
        %4017 = vmatpush1.bf16.msra.mxu0 %v3760
        %4018 = vmatprep.subr.bf16.mxu0 %v3763
        %4019 = vmatpush1.bf16.msra.mxu0 %v3762
        %4020 = vmatprep.subr.bf16.mxu0 %v3765
        %4021 = vmatpush1.bf16.msra.mxu0 %v3764
        %4022 = vmatprep.subr.bf16.mxu0 %v3767
        %4023 = vmatpush1.bf16.msra.mxu0 %v3766
        %4024 = vmatprep.subr.bf16.mxu0 %v3769
        %4025 = vmatpush1.bf16.msra.mxu0 %v3768
        %4026 = vmatprep.subr.bf16.mxu0 %v3771
        %4027 = vmatpush1.bf16.msra.mxu0 %v3770
        %4028 = vmatprep.subr.bf16.mxu0 %v3773
        %4029 = vmatpush1.bf16.msra.mxu0 %v3772
        %4030 = vmatprep.subr.bf16.mxu0 %v3775
        %4031 = vmatpush1.bf16.msra.mxu0 %v3774
        %4032 = vmatprep.subr.bf16.mxu0 %v3777
        %4033 = vmatpush1.bf16.msra.mxu0 %v3776
        %4034 = vmatprep.subr.bf16.mxu0 %v3779
        %4035 = vmatpush1.bf16.msra.mxu0 %v3778
        %4036 = vmatprep.subr.bf16.mxu0 %v3781
        %4037 = vmatpush1.bf16.msra.mxu0 %v3780
        %4038 = vmatprep.mubr.bf16.mxu0 %v857
        %4039 = vmatmul.mubr.bf16.gmra.mrb[0].mxu0 %v856
        %v4040 = vpop.f32.mrb[0].mxu0
        %v4041 = vadd.f32 %v1036, %v4040
        %v4042 = vpop.f32.mrb[0].mxu0
        %v4043 = vadd.f32 %v1040, %v4042
        %v4044 = vpop.f32.mrb[0].mxu0
        %v4045 = vadd.f32 %v1036, %v4044
        %v4046 = vpop.f32.mrb[0].mxu0
        %v4047 = vadd.f32 %v1040, %v4046
        %4048 = vmatprep.mubr.bf16.mxu0 %v859
        %4049 = vmatmul.mubr.bf16.gmra.mrb[0].mxu0 %v858
        %v4050 = vpop.f32.mrb[0].mxu0
        %v4051 = vadd.f32 %v1036, %v4050
        %v4052 = vpop.f32.mrb[0].mxu0
        %v4053 = vadd.f32 %v1040, %v4052
        %v4054 = vpop.f32.mrb[0].mxu0
        %v4055 = vadd.f32 %v1036, %v4054
        %v4056 = vpop.f32.mrb[0].mxu0
        %v4057 = vadd.f32 %v1040, %v4056
        %4058 = vmatprep.mubr.bf16.mxu0 %v861
        %4059 = vmatmul.mubr.bf16.gmra.mrb[0].mxu0 %v860
        %v4060 = vpop.f32.mrb[0].mxu0
        %v4061 = vadd.f32 %v1036, %v4060
        %v4062 = vpop.f32.mrb[0].mxu0
        %v4063 = vadd.f32 %v1040, %v4062
        %v4064 = vpop.f32.mrb[0].mxu0
        %v4065 = vadd.f32 %v1036, %v4064
        %v4066 = vpop.f32.mrb[0].mxu0
        %v4067 = vadd.f32 %v1040, %v4066
        %4068 = vmatprep.mubr.bf16.mxu0 %v863
        %4069 = vmatmul.mubr.bf16.gmra.mrb[0].mxu0 %v862
        %v4070 = vpop.f32.mrb[0].mxu0
        %v4071 = vadd.f32 %v1036, %v4070
        %v4072 = vpop.f32.mrb[0].mxu0
        %v4073 = vadd.f32 %v1040, %v4072
        %v4074 = vpop.f32.mrb[0].mxu0
        %v4075 = vadd.f32 %v1036, %v4074
        %v4076 = vpop.f32.mrb[0].mxu0
        %v4077 = vadd.f32 %v1040, %v4076
        %4078 = vdwg.mxu0
        %4079 = vmatprep.subr.bf16.mxu0 %v3783
        %4080 = vmatpush1.bf16.msra.mxu0 %v3782
        %4081 = vmatprep.subr.bf16.mxu0 %v3785
        %4082 = vmatpush1.bf16.msra.mxu0 %v3784
        %4083 = vmatprep.subr.bf16.mxu0 %v3787
        %4084 = vmatpush1.bf16.msra.mxu0 %v3786
        %4085 = vmatprep.subr.bf16.mxu0 %v3789
        %4086 = vmatpush1.bf16.msra.mxu0 %v3788
        %4087 = vmatprep.subr.bf16.mxu0 %v3791
        %4088 = vmatpush1.bf16.msra.mxu0 %v3790
        %4089 = vmatprep.subr.bf16.mxu0 %v3793
        %4090 = vmatpush1.bf16.msra.mxu0 %v3792
        %4091 = vmatprep.subr.bf16.mxu0 %v3795
        %4092 = vmatpush1.bf16.msra.mxu0 %v3794
        %4093 = vmatprep.subr.bf16.mxu0 %v3797
        %4094 = vmatpush1.bf16.msra.mxu0 %v3796
        %4095 = vmatprep.subr.bf16.mxu0 %v3799
        %4096 = vmatpush1.bf16.msra.mxu0 %v3798
        %4097 = vmatprep.subr.bf16.mxu0 %v3801
        %4098 = vmatpush1.bf16.msra.mxu0 %v3800
        %4099 = vmatprep.subr.bf16.mxu0 %v3803
        %4100 = vmatpush1.bf16.msra.mxu0 %v3802
        %4101 = vmatprep.subr.bf16.mxu0 %v3805
        %4102 = vmatpush1.bf16.msra.mxu0 %v3804
        %4103 = vmatprep.subr.bf16.mxu0 %v3807
        %4104 = vmatpush1.bf16.msra.mxu0 %v3806
        %4105 = vmatprep.subr.bf16.mxu0 %v3809
        %4106 = vmatpush1.bf16.msra.mxu0 %v3808
        %4107 = vmatprep.subr.bf16.mxu0 %v3811
        %4108 = vmatpush1.bf16.msra.mxu0 %v3810
        %4109 = vmatprep.subr.bf16.mxu0 %v3813
        %4110 = vmatpush1.bf16.msra.mxu0 %v3812
        %4111 = vmatprep.mubr.bf16.mxu0 %v889
        %4112 = vmatmul.mubr.bf16.gmra.mrb[0].mxu0 %v888
        %v4113 = vpop.f32.mrb[0].mxu0
        %v4114 = vadd.f32 %v4041, %v4113
        %v4115 = vpop.f32.mrb[0].mxu0
        %v4116 = vadd.f32 %v4043, %v4115
        %v4117 = vpop.f32.mrb[0].mxu0
        %v4118 = vadd.f32 %v4045, %v4117
        %v4119 = vpop.f32.mrb[0].mxu0
        %v4120 = vadd.f32 %v4047, %v4119
        %4121 = vmatprep.mubr.bf16.mxu0 %v891
        %4122 = vmatmul.mubr.bf16.gmra.mrb[0].mxu0 %v890
        %v4123 = vpop.f32.mrb[0].mxu0
        %v4124 = vadd.f32 %v4051, %v4123
        %v4125 = vpop.f32.mrb[0].mxu0
        %v4126 = vadd.f32 %v4053, %v4125
        %v4127 = vpop.f32.mrb[0].mxu0
        %v4128 = vadd.f32 %v4055, %v4127
        %v4129 = vpop.f32.mrb[0].mxu0
        %v4130 = vadd.f32 %v4057, %v4129
        %4131 = vmatprep.mubr.bf16.mxu0 %v893
        %4132 = vmatmul.mubr.bf16.gmra.mrb[0].mxu0 %v892
        %v4133 = vpop.f32.mrb[0].mxu0
        %v4134 = vadd.f32 %v4061, %v4133
        %v4135 = vpop.f32.mrb[0].mxu0
        %v4136 = vadd.f32 %v4063, %v4135
        %v4137 = vpop.f32.mrb[0].mxu0
        %v4138 = vadd.f32 %v4065, %v4137
        %v4139 = vpop.f32.mrb[0].mxu0
        %v4140 = vadd.f32 %v4067, %v4139
        %4141 = vmatprep.mubr.bf16.mxu0 %v895
        %4142 = vmatmul.mubr.bf16.gmra.mrb[0].mxu0 %v894
        %v4143 = vpop.f32.mrb[0].mxu0
        %v4144 = vadd.f32 %v4071, %v4143
        %v4145 = vpop.f32.mrb[0].mxu0
        %v4146 = vadd.f32 %v4073, %v4145
        %v4147 = vpop.f32.mrb[0].mxu0
        %v4148 = vadd.f32 %v4075, %v4147
        %v4149 = vpop.f32.mrb[0].mxu0
        %v4150 = vadd.f32 %v4077, %v4149
        %4151 = vdwg.mxu0
        %4152 = vmatprep.subr.bf16.mxu0 %v3815
        %4153 = vmatpush1.bf16.msra.mxu0 %v3814
        %4154 = vmatprep.subr.bf16.mxu0 %v3817
        %4155 = vmatpush1.bf16.msra.mxu0 %v3816
        %4156 = vmatprep.subr.bf16.mxu0 %v3819
        %4157 = vmatpush1.bf16.msra.mxu0 %v3818
        %4158 = vmatprep.subr.bf16.mxu0 %v3821
        %4159 = vmatpush1.bf16.msra.mxu0 %v3820
        %4160 = vmatprep.subr.bf16.mxu0 %v3823
        %4161 = vmatpush1.bf16.msra.mxu0 %v3822
        %4162 = vmatprep.subr.bf16.mxu0 %v3825
        %4163 = vmatpush1.bf16.msra.mxu0 %v3824
        %4164 = vmatprep.subr.bf16.mxu0 %v3827
        %4165 = vmatpush1.bf16.msra.mxu0 %v3826
        %4166 = vmatprep.subr.bf16.mxu0 %v3829
        %4167 = vmatpush1.bf16.msra.mxu0 %v3828
        %4168 = vmatprep.subr.bf16.mxu0 %v3831
        %4169 = vmatpush1.bf16.msra.mxu0 %v3830
        %4170 = vmatprep.subr.bf16.mxu0 %v3833
        %4171 = vmatpush1.bf16.msra.mxu0 %v3832
        %4172 = vmatprep.subr.bf16.mxu0 %v3835
        %4173 = vmatpush1.bf16.msra.mxu0 %v3834
        %4174 = vmatprep.subr.bf16.mxu0 %v3837
        %4175 = vmatpush1.bf16.msra.mxu0 %v3836
        %4176 = vmatprep.subr.bf16.mxu0 %v3839
        %4177 = vmatpush1.bf16.msra.mxu0 %v3838
        %4178 = vmatprep.subr.bf16.mxu0 %v3841
        %4179 = vmatpush1.bf16.msra.mxu0 %v3840
        %4180 = vmatprep.subr.bf16.mxu0 %v3843
        %4181 = vmatpush1.bf16.msra.mxu0 %v3842
        %4182 = vmatprep.subr.bf16.mxu0 %v3845
        %4183 = vmatpush1.bf16.msra.mxu0 %v3844
        %4184 = vmatprep.mubr.bf16.mxu0 %v3190
        %4185 = vmatmul.mubr.bf16.gmra.mrb[0].mxu0 %v3189
        %v4186 = vpop.f32.mrb[0].mxu0
        %v4187 = vadd.f32 %v4114, %v4186
        %v4188 = vpop.f32.mrb[0].mxu0
        %v4189 = vadd.f32 %v4116, %v4188
        %v4190 = vpop.f32.mrb[0].mxu0
        %v4191 = vadd.f32 %v4118, %v4190
        %v4192 = vpop.f32.mrb[0].mxu0
        %v4193 = vadd.f32 %v4120, %v4192
        %4194 = vmatprep.mubr.bf16.mxu0 %v3192
        %4195 = vmatmul.mubr.bf16.gmra.mrb[0].mxu0 %v3191
        %v4196 = vpop.f32.mrb[0].mxu0
        %v4197 = vadd.f32 %v4124, %v4196
        %v4198 = vpop.f32.mrb[0].mxu0
        %v4199 = vadd.f32 %v4126, %v4198
        %v4200 = vpop.f32.mrb[0].mxu0
        %v4201 = vadd.f32 %v4128, %v4200
        %v4202 = vpop.f32.mrb[0].mxu0
        %v4203 = vadd.f32 %v4130, %v4202
        %4204 = vmatprep.mubr.bf16.mxu0 %v3194
        %4205 = vmatmul.mubr.bf16.gmra.mrb[0].mxu0 %v3193
        %v4206 = vpop.f32.mrb[0].mxu0
        %v4207 = vadd.f32 %v4134, %v4206
        %v4208 = vpop.f32.mrb[0].mxu0
        %v4209 = vadd.f32 %v4136, %v4208
        %v4210 = vpop.f32.mrb[0].mxu0
        %v4211 = vadd.f32 %v4138, %v4210
        %v4212 = vpop.f32.mrb[0].mxu0
        %v4213 = vadd.f32 %v4140, %v4212
        %4214 = vmatprep.mubr.bf16.mxu0 %v3196
        %4215 = vmatmul.mubr.bf16.gmra.mrb[0].mxu0 %v3195
        %v4216 = vpop.f32.mrb[0].mxu0
        %v4217 = vadd.f32 %v4144, %v4216
        %v4218 = vpop.f32.mrb[0].mxu0
        %v4219 = vadd.f32 %v4146, %v4218
        %v4220 = vpop.f32.mrb[0].mxu0
        %v4221 = vadd.f32 %v4148, %v4220
        %v4222 = vpop.f32.mrb[0].mxu0
        %v4223 = vadd.f32 %v4150, %v4222
        %4224 = vdwg.mxu0
        %4225 = vmatprep.subr.bf16.mxu0 %v3847
        %4226 = vmatpush1.bf16.msra.mxu0 %v3846
        %4227 = vmatprep.subr.bf16.mxu0 %v3849
        %4228 = vmatpush1.bf16.msra.mxu0 %v3848
        %4229 = vmatprep.subr.bf16.mxu0 %v3851
        %4230 = vmatpush1.bf16.msra.mxu0 %v3850
        %4231 = vmatprep.subr.bf16.mxu0 %v3853
        %4232 = vmatpush1.bf16.msra.mxu0 %v3852
        %4233 = vmatprep.subr.bf16.mxu0 %v3855
        %4234 = vmatpush1.bf16.msra.mxu0 %v3854
        %4235 = vmatprep.subr.bf16.mxu0 %v3857
        %4236 = vmatpush1.bf16.msra.mxu0 %v3856
        %4237 = vmatprep.subr.bf16.mxu0 %v3859
        %4238 = vmatpush1.bf16.msra.mxu0 %v3858
        %4239 = vmatprep.subr.bf16.mxu0 %v3861
        %4240 = vmatpush1.bf16.msra.mxu0 %v3860
        %4241 = vmatprep.subr.bf16.mxu0 %v3863
        %4242 = vmatpush1.bf16.msra.mxu0 %v3862
        %4243 = vmatprep.subr.bf16.mxu0 %v3865
        %4244 = vmatpush1.bf16.msra.mxu0 %v3864
        %4245 = vmatprep.subr.bf16.mxu0 %v3867
        %4246 = vmatpush1.bf16.msra.mxu0 %v3866
        %4247 = vmatprep.subr.bf16.mxu0 %v3869
        %4248 = vmatpush1.bf16.msra.mxu0 %v3868
        %4249 = vmatprep.subr.bf16.mxu0 %v3871
        %4250 = vmatpush1.bf16.msra.mxu0 %v3870
        %4251 = vmatprep.subr.bf16.mxu0 %v3873
        %4252 = vmatpush1.bf16.msra.mxu0 %v3872
        %4253 = vmatprep.subr.bf16.mxu0 %v3875
        %4254 = vmatpush1.bf16.msra.mxu0 %v3874
        %4255 = vmatprep.subr.bf16.mxu0 %v3877
        %4256 = vmatpush1.bf16.msra.mxu0 %v3876
        %4257 = vmatprep.mubr.bf16.mxu0 %v3222
        %4258 = vmatmul.mubr.bf16.gmra.mrb[0].mxu0 %v3221
        %v4259 = vpop.f32.mrb[0].mxu0
        %v4260 = vadd.f32 %v4187, %v4259
        %v4261 = vpop.f32.mrb[0].mxu0
        %v4262 = vadd.f32 %v4189, %v4261
        %v4263 = vpop.f32.mrb[0].mxu0
        %v4264 = vadd.f32 %v4191, %v4263
        %v4265 = vpop.f32.mrb[0].mxu0
        %v4266 = vadd.f32 %v4193, %v4265
        %4267 = vmatprep.mubr.bf16.mxu0 %v3224
        %4268 = vmatmul.mubr.bf16.gmra.mrb[0].mxu0 %v3223
        %v4269 = vpop.f32.mrb[0].mxu0
        %v4270 = vadd.f32 %v4197, %v4269
        %v4271 = vpop.f32.mrb[0].mxu0
        %v4272 = vadd.f32 %v4199, %v4271
        %v4273 = vpop.f32.mrb[0].mxu0
        %v4274 = vadd.f32 %v4201, %v4273
        %v4275 = vpop.f32.mrb[0].mxu0
        %v4276 = vadd.f32 %v4203, %v4275
        %4277 = vmatprep.mubr.bf16.mxu0 %v3226
        %4278 = vmatmul.mubr.bf16.gmra.mrb[0].mxu0 %v3225
        %v4279 = vpop.f32.mrb[0].mxu0
        %v4280 = vadd.f32 %v4207, %v4279
        %v4281 = vpop.f32.mrb[0].mxu0
        %v4282 = vadd.f32 %v4209, %v4281
        %v4283 = vpop.f32.mrb[0].mxu0
        %v4284 = vadd.f32 %v4211, %v4283
        %v4285 = vpop.f32.mrb[0].mxu0
        %v4286 = vadd.f32 %v4213, %v4285
        %4287 = vmatprep.mubr.bf16.mxu0 %v3228
        %4288 = vmatmul.mubr.bf16.gmra.mrb[0].mxu0 %v3227
        %v4289 = vpop.f32.mrb[0].mxu0
        %v4290 = vadd.f32 %v4217, %v4289
        %v4291 = vpop.f32.mrb[0].mxu0
        %v4292 = vadd.f32 %v4219, %v4291
        %v4293 = vpop.f32.mrb[0].mxu0
        %v4294 = vadd.f32 %v4221, %v4293
        %v4295 = vpop.f32.mrb[0].mxu0
        %v4296 = vadd.f32 %v4223, %v4295
        %4297 = vdwg.mxu0
        %v4298 = vmax.f32 %v4260, 0.0
        %v4299 = vmax.f32 %v4262, 0.0
        %v4300 = vmax.f32 %v4264, 0.0
        %v4301 = vmax.f32 %v4266, 0.0
        %v4302 = vmax.f32 %v4270, 0.0
        %v4303 = vmax.f32 %v4272, 0.0
        %v4304 = vmax.f32 %v4274, 0.0
        %v4305 = vmax.f32 %v4276, 0.0
        %v4306 = vmax.f32 %v4280, 0.0
        %v4307 = vmax.f32 %v4282, 0.0
        %v4308 = vmax.f32 %v4284, 0.0
        %v4309 = vmax.f32 %v4286, 0.0
        %v4310 = vmax.f32 %v4290, 0.0
        %v4311 = vmax.f32 %v4292, 0.0
        %v4312 = vmax.f32 %v4294, 0.0
        %v4313 = vmax.f32 %v4296, 0.0
        %s4314 = scalar_lea.vmem %s198, 256
        %4315 = vst [vmem:[%s4314] sm:$0xff] %v4298
        %4316 = vst [vmem:[%s4314 + $0x8] sm:$0xff] %v4299
        %4317 = vst [vmem:[%s4314 + $0x10] sm:$0xff] %v4300
        %4318 = vst [vmem:[%s4314 + $0x18] sm:$0xff] %v4301
        %4319 = vst [vmem:[%s4314 + $0x20] sm:$0xff] %v4302
        %4320 = vst [vmem:[%s4314 + $0x28] sm:$0xff] %v4303
        %4321 = vst [vmem:[%s4314 + $0x30] sm:$0xff] %v4304
        %4322 = vst [vmem:[%s4314 + $0x38] sm:$0xff] %v4305
        %4323 = vst [vmem:[%s4314 + $0x40] sm:$0xff] %v4306
        %4324 = vst [vmem:[%s4314 + $0x48] sm:$0xff] %v4307
        %4325 = vst [vmem:[%s4314 + $0x50] sm:$0xff] %v4308
        %4326 = vst [vmem:[%s4314 + $0x58] sm:$0xff] %v4309
        %4327 = vst [vmem:[%s4314 + $0x60] sm:$0xff] %v4310
        %4328 = vst [vmem:[%s4314 + $0x68] sm:$0xff] %v4311
        %4329 = vst [vmem:[%s4314 + $0x70] sm:$0xff] %v4312
        %4330 = vst [vmem:[%s4314 + $0x78] sm:$0xff] %v4313
        %v4331 = vunpack.c.l.b16 %v731
        %v4332 = vunpack.c.h.b16 %v731
        %v4333 = vunpack.c.l.b16 %v735
        %v4334 = vunpack.c.h.b16 %v735
        %v4335 = vunpack.c.l.b16 %v739
        %v4336 = vunpack.c.h.b16 %v739
        %v4337 = vunpack.c.l.b16 %v743
        %v4338 = vunpack.c.h.b16 %v743
        %v4339 = vunpack.c.l.b16 %v747
        %v4340 = vunpack.c.h.b16 %v747
        %v4341 = vunpack.c.l.b16 %v751
        %v4342 = vunpack.c.h.b16 %v751
        %v4343 = vunpack.c.l.b16 %v755
        %v4344 = vunpack.c.h.b16 %v755
        %v4345 = vunpack.c.l.b16 %v759
        %v4346 = vunpack.c.h.b16 %v759
        %v4347 = vpack.c.b16 %v4333, %v4331
        %v4348 = vpack.c.b16 %v4334, %v4332
        %v4349 = vpack.c.b16 %v4337, %v4335
        %v4350 = vpack.c.b16 %v4338, %v4336
        %v4351 = vpack.c.b16 %v4341, %v4339
        %v4352 = vpack.c.b16 %v4342, %v4340
        %v4353 = vpack.c.b16 %v4345, %v4343
        %v4354 = vpack.c.b16 %v4346, %v4344
        %s4363 = scalar_lea.vmem [#allocation2], 3072
        %v4364 = vld [vmem:[%s4363] sm:$0xff]
        %v4365 = vld [vmem:[%s4363 + $0x8] sm:$0xff]
        %v4366 = vld [vmem:[%s4363 + $0x10] sm:$0xff]
        %v4367 = vld [vmem:[%s4363 + $0x18] sm:$0xff]
        %v4368 = vld [vmem:[%s4363 + $0x20] sm:$0xff]
        %v4369 = vld [vmem:[%s4363 + $0x28] sm:$0xff]
        %v4370 = vld [vmem:[%s4363 + $0x30] sm:$0xff]
        %v4371 = vld [vmem:[%s4363 + $0x38] sm:$0xff]
        %v4372 = vld [vmem:[%s4363 + $0x40] sm:$0xff]
        %v4373 = vld [vmem:[%s4363 + $0x48] sm:$0xff]
        %v4374 = vld [vmem:[%s4363 + $0x50] sm:$0xff]
        %v4375 = vld [vmem:[%s4363 + $0x58] sm:$0xff]
        %v4376 = vld [vmem:[%s4363 + $0x60] sm:$0xff]
        %v4377 = vld [vmem:[%s4363 + $0x68] sm:$0xff]
        %v4378 = vld [vmem:[%s4363 + $0x70] sm:$0xff]
        %v4379 = vld [vmem:[%s4363 + $0x78] sm:$0xff]
        %v4380 = vld [vmem:[%s4363 + $0x80] sm:$0xff]
        %v4381 = vld [vmem:[%s4363 + $0x88] sm:$0xff]
        %v4382 = vld [vmem:[%s4363 + $0x90] sm:$0xff]
        %v4383 = vld [vmem:[%s4363 + $0x98] sm:$0xff]
        %v4384 = vld [vmem:[%s4363 + $0xa0] sm:$0xff]
        %v4385 = vld [vmem:[%s4363 + $0xa8] sm:$0xff]
        %v4386 = vld [vmem:[%s4363 + $0xb0] sm:$0xff]
        %v4387 = vld [vmem:[%s4363 + $0xb8] sm:$0xff]
        %v4388 = vld [vmem:[%s4363 + $0xc0] sm:$0xff]
        %v4389 = vld [vmem:[%s4363 + $0xc8] sm:$0xff]
        %v4390 = vld [vmem:[%s4363 + $0xd0] sm:$0xff]
        %v4391 = vld [vmem:[%s4363 + $0xd8] sm:$0xff]
        %v4392 = vld [vmem:[%s4363 + $0xe0] sm:$0xff]
        %v4393 = vld [vmem:[%s4363 + $0xe8] sm:$0xff]
        %v4394 = vld [vmem:[%s4363 + $0xf0] sm:$0xff]
        %v4395 = vld [vmem:[%s4363 + $0xf8] sm:$0xff]
        %v4396 = vld [vmem:[%s4363 + $0x100] sm:$0xff]
        %v4397 = vld [vmem:[%s4363 + $0x108] sm:$0xff]
        %v4398 = vld [vmem:[%s4363 + $0x110] sm:$0xff]
        %v4399 = vld [vmem:[%s4363 + $0x118] sm:$0xff]
        %v4400 = vld [vmem:[%s4363 + $0x120] sm:$0xff]
        %v4401 = vld [vmem:[%s4363 + $0x128] sm:$0xff]
        %v4402 = vld [vmem:[%s4363 + $0x130] sm:$0xff]
        %v4403 = vld [vmem:[%s4363 + $0x138] sm:$0xff]
        %v4404 = vld [vmem:[%s4363 + $0x140] sm:$0xff]
        %v4405 = vld [vmem:[%s4363 + $0x148] sm:$0xff]
        %v4406 = vld [vmem:[%s4363 + $0x150] sm:$0xff]
        %v4407 = vld [vmem:[%s4363 + $0x158] sm:$0xff]
        %v4408 = vld [vmem:[%s4363 + $0x160] sm:$0xff]
        %v4409 = vld [vmem:[%s4363 + $0x168] sm:$0xff]
        %v4410 = vld [vmem:[%s4363 + $0x170] sm:$0xff]
        %v4411 = vld [vmem:[%s4363 + $0x178] sm:$0xff]
        %v4412 = vld [vmem:[%s4363 + $0x180] sm:$0xff]
        %v4413 = vld [vmem:[%s4363 + $0x188] sm:$0xff]
        %v4414 = vld [vmem:[%s4363 + $0x190] sm:$0xff]
        %v4415 = vld [vmem:[%s4363 + $0x198] sm:$0xff]
        %v4416 = vld [vmem:[%s4363 + $0x1a0] sm:$0xff]
        %v4417 = vld [vmem:[%s4363 + $0x1a8] sm:$0xff]
        %v4418 = vld [vmem:[%s4363 + $0x1b0] sm:$0xff]
        %v4419 = vld [vmem:[%s4363 + $0x1b8] sm:$0xff]
        %v4420 = vld [vmem:[%s4363 + $0x1c0] sm:$0xff]
        %v4421 = vld [vmem:[%s4363 + $0x1c8] sm:$0xff]
        %v4422 = vld [vmem:[%s4363 + $0x1d0] sm:$0xff]
        %v4423 = vld [vmem:[%s4363 + $0x1d8] sm:$0xff]
        %v4424 = vld [vmem:[%s4363 + $0x1e0] sm:$0xff]
        %v4425 = vld [vmem:[%s4363 + $0x1e8] sm:$0xff]
        %v4426 = vld [vmem:[%s4363 + $0x1f0] sm:$0xff]
        %v4427 = vld [vmem:[%s4363 + $0x1f8] sm:$0xff]
        %v4428 = vld [vmem:[%s4363 + $0x200] sm:$0xff]
        %v4429 = vld [vmem:[%s4363 + $0x208] sm:$0xff]
        %v4430 = vld [vmem:[%s4363 + $0x210] sm:$0xff]
        %v4431 = vld [vmem:[%s4363 + $0x218] sm:$0xff]
        %v4432 = vld [vmem:[%s4363 + $0x220] sm:$0xff]
        %v4433 = vld [vmem:[%s4363 + $0x228] sm:$0xff]
        %v4434 = vld [vmem:[%s4363 + $0x230] sm:$0xff]
        %v4435 = vld [vmem:[%s4363 + $0x238] sm:$0xff]
        %v4436 = vld [vmem:[%s4363 + $0x240] sm:$0xff]
        %v4437 = vld [vmem:[%s4363 + $0x248] sm:$0xff]
        %v4438 = vld [vmem:[%s4363 + $0x250] sm:$0xff]
        %v4439 = vld [vmem:[%s4363 + $0x258] sm:$0xff]
        %v4440 = vld [vmem:[%s4363 + $0x260] sm:$0xff]
        %v4441 = vld [vmem:[%s4363 + $0x268] sm:$0xff]
        %v4442 = vld [vmem:[%s4363 + $0x270] sm:$0xff]
        %v4443 = vld [vmem:[%s4363 + $0x278] sm:$0xff]
        %v4444 = vld [vmem:[%s4363 + $0x280] sm:$0xff]
        %v4445 = vld [vmem:[%s4363 + $0x288] sm:$0xff]
        %v4446 = vld [vmem:[%s4363 + $0x290] sm:$0xff]
        %v4447 = vld [vmem:[%s4363 + $0x298] sm:$0xff]
        %v4448 = vld [vmem:[%s4363 + $0x2a0] sm:$0xff]
        %v4449 = vld [vmem:[%s4363 + $0x2a8] sm:$0xff]
        %v4450 = vld [vmem:[%s4363 + $0x2b0] sm:$0xff]
        %v4451 = vld [vmem:[%s4363 + $0x2b8] sm:$0xff]
        %v4452 = vld [vmem:[%s4363 + $0x2c0] sm:$0xff]
        %v4453 = vld [vmem:[%s4363 + $0x2c8] sm:$0xff]
        %v4454 = vld [vmem:[%s4363 + $0x2d0] sm:$0xff]
        %v4455 = vld [vmem:[%s4363 + $0x2d8] sm:$0xff]
        %v4456 = vld [vmem:[%s4363 + $0x2e0] sm:$0xff]
        %v4457 = vld [vmem:[%s4363 + $0x2e8] sm:$0xff]
        %v4458 = vld [vmem:[%s4363 + $0x2f0] sm:$0xff]
        %v4459 = vld [vmem:[%s4363 + $0x2f8] sm:$0xff]
        %v4460 = vld [vmem:[%s4363 + $0x300] sm:$0xff]
        %v4461 = vld [vmem:[%s4363 + $0x308] sm:$0xff]
        %v4462 = vld [vmem:[%s4363 + $0x310] sm:$0xff]
        %v4463 = vld [vmem:[%s4363 + $0x318] sm:$0xff]
        %v4464 = vld [vmem:[%s4363 + $0x320] sm:$0xff]
        %v4465 = vld [vmem:[%s4363 + $0x328] sm:$0xff]
        %v4466 = vld [vmem:[%s4363 + $0x330] sm:$0xff]
        %v4467 = vld [vmem:[%s4363 + $0x338] sm:$0xff]
        %v4468 = vld [vmem:[%s4363 + $0x340] sm:$0xff]
        %v4469 = vld [vmem:[%s4363 + $0x348] sm:$0xff]
        %v4470 = vld [vmem:[%s4363 + $0x350] sm:$0xff]
        %v4471 = vld [vmem:[%s4363 + $0x358] sm:$0xff]
        %v4472 = vld [vmem:[%s4363 + $0x360] sm:$0xff]
        %v4473 = vld [vmem:[%s4363 + $0x368] sm:$0xff]
        %v4474 = vld [vmem:[%s4363 + $0x370] sm:$0xff]
        %v4475 = vld [vmem:[%s4363 + $0x378] sm:$0xff]
        %v4476 = vld [vmem:[%s4363 + $0x380] sm:$0xff]
        %v4477 = vld [vmem:[%s4363 + $0x388] sm:$0xff]
        %v4478 = vld [vmem:[%s4363 + $0x390] sm:$0xff]
        %v4479 = vld [vmem:[%s4363 + $0x398] sm:$0xff]
        %v4480 = vld [vmem:[%s4363 + $0x3a0] sm:$0xff]
        %v4481 = vld [vmem:[%s4363 + $0x3a8] sm:$0xff]
        %v4482 = vld [vmem:[%s4363 + $0x3b0] sm:$0xff]
        %v4483 = vld [vmem:[%s4363 + $0x3b8] sm:$0xff]
        %v4484 = vld [vmem:[%s4363 + $0x3c0] sm:$0xff]
        %v4485 = vld [vmem:[%s4363 + $0x3c8] sm:$0xff]
        %v4486 = vld [vmem:[%s4363 + $0x3d0] sm:$0xff]
        %v4487 = vld [vmem:[%s4363 + $0x3d8] sm:$0xff]
        %v4488 = vld [vmem:[%s4363 + $0x3e0] sm:$0xff]
        %v4489 = vld [vmem:[%s4363 + $0x3e8] sm:$0xff]
        %v4490 = vld [vmem:[%s4363 + $0x3f0] sm:$0xff]
        %v4491 = vld [vmem:[%s4363 + $0x3f8] sm:$0xff]
        %v4620 = vunpack.c.l.b16 %v4364
        %v4621 = vunpack.c.h.b16 %v4364
        %v4622 = vunpack.c.l.b16 %v4365
        %v4623 = vunpack.c.h.b16 %v4365
        %v4624 = vunpack.c.l.b16 %v4366
        %v4625 = vunpack.c.h.b16 %v4366
        %v4626 = vunpack.c.l.b16 %v4367
        %v4627 = vunpack.c.h.b16 %v4367
        %v4628 = vunpack.c.l.b16 %v4368
        %v4629 = vunpack.c.h.b16 %v4368
        %v4630 = vunpack.c.l.b16 %v4369
        %v4631 = vunpack.c.h.b16 %v4369
        %v4632 = vunpack.c.l.b16 %v4370
        %v4633 = vunpack.c.h.b16 %v4370
        %v4634 = vunpack.c.l.b16 %v4371
        %v4635 = vunpack.c.h.b16 %v4371
        %v4636 = vunpack.c.l.b16 %v4372
        %v4637 = vunpack.c.h.b16 %v4372
        %v4638 = vunpack.c.l.b16 %v4373
        %v4639 = vunpack.c.h.b16 %v4373
        %v4640 = vunpack.c.l.b16 %v4374
        %v4641 = vunpack.c.h.b16 %v4374
        %v4642 = vunpack.c.l.b16 %v4375
        %v4643 = vunpack.c.h.b16 %v4375
        %v4644 = vunpack.c.l.b16 %v4376
        %v4645 = vunpack.c.h.b16 %v4376
        %v4646 = vunpack.c.l.b16 %v4377
        %v4647 = vunpack.c.h.b16 %v4377
        %v4648 = vunpack.c.l.b16 %v4378
        %v4649 = vunpack.c.h.b16 %v4378
        %v4650 = vunpack.c.l.b16 %v4379
        %v4651 = vunpack.c.h.b16 %v4379
        %v4652 = vunpack.c.l.b16 %v4380
        %v4653 = vunpack.c.h.b16 %v4380
        %v4654 = vunpack.c.l.b16 %v4381
        %v4655 = vunpack.c.h.b16 %v4381
        %v4656 = vunpack.c.l.b16 %v4382
        %v4657 = vunpack.c.h.b16 %v4382
        %v4658 = vunpack.c.l.b16 %v4383
        %v4659 = vunpack.c.h.b16 %v4383
        %v4660 = vunpack.c.l.b16 %v4384
        %v4661 = vunpack.c.h.b16 %v4384
        %v4662 = vunpack.c.l.b16 %v4385
        %v4663 = vunpack.c.h.b16 %v4385
        %v4664 = vunpack.c.l.b16 %v4386
        %v4665 = vunpack.c.h.b16 %v4386
        %v4666 = vunpack.c.l.b16 %v4387
        %v4667 = vunpack.c.h.b16 %v4387
        %v4668 = vunpack.c.l.b16 %v4388
        %v4669 = vunpack.c.h.b16 %v4388
        %v4670 = vunpack.c.l.b16 %v4389
        %v4671 = vunpack.c.h.b16 %v4389
        %v4672 = vunpack.c.l.b16 %v4390
        %v4673 = vunpack.c.h.b16 %v4390
        %v4674 = vunpack.c.l.b16 %v4391
        %v4675 = vunpack.c.h.b16 %v4391
        %v4676 = vunpack.c.l.b16 %v4392
        %v4677 = vunpack.c.h.b16 %v4392
        %v4678 = vunpack.c.l.b16 %v4393
        %v4679 = vunpack.c.h.b16 %v4393
        %v4680 = vunpack.c.l.b16 %v4394
        %v4681 = vunpack.c.h.b16 %v4394
        %v4682 = vunpack.c.l.b16 %v4395
        %v4683 = vunpack.c.h.b16 %v4395
        %v4684 = vunpack.c.l.b16 %v4396
        %v4685 = vunpack.c.h.b16 %v4396
        %v4686 = vunpack.c.l.b16 %v4397
        %v4687 = vunpack.c.h.b16 %v4397
        %v4688 = vunpack.c.l.b16 %v4398
        %v4689 = vunpack.c.h.b16 %v4398
        %v4690 = vunpack.c.l.b16 %v4399
        %v4691 = vunpack.c.h.b16 %v4399
        %v4692 = vunpack.c.l.b16 %v4400
        %v4693 = vunpack.c.h.b16 %v4400
        %v4694 = vunpack.c.l.b16 %v4401
        %v4695 = vunpack.c.h.b16 %v4401
        %v4696 = vunpack.c.l.b16 %v4402
        %v4697 = vunpack.c.h.b16 %v4402
        %v4698 = vunpack.c.l.b16 %v4403
        %v4699 = vunpack.c.h.b16 %v4403
        %v4700 = vunpack.c.l.b16 %v4404
        %v4701 = vunpack.c.h.b16 %v4404
        %v4702 = vunpack.c.l.b16 %v4405
        %v4703 = vunpack.c.h.b16 %v4405
        %v4704 = vunpack.c.l.b16 %v4406
        %v4705 = vunpack.c.h.b16 %v4406
        %v4706 = vunpack.c.l.b16 %v4407
        %v4707 = vunpack.c.h.b16 %v4407
        %v4708 = vunpack.c.l.b16 %v4408
        %v4709 = vunpack.c.h.b16 %v4408
        %v4710 = vunpack.c.l.b16 %v4409
        %v4711 = vunpack.c.h.b16 %v4409
        %v4712 = vunpack.c.l.b16 %v4410
        %v4713 = vunpack.c.h.b16 %v4410
        %v4714 = vunpack.c.l.b16 %v4411
        %v4715 = vunpack.c.h.b16 %v4411
        %v4716 = vunpack.c.l.b16 %v4412
        %v4717 = vunpack.c.h.b16 %v4412
        %v4718 = vunpack.c.l.b16 %v4413
        %v4719 = vunpack.c.h.b16 %v4413
        %v4720 = vunpack.c.l.b16 %v4414
        %v4721 = vunpack.c.h.b16 %v4414
        %v4722 = vunpack.c.l.b16 %v4415
        %v4723 = vunpack.c.h.b16 %v4415
        %v4724 = vunpack.c.l.b16 %v4416
        %v4725 = vunpack.c.h.b16 %v4416
        %v4726 = vunpack.c.l.b16 %v4417
        %v4727 = vunpack.c.h.b16 %v4417
        %v4728 = vunpack.c.l.b16 %v4418
        %v4729 = vunpack.c.h.b16 %v4418
        %v4730 = vunpack.c.l.b16 %v4419
        %v4731 = vunpack.c.h.b16 %v4419
        %v4732 = vunpack.c.l.b16 %v4420
        %v4733 = vunpack.c.h.b16 %v4420
        %v4734 = vunpack.c.l.b16 %v4421
        %v4735 = vunpack.c.h.b16 %v4421
        %v4736 = vunpack.c.l.b16 %v4422
        %v4737 = vunpack.c.h.b16 %v4422
        %v4738 = vunpack.c.l.b16 %v4423
        %v4739 = vunpack.c.h.b16 %v4423
        %v4740 = vunpack.c.l.b16 %v4424
        %v4741 = vunpack.c.h.b16 %v4424
        %v4742 = vunpack.c.l.b16 %v4425
        %v4743 = vunpack.c.h.b16 %v4425
        %v4744 = vunpack.c.l.b16 %v4426
        %v4745 = vunpack.c.h.b16 %v4426
        %v4746 = vunpack.c.l.b16 %v4427
        %v4747 = vunpack.c.h.b16 %v4427
        %v4748 = vunpack.c.l.b16 %v4428
        %v4749 = vunpack.c.h.b16 %v4428
        %v4750 = vunpack.c.l.b16 %v4429
        %v4751 = vunpack.c.h.b16 %v4429
        %v4752 = vunpack.c.l.b16 %v4430
        %v4753 = vunpack.c.h.b16 %v4430
        %v4754 = vunpack.c.l.b16 %v4431
        %v4755 = vunpack.c.h.b16 %v4431
        %v4756 = vunpack.c.l.b16 %v4432
        %v4757 = vunpack.c.h.b16 %v4432
        %v4758 = vunpack.c.l.b16 %v4433
        %v4759 = vunpack.c.h.b16 %v4433
        %v4760 = vunpack.c.l.b16 %v4434
        %v4761 = vunpack.c.h.b16 %v4434
        %v4762 = vunpack.c.l.b16 %v4435
        %v4763 = vunpack.c.h.b16 %v4435
        %v4764 = vunpack.c.l.b16 %v4436
        %v4765 = vunpack.c.h.b16 %v4436
        %v4766 = vunpack.c.l.b16 %v4437
        %v4767 = vunpack.c.h.b16 %v4437
        %v4768 = vunpack.c.l.b16 %v4438
        %v4769 = vunpack.c.h.b16 %v4438
        %v4770 = vunpack.c.l.b16 %v4439
        %v4771 = vunpack.c.h.b16 %v4439
        %v4772 = vunpack.c.l.b16 %v4440
        %v4773 = vunpack.c.h.b16 %v4440
        %v4774 = vunpack.c.l.b16 %v4441
        %v4775 = vunpack.c.h.b16 %v4441
        %v4776 = vunpack.c.l.b16 %v4442
        %v4777 = vunpack.c.h.b16 %v4442
        %v4778 = vunpack.c.l.b16 %v4443
        %v4779 = vunpack.c.h.b16 %v4443
        %v4780 = vunpack.c.l.b16 %v4444
        %v4781 = vunpack.c.h.b16 %v4444
        %v4782 = vunpack.c.l.b16 %v4445
        %v4783 = vunpack.c.h.b16 %v4445
        %v4784 = vunpack.c.l.b16 %v4446
        %v4785 = vunpack.c.h.b16 %v4446
        %v4786 = vunpack.c.l.b16 %v4447
        %v4787 = vunpack.c.h.b16 %v4447
        %v4788 = vunpack.c.l.b16 %v4448
        %v4789 = vunpack.c.h.b16 %v4448
        %v4790 = vunpack.c.l.b16 %v4449
        %v4791 = vunpack.c.h.b16 %v4449
        %v4792 = vunpack.c.l.b16 %v4450
        %v4793 = vunpack.c.h.b16 %v4450
        %v4794 = vunpack.c.l.b16 %v4451
        %v4795 = vunpack.c.h.b16 %v4451
        %v4796 = vunpack.c.l.b16 %v4452
        %v4797 = vunpack.c.h.b16 %v4452
        %v4798 = vunpack.c.l.b16 %v4453
        %v4799 = vunpack.c.h.b16 %v4453
        %v4800 = vunpack.c.l.b16 %v4454
        %v4801 = vunpack.c.h.b16 %v4454
        %v4802 = vunpack.c.l.b16 %v4455
        %v4803 = vunpack.c.h.b16 %v4455
        %v4804 = vunpack.c.l.b16 %v4456
        %v4805 = vunpack.c.h.b16 %v4456
        %v4806 = vunpack.c.l.b16 %v4457
        %v4807 = vunpack.c.h.b16 %v4457
        %v4808 = vunpack.c.l.b16 %v4458
        %v4809 = vunpack.c.h.b16 %v4458
        %v4810 = vunpack.c.l.b16 %v4459
        %v4811 = vunpack.c.h.b16 %v4459
        %v4812 = vunpack.c.l.b16 %v4460
        %v4813 = vunpack.c.h.b16 %v4460
        %v4814 = vunpack.c.l.b16 %v4461
        %v4815 = vunpack.c.h.b16 %v4461
        %v4816 = vunpack.c.l.b16 %v4462
        %v4817 = vunpack.c.h.b16 %v4462
        %v4818 = vunpack.c.l.b16 %v4463
        %v4819 = vunpack.c.h.b16 %v4463
        %v4820 = vunpack.c.l.b16 %v4464
        %v4821 = vunpack.c.h.b16 %v4464
        %v4822 = vunpack.c.l.b16 %v4465
        %v4823 = vunpack.c.h.b16 %v4465
        %v4824 = vunpack.c.l.b16 %v4466
        %v4825 = vunpack.c.h.b16 %v4466
        %v4826 = vunpack.c.l.b16 %v4467
        %v4827 = vunpack.c.h.b16 %v4467
        %v4828 = vunpack.c.l.b16 %v4468
        %v4829 = vunpack.c.h.b16 %v4468
        %v4830 = vunpack.c.l.b16 %v4469
        %v4831 = vunpack.c.h.b16 %v4469
        %v4832 = vunpack.c.l.b16 %v4470
        %v4833 = vunpack.c.h.b16 %v4470
        %v4834 = vunpack.c.l.b16 %v4471
        %v4835 = vunpack.c.h.b16 %v4471
        %v4836 = vunpack.c.l.b16 %v4472
        %v4837 = vunpack.c.h.b16 %v4472
        %v4838 = vunpack.c.l.b16 %v4473
        %v4839 = vunpack.c.h.b16 %v4473
        %v4840 = vunpack.c.l.b16 %v4474
        %v4841 = vunpack.c.h.b16 %v4474
        %v4842 = vunpack.c.l.b16 %v4475
        %v4843 = vunpack.c.h.b16 %v4475
        %v4844 = vunpack.c.l.b16 %v4476
        %v4845 = vunpack.c.h.b16 %v4476
        %v4846 = vunpack.c.l.b16 %v4477
        %v4847 = vunpack.c.h.b16 %v4477
        %v4848 = vunpack.c.l.b16 %v4478
        %v4849 = vunpack.c.h.b16 %v4478
        %v4850 = vunpack.c.l.b16 %v4479
        %v4851 = vunpack.c.h.b16 %v4479
        %v4852 = vunpack.c.l.b16 %v4480
        %v4853 = vunpack.c.h.b16 %v4480
        %v4854 = vunpack.c.l.b16 %v4481
        %v4855 = vunpack.c.h.b16 %v4481
        %v4856 = vunpack.c.l.b16 %v4482
        %v4857 = vunpack.c.h.b16 %v4482
        %v4858 = vunpack.c.l.b16 %v4483
        %v4859 = vunpack.c.h.b16 %v4483
        %v4860 = vunpack.c.l.b16 %v4484
        %v4861 = vunpack.c.h.b16 %v4484
        %v4862 = vunpack.c.l.b16 %v4485
        %v4863 = vunpack.c.h.b16 %v4485
        %v4864 = vunpack.c.l.b16 %v4486
        %v4865 = vunpack.c.h.b16 %v4486
        %v4866 = vunpack.c.l.b16 %v4487
        %v4867 = vunpack.c.h.b16 %v4487
        %v4868 = vunpack.c.l.b16 %v4488
        %v4869 = vunpack.c.h.b16 %v4488
        %v4870 = vunpack.c.l.b16 %v4489
        %v4871 = vunpack.c.h.b16 %v4489
        %v4872 = vunpack.c.l.b16 %v4490
        %v4873 = vunpack.c.h.b16 %v4490
        %v4874 = vunpack.c.l.b16 %v4491
        %v4875 = vunpack.c.h.b16 %v4491
        %v4876 = vpack.c.b16 %v4622, %v4620
        %v4877 = vpack.c.b16 %v4623, %v4621
        %v4878 = vpack.c.b16 %v4626, %v4624
        %v4879 = vpack.c.b16 %v4627, %v4625
        %v4880 = vpack.c.b16 %v4630, %v4628
        %v4881 = vpack.c.b16 %v4631, %v4629
        %v4882 = vpack.c.b16 %v4634, %v4632
        %v4883 = vpack.c.b16 %v4635, %v4633
        %v4884 = vpack.c.b16 %v4638, %v4636
        %v4885 = vpack.c.b16 %v4639, %v4637
        %v4886 = vpack.c.b16 %v4642, %v4640
        %v4887 = vpack.c.b16 %v4643, %v4641
        %v4888 = vpack.c.b16 %v4646, %v4644
        %v4889 = vpack.c.b16 %v4647, %v4645
        %v4890 = vpack.c.b16 %v4650, %v4648
        %v4891 = vpack.c.b16 %v4651, %v4649
        %v4892 = vpack.c.b16 %v4654, %v4652
        %v4893 = vpack.c.b16 %v4655, %v4653
        %v4894 = vpack.c.b16 %v4658, %v4656
        %v4895 = vpack.c.b16 %v4659, %v4657
        %v4896 = vpack.c.b16 %v4662, %v4660
        %v4897 = vpack.c.b16 %v4663, %v4661
        %v4898 = vpack.c.b16 %v4666, %v4664
        %v4899 = vpack.c.b16 %v4667, %v4665
        %v4900 = vpack.c.b16 %v4670, %v4668
        %v4901 = vpack.c.b16 %v4671, %v4669
        %v4902 = vpack.c.b16 %v4674, %v4672
        %v4903 = vpack.c.b16 %v4675, %v4673
        %v4904 = vpack.c.b16 %v4678, %v4676
        %v4905 = vpack.c.b16 %v4679, %v4677
        %v4906 = vpack.c.b16 %v4682, %v4680
        %v4907 = vpack.c.b16 %v4683, %v4681
        %v4908 = vpack.c.b16 %v4686, %v4684
        %v4909 = vpack.c.b16 %v4687, %v4685
        %v4910 = vpack.c.b16 %v4690, %v4688
        %v4911 = vpack.c.b16 %v4691, %v4689
        %v4912 = vpack.c.b16 %v4694, %v4692
        %v4913 = vpack.c.b16 %v4695, %v4693
        %v4914 = vpack.c.b16 %v4698, %v4696
        %v4915 = vpack.c.b16 %v4699, %v4697
        %v4916 = vpack.c.b16 %v4702, %v4700
        %v4917 = vpack.c.b16 %v4703, %v4701
        %v4918 = vpack.c.b16 %v4706, %v4704
        %v4919 = vpack.c.b16 %v4707, %v4705
        %v4920 = vpack.c.b16 %v4710, %v4708
        %v4921 = vpack.c.b16 %v4711, %v4709
        %v4922 = vpack.c.b16 %v4714, %v4712
        %v4923 = vpack.c.b16 %v4715, %v4713
        %v4924 = vpack.c.b16 %v4718, %v4716
        %v4925 = vpack.c.b16 %v4719, %v4717
        %v4926 = vpack.c.b16 %v4722, %v4720
        %v4927 = vpack.c.b16 %v4723, %v4721
        %v4928 = vpack.c.b16 %v4726, %v4724
        %v4929 = vpack.c.b16 %v4727, %v4725
        %v4930 = vpack.c.b16 %v4730, %v4728
        %v4931 = vpack.c.b16 %v4731, %v4729
        %v4932 = vpack.c.b16 %v4734, %v4732
        %v4933 = vpack.c.b16 %v4735, %v4733
        %v4934 = vpack.c.b16 %v4738, %v4736
        %v4935 = vpack.c.b16 %v4739, %v4737
        %v4936 = vpack.c.b16 %v4742, %v4740
        %v4937 = vpack.c.b16 %v4743, %v4741
        %v4938 = vpack.c.b16 %v4746, %v4744
        %v4939 = vpack.c.b16 %v4747, %v4745
        %v4940 = vpack.c.b16 %v4750, %v4748
        %v4941 = vpack.c.b16 %v4751, %v4749
        %v4942 = vpack.c.b16 %v4754, %v4752
        %v4943 = vpack.c.b16 %v4755, %v4753
        %v4944 = vpack.c.b16 %v4758, %v4756
        %v4945 = vpack.c.b16 %v4759, %v4757
        %v4946 = vpack.c.b16 %v4762, %v4760
        %v4947 = vpack.c.b16 %v4763, %v4761
        %v4948 = vpack.c.b16 %v4766, %v4764
        %v4949 = vpack.c.b16 %v4767, %v4765
        %v4950 = vpack.c.b16 %v4770, %v4768
        %v4951 = vpack.c.b16 %v4771, %v4769
        %v4952 = vpack.c.b16 %v4774, %v4772
        %v4953 = vpack.c.b16 %v4775, %v4773
        %v4954 = vpack.c.b16 %v4778, %v4776
        %v4955 = vpack.c.b16 %v4779, %v4777
        %v4956 = vpack.c.b16 %v4782, %v4780
        %v4957 = vpack.c.b16 %v4783, %v4781
        %v4958 = vpack.c.b16 %v4786, %v4784
        %v4959 = vpack.c.b16 %v4787, %v4785
        %v4960 = vpack.c.b16 %v4790, %v4788
        %v4961 = vpack.c.b16 %v4791, %v4789
        %v4962 = vpack.c.b16 %v4794, %v4792
        %v4963 = vpack.c.b16 %v4795, %v4793
        %v4964 = vpack.c.b16 %v4798, %v4796
        %v4965 = vpack.c.b16 %v4799, %v4797
        %v4966 = vpack.c.b16 %v4802, %v4800
        %v4967 = vpack.c.b16 %v4803, %v4801
        %v4968 = vpack.c.b16 %v4806, %v4804
        %v4969 = vpack.c.b16 %v4807, %v4805
        %v4970 = vpack.c.b16 %v4810, %v4808
        %v4971 = vpack.c.b16 %v4811, %v4809
        %v4972 = vpack.c.b16 %v4814, %v4812
        %v4973 = vpack.c.b16 %v4815, %v4813
        %v4974 = vpack.c.b16 %v4818, %v4816
        %v4975 = vpack.c.b16 %v4819, %v4817
        %v4976 = vpack.c.b16 %v4822, %v4820
        %v4977 = vpack.c.b16 %v4823, %v4821
        %v4978 = vpack.c.b16 %v4826, %v4824
        %v4979 = vpack.c.b16 %v4827, %v4825
        %v4980 = vpack.c.b16 %v4830, %v4828
        %v4981 = vpack.c.b16 %v4831, %v4829
        %v4982 = vpack.c.b16 %v4834, %v4832
        %v4983 = vpack.c.b16 %v4835, %v4833
        %v4984 = vpack.c.b16 %v4838, %v4836
        %v4985 = vpack.c.b16 %v4839, %v4837
        %v4986 = vpack.c.b16 %v4842, %v4840
        %v4987 = vpack.c.b16 %v4843, %v4841
        %v4988 = vpack.c.b16 %v4846, %v4844
        %v4989 = vpack.c.b16 %v4847, %v4845
        %v4990 = vpack.c.b16 %v4850, %v4848
        %v4991 = vpack.c.b16 %v4851, %v4849
        %v4992 = vpack.c.b16 %v4854, %v4852
        %v4993 = vpack.c.b16 %v4855, %v4853
        %v4994 = vpack.c.b16 %v4858, %v4856
        %v4995 = vpack.c.b16 %v4859, %v4857
        %v4996 = vpack.c.b16 %v4862, %v4860
        %v4997 = vpack.c.b16 %v4863, %v4861
        %v4998 = vpack.c.b16 %v4866, %v4864
        %v4999 = vpack.c.b16 %v4867, %v4865
        %v5000 = vpack.c.b16 %v4870, %v4868
        %v5001 = vpack.c.b16 %v4871, %v4869
        %v5002 = vpack.c.b16 %v4874, %v4872
        %v5003 = vpack.c.b16 %v4875, %v4873
        %5132 = vmatprep.subr.bf16.mxu0 %v4877
        %5133 = vmatpush1.bf16.msra.mxu0 %v4876
        %5134 = vmatprep.subr.bf16.mxu0 %v4879
        %5135 = vmatpush1.bf16.msra.mxu0 %v4878
        %5136 = vmatprep.subr.bf16.mxu0 %v4881
        %5137 = vmatpush1.bf16.msra.mxu0 %v4880
        %5138 = vmatprep.subr.bf16.mxu0 %v4883
        %5139 = vmatpush1.bf16.msra.mxu0 %v4882
        %5140 = vmatprep.subr.bf16.mxu0 %v4885
        %5141 = vmatpush1.bf16.msra.mxu0 %v4884
        %5142 = vmatprep.subr.bf16.mxu0 %v4887
        %5143 = vmatpush1.bf16.msra.mxu0 %v4886
        %5144 = vmatprep.subr.bf16.mxu0 %v4889
        %5145 = vmatpush1.bf16.msra.mxu0 %v4888
        %5146 = vmatprep.subr.bf16.mxu0 %v4891
        %5147 = vmatpush1.bf16.msra.mxu0 %v4890
        %5148 = vmatprep.subr.bf16.mxu0 %v4893
        %5149 = vmatpush1.bf16.msra.mxu0 %v4892
        %5150 = vmatprep.subr.bf16.mxu0 %v4895
        %5151 = vmatpush1.bf16.msra.mxu0 %v4894
        %5152 = vmatprep.subr.bf16.mxu0 %v4897
        %5153 = vmatpush1.bf16.msra.mxu0 %v4896
        %5154 = vmatprep.subr.bf16.mxu0 %v4899
        %5155 = vmatpush1.bf16.msra.mxu0 %v4898
        %5156 = vmatprep.subr.bf16.mxu0 %v4901
        %5157 = vmatpush1.bf16.msra.mxu0 %v4900
        %5158 = vmatprep.subr.bf16.mxu0 %v4903
        %5159 = vmatpush1.bf16.msra.mxu0 %v4902
        %5160 = vmatprep.subr.bf16.mxu0 %v4905
        %5161 = vmatpush1.bf16.msra.mxu0 %v4904
        %5162 = vmatprep.subr.bf16.mxu0 %v4907
        %5163 = vmatpush1.bf16.msra.mxu0 %v4906
        %5164 = vmatprep.mubr.bf16.mxu0 %v889
        %5165 = vmatmul.mubr.bf16.gmra.mrb[0].mxu0 %v888
        %v5166 = vpop.f32.mrb[0].mxu0
        %v5167 = vadd.f32 %v1036, %v5166
        %v5168 = vpop.f32.mrb[0].mxu0
        %v5169 = vadd.f32 %v1040, %v5168
        %v5170 = vpop.f32.mrb[0].mxu0
        %v5171 = vadd.f32 %v1036, %v5170
        %v5172 = vpop.f32.mrb[0].mxu0
        %v5173 = vadd.f32 %v1040, %v5172
        %5174 = vmatprep.mubr.bf16.mxu0 %v891
        %5175 = vmatmul.mubr.bf16.gmra.mrb[0].mxu0 %v890
        %v5176 = vpop.f32.mrb[0].mxu0
        %v5177 = vadd.f32 %v1036, %v5176
        %v5178 = vpop.f32.mrb[0].mxu0
        %v5179 = vadd.f32 %v1040, %v5178
        %v5180 = vpop.f32.mrb[0].mxu0
        %v5181 = vadd.f32 %v1036, %v5180
        %v5182 = vpop.f32.mrb[0].mxu0
        %v5183 = vadd.f32 %v1040, %v5182
        %5184 = vmatprep.mubr.bf16.mxu0 %v893
        %5185 = vmatmul.mubr.bf16.gmra.mrb[0].mxu0 %v892
        %v5186 = vpop.f32.mrb[0].mxu0
        %v5187 = vadd.f32 %v1036, %v5186
        %v5188 = vpop.f32.mrb[0].mxu0
        %v5189 = vadd.f32 %v1040, %v5188
        %v5190 = vpop.f32.mrb[0].mxu0
        %v5191 = vadd.f32 %v1036, %v5190
        %v5192 = vpop.f32.mrb[0].mxu0
        %v5193 = vadd.f32 %v1040, %v5192
        %5194 = vmatprep.mubr.bf16.mxu0 %v895
        %5195 = vmatmul.mubr.bf16.gmra.mrb[0].mxu0 %v894
        %v5196 = vpop.f32.mrb[0].mxu0
        %v5197 = vadd.f32 %v1036, %v5196
        %v5198 = vpop.f32.mrb[0].mxu0
        %v5199 = vadd.f32 %v1040, %v5198
        %v5200 = vpop.f32.mrb[0].mxu0
        %v5201 = vadd.f32 %v1036, %v5200
        %v5202 = vpop.f32.mrb[0].mxu0
        %v5203 = vadd.f32 %v1040, %v5202
        %5204 = vdwg.mxu0
        %5205 = vmatprep.subr.bf16.mxu0 %v4909
        %5206 = vmatpush1.bf16.msra.mxu0 %v4908
        %5207 = vmatprep.subr.bf16.mxu0 %v4911
        %5208 = vmatpush1.bf16.msra.mxu0 %v4910
        %5209 = vmatprep.subr.bf16.mxu0 %v4913
        %5210 = vmatpush1.bf16.msra.mxu0 %v4912
        %5211 = vmatprep.subr.bf16.mxu0 %v4915
        %5212 = vmatpush1.bf16.msra.mxu0 %v4914
        %5213 = vmatprep.subr.bf16.mxu0 %v4917
        %5214 = vmatpush1.bf16.msra.mxu0 %v4916
        %5215 = vmatprep.subr.bf16.mxu0 %v4919
        %5216 = vmatpush1.bf16.msra.mxu0 %v4918
        %5217 = vmatprep.subr.bf16.mxu0 %v4921
        %5218 = vmatpush1.bf16.msra.mxu0 %v4920
        %5219 = vmatprep.subr.bf16.mxu0 %v4923
        %5220 = vmatpush1.bf16.msra.mxu0 %v4922
        %5221 = vmatprep.subr.bf16.mxu0 %v4925
        %5222 = vmatpush1.bf16.msra.mxu0 %v4924
        %5223 = vmatprep.subr.bf16.mxu0 %v4927
        %5224 = vmatpush1.bf16.msra.mxu0 %v4926
        %5225 = vmatprep.subr.bf16.mxu0 %v4929
        %5226 = vmatpush1.bf16.msra.mxu0 %v4928
        %5227 = vmatprep.subr.bf16.mxu0 %v4931
        %5228 = vmatpush1.bf16.msra.mxu0 %v4930
        %5229 = vmatprep.subr.bf16.mxu0 %v4933
        %5230 = vmatpush1.bf16.msra.mxu0 %v4932
        %5231 = vmatprep.subr.bf16.mxu0 %v4935
        %5232 = vmatpush1.bf16.msra.mxu0 %v4934
        %5233 = vmatprep.subr.bf16.mxu0 %v4937
        %5234 = vmatpush1.bf16.msra.mxu0 %v4936
        %5235 = vmatprep.subr.bf16.mxu0 %v4939
        %5236 = vmatpush1.bf16.msra.mxu0 %v4938
        %5237 = vmatprep.mubr.bf16.mxu0 %v2056
        %5238 = vmatmul.mubr.bf16.gmra.mrb[0].mxu0 %v2055
        %v5239 = vpop.f32.mrb[0].mxu0
        %v5240 = vadd.f32 %v5167, %v5239
        %v5241 = vpop.f32.mrb[0].mxu0
        %v5242 = vadd.f32 %v5169, %v5241
        %v5243 = vpop.f32.mrb[0].mxu0
        %v5244 = vadd.f32 %v5171, %v5243
        %v5245 = vpop.f32.mrb[0].mxu0
        %v5246 = vadd.f32 %v5173, %v5245
        %5247 = vmatprep.mubr.bf16.mxu0 %v2058
        %5248 = vmatmul.mubr.bf16.gmra.mrb[0].mxu0 %v2057
        %v5249 = vpop.f32.mrb[0].mxu0
        %v5250 = vadd.f32 %v5177, %v5249
        %v5251 = vpop.f32.mrb[0].mxu0
        %v5252 = vadd.f32 %v5179, %v5251
        %v5253 = vpop.f32.mrb[0].mxu0
        %v5254 = vadd.f32 %v5181, %v5253
        %v5255 = vpop.f32.mrb[0].mxu0
        %v5256 = vadd.f32 %v5183, %v5255
        %5257 = vmatprep.mubr.bf16.mxu0 %v2060
        %5258 = vmatmul.mubr.bf16.gmra.mrb[0].mxu0 %v2059
        %v5259 = vpop.f32.mrb[0].mxu0
        %v5260 = vadd.f32 %v5187, %v5259
        %v5261 = vpop.f32.mrb[0].mxu0
        %v5262 = vadd.f32 %v5189, %v5261
        %v5263 = vpop.f32.mrb[0].mxu0
        %v5264 = vadd.f32 %v5191, %v5263
        %v5265 = vpop.f32.mrb[0].mxu0
        %v5266 = vadd.f32 %v5193, %v5265
        %5267 = vmatprep.mubr.bf16.mxu0 %v2062
        %5268 = vmatmul.mubr.bf16.gmra.mrb[0].mxu0 %v2061
        %v5269 = vpop.f32.mrb[0].mxu0
        %v5270 = vadd.f32 %v5197, %v5269
        %v5271 = vpop.f32.mrb[0].mxu0
        %v5272 = vadd.f32 %v5199, %v5271
        %v5273 = vpop.f32.mrb[0].mxu0
        %v5274 = vadd.f32 %v5201, %v5273
        %v5275 = vpop.f32.mrb[0].mxu0
        %v5276 = vadd.f32 %v5203, %v5275
        %5277 = vdwg.mxu0
        %5278 = vmatprep.subr.bf16.mxu0 %v4941
        %5279 = vmatpush1.bf16.msra.mxu0 %v4940
        %5280 = vmatprep.subr.bf16.mxu0 %v4943
        %5281 = vmatpush1.bf16.msra.mxu0 %v4942
        %5282 = vmatprep.subr.bf16.mxu0 %v4945
        %5283 = vmatpush1.bf16.msra.mxu0 %v4944
        %5284 = vmatprep.subr.bf16.mxu0 %v4947
        %5285 = vmatpush1.bf16.msra.mxu0 %v4946
        %5286 = vmatprep.subr.bf16.mxu0 %v4949
        %5287 = vmatpush1.bf16.msra.mxu0 %v4948
        %5288 = vmatprep.subr.bf16.mxu0 %v4951
        %5289 = vmatpush1.bf16.msra.mxu0 %v4950
        %5290 = vmatprep.subr.bf16.mxu0 %v4953
        %5291 = vmatpush1.bf16.msra.mxu0 %v4952
        %5292 = vmatprep.subr.bf16.mxu0 %v4955
        %5293 = vmatpush1.bf16.msra.mxu0 %v4954
        %5294 = vmatprep.subr.bf16.mxu0 %v4957
        %5295 = vmatpush1.bf16.msra.mxu0 %v4956
        %5296 = vmatprep.subr.bf16.mxu0 %v4959
        %5297 = vmatpush1.bf16.msra.mxu0 %v4958
        %5298 = vmatprep.subr.bf16.mxu0 %v4961
        %5299 = vmatpush1.bf16.msra.mxu0 %v4960
        %5300 = vmatprep.subr.bf16.mxu0 %v4963
        %5301 = vmatpush1.bf16.msra.mxu0 %v4962
        %5302 = vmatprep.subr.bf16.mxu0 %v4965
        %5303 = vmatpush1.bf16.msra.mxu0 %v4964
        %5304 = vmatprep.subr.bf16.mxu0 %v4967
        %5305 = vmatpush1.bf16.msra.mxu0 %v4966
        %5306 = vmatprep.subr.bf16.mxu0 %v4969
        %5307 = vmatpush1.bf16.msra.mxu0 %v4968
        %5308 = vmatprep.subr.bf16.mxu0 %v4971
        %5309 = vmatpush1.bf16.msra.mxu0 %v4970
        %5310 = vmatprep.mubr.bf16.mxu0 %v3222
        %5311 = vmatmul.mubr.bf16.gmra.mrb[0].mxu0 %v3221
        %v5312 = vpop.f32.mrb[0].mxu0
        %v5313 = vadd.f32 %v5240, %v5312
        %v5314 = vpop.f32.mrb[0].mxu0
        %v5315 = vadd.f32 %v5242, %v5314
        %v5316 = vpop.f32.mrb[0].mxu0
        %v5317 = vadd.f32 %v5244, %v5316
        %v5318 = vpop.f32.mrb[0].mxu0
        %v5319 = vadd.f32 %v5246, %v5318
        %5320 = vmatprep.mubr.bf16.mxu0 %v3224
        %5321 = vmatmul.mubr.bf16.gmra.mrb[0].mxu0 %v3223
        %v5322 = vpop.f32.mrb[0].mxu0
        %v5323 = vadd.f32 %v5250, %v5322
        %v5324 = vpop.f32.mrb[0].mxu0
        %v5325 = vadd.f32 %v5252, %v5324
        %v5326 = vpop.f32.mrb[0].mxu0
        %v5327 = vadd.f32 %v5254, %v5326
        %v5328 = vpop.f32.mrb[0].mxu0
        %v5329 = vadd.f32 %v5256, %v5328
        %5330 = vmatprep.mubr.bf16.mxu0 %v3226
        %5331 = vmatmul.mubr.bf16.gmra.mrb[0].mxu0 %v3225
        %v5332 = vpop.f32.mrb[0].mxu0
        %v5333 = vadd.f32 %v5260, %v5332
        %v5334 = vpop.f32.mrb[0].mxu0
        %v5335 = vadd.f32 %v5262, %v5334
        %v5336 = vpop.f32.mrb[0].mxu0
        %v5337 = vadd.f32 %v5264, %v5336
        %v5338 = vpop.f32.mrb[0].mxu0
        %v5339 = vadd.f32 %v5266, %v5338
        %5340 = vmatprep.mubr.bf16.mxu0 %v3228
        %5341 = vmatmul.mubr.bf16.gmra.mrb[0].mxu0 %v3227
        %v5342 = vpop.f32.mrb[0].mxu0
        %v5343 = vadd.f32 %v5270, %v5342
        %v5344 = vpop.f32.mrb[0].mxu0
        %v5345 = vadd.f32 %v5272, %v5344
        %v5346 = vpop.f32.mrb[0].mxu0
        %v5347 = vadd.f32 %v5274, %v5346
        %v5348 = vpop.f32.mrb[0].mxu0
        %v5349 = vadd.f32 %v5276, %v5348
        %5350 = vdwg.mxu0
        %5351 = vmatprep.subr.bf16.mxu0 %v4973
        %5352 = vmatpush1.bf16.msra.mxu0 %v4972
        %5353 = vmatprep.subr.bf16.mxu0 %v4975
        %5354 = vmatpush1.bf16.msra.mxu0 %v4974
        %5355 = vmatprep.subr.bf16.mxu0 %v4977
        %5356 = vmatpush1.bf16.msra.mxu0 %v4976
        %5357 = vmatprep.subr.bf16.mxu0 %v4979
        %5358 = vmatpush1.bf16.msra.mxu0 %v4978
        %5359 = vmatprep.subr.bf16.mxu0 %v4981
        %5360 = vmatpush1.bf16.msra.mxu0 %v4980
        %5361 = vmatprep.subr.bf16.mxu0 %v4983
        %5362 = vmatpush1.bf16.msra.mxu0 %v4982
        %5363 = vmatprep.subr.bf16.mxu0 %v4985
        %5364 = vmatpush1.bf16.msra.mxu0 %v4984
        %5365 = vmatprep.subr.bf16.mxu0 %v4987
        %5366 = vmatpush1.bf16.msra.mxu0 %v4986
        %5367 = vmatprep.subr.bf16.mxu0 %v4989
        %5368 = vmatpush1.bf16.msra.mxu0 %v4988
        %5369 = vmatprep.subr.bf16.mxu0 %v4991
        %5370 = vmatpush1.bf16.msra.mxu0 %v4990
        %5371 = vmatprep.subr.bf16.mxu0 %v4993
        %5372 = vmatpush1.bf16.msra.mxu0 %v4992
        %5373 = vmatprep.subr.bf16.mxu0 %v4995
        %5374 = vmatpush1.bf16.msra.mxu0 %v4994
        %5375 = vmatprep.subr.bf16.mxu0 %v4997
        %5376 = vmatpush1.bf16.msra.mxu0 %v4996
        %5377 = vmatprep.subr.bf16.mxu0 %v4999
        %5378 = vmatpush1.bf16.msra.mxu0 %v4998
        %5379 = vmatprep.subr.bf16.mxu0 %v5001
        %5380 = vmatpush1.bf16.msra.mxu0 %v5000
        %5381 = vmatprep.subr.bf16.mxu0 %v5003
        %5382 = vmatpush1.bf16.msra.mxu0 %v5002
        %5383 = vmatprep.mubr.bf16.mxu0 %v4348
        %5384 = vmatmul.mubr.bf16.gmra.mrb[0].mxu0 %v4347
        %v5385 = vpop.f32.mrb[0].mxu0
        %v5386 = vadd.f32 %v5313, %v5385
        %v5387 = vpop.f32.mrb[0].mxu0
        %v5388 = vadd.f32 %v5315, %v5387
        %v5389 = vpop.f32.mrb[0].mxu0
        %v5390 = vadd.f32 %v5317, %v5389
        %v5391 = vpop.f32.mrb[0].mxu0
        %v5392 = vadd.f32 %v5319, %v5391
        %5393 = vmatprep.mubr.bf16.mxu0 %v4350
        %5394 = vmatmul.mubr.bf16.gmra.mrb[0].mxu0 %v4349
        %v5395 = vpop.f32.mrb[0].mxu0
        %v5396 = vadd.f32 %v5323, %v5395
        %v5397 = vpop.f32.mrb[0].mxu0
        %v5398 = vadd.f32 %v5325, %v5397
        %v5399 = vpop.f32.mrb[0].mxu0
        %v5400 = vadd.f32 %v5327, %v5399
        %v5401 = vpop.f32.mrb[0].mxu0
        %v5402 = vadd.f32 %v5329, %v5401
        %5403 = vmatprep.mubr.bf16.mxu0 %v4352
        %5404 = vmatmul.mubr.bf16.gmra.mrb[0].mxu0 %v4351
        %v5405 = vpop.f32.mrb[0].mxu0
        %v5406 = vadd.f32 %v5333, %v5405
        %v5407 = vpop.f32.mrb[0].mxu0
        %v5408 = vadd.f32 %v5335, %v5407
        %v5409 = vpop.f32.mrb[0].mxu0
        %v5410 = vadd.f32 %v5337, %v5409
        %v5411 = vpop.f32.mrb[0].mxu0
        %v5412 = vadd.f32 %v5339, %v5411
        %5413 = vmatprep.mubr.bf16.mxu0 %v4354
        %5414 = vmatmul.mubr.bf16.gmra.mrb[0].mxu0 %v4353
        %v5415 = vpop.f32.mrb[0].mxu0
        %v5416 = vadd.f32 %v5343, %v5415
        %v5417 = vpop.f32.mrb[0].mxu0
        %v5418 = vadd.f32 %v5345, %v5417
        %v5419 = vpop.f32.mrb[0].mxu0
        %v5420 = vadd.f32 %v5347, %v5419
        %v5421 = vpop.f32.mrb[0].mxu0
        %v5422 = vadd.f32 %v5349, %v5421
        %5423 = vdwg.mxu0
        %v5424 = vmax.f32 %v5386, 0.0
        %v5425 = vmax.f32 %v5388, 0.0
        %v5426 = vmax.f32 %v5390, 0.0
        %v5427 = vmax.f32 %v5392, 0.0
        %v5428 = vmax.f32 %v5396, 0.0
        %v5429 = vmax.f32 %v5398, 0.0
        %v5430 = vmax.f32 %v5400, 0.0
        %v5431 = vmax.f32 %v5402, 0.0
        %v5432 = vmax.f32 %v5406, 0.0
        %v5433 = vmax.f32 %v5408, 0.0
        %v5434 = vmax.f32 %v5410, 0.0
        %v5435 = vmax.f32 %v5412, 0.0
        %v5436 = vmax.f32 %v5416, 0.0
        %v5437 = vmax.f32 %v5418, 0.0
        %v5438 = vmax.f32 %v5420, 0.0
        %v5439 = vmax.f32 %v5422, 0.0
        %s5440 = scalar_lea.vmem %s198, 384
        %5441 = vst [vmem:[%s5440] sm:$0xff] %v5424
        %5442 = vst [vmem:[%s5440 + $0x8] sm:$0xff] %v5425
        %5443 = vst [vmem:[%s5440 + $0x10] sm:$0xff] %v5426
        %5444 = vst [vmem:[%s5440 + $0x18] sm:$0xff] %v5427
        %5445 = vst [vmem:[%s5440 + $0x20] sm:$0xff] %v5428
        %5446 = vst [vmem:[%s5440 + $0x28] sm:$0xff] %v5429
        %5447 = vst [vmem:[%s5440 + $0x30] sm:$0xff] %v5430
        %5448 = vst [vmem:[%s5440 + $0x38] sm:$0xff] %v5431
        %5449 = vst [vmem:[%s5440 + $0x40] sm:$0xff] %v5432
        %5450 = vst [vmem:[%s5440 + $0x48] sm:$0xff] %v5433
        %5451 = vst [vmem:[%s5440 + $0x50] sm:$0xff] %v5434
        %5452 = vst [vmem:[%s5440 + $0x58] sm:$0xff] %v5435
        %5453 = vst [vmem:[%s5440 + $0x60] sm:$0xff] %v5436
        %5454 = vst [vmem:[%s5440 + $0x68] sm:$0xff] %v5437
        %5455 = vst [vmem:[%s5440 + $0x70] sm:$0xff] %v5438
        %5456 = vst [vmem:[%s5440 + $0x78] sm:$0xff] %v5439
        %p5457 = scmp.lt.s32.totalorder %s16, 1
        %s5458 = scalar_select %p5457, %s16, 1
        %s5459 = smul.addr %s5458, 64
        %s5460 = smul.addr %s5459, 8
        %s5461 = scalar_lea.vmem %s3, %s5460
        // Predicated region
        $region41: #{upconv1_forward.1} parent=31 // pred_check
          %p5462 = pneg %p102
        $region42: #{upconv1_forward.1} parent=31 // pred_check_branch
          %5464 = sbr.rel (%p5462) target = $region44
        $region43: #{upconv1_forward.1} parent=31 // pred_region
          _
        $region44: #{upconv1_forward.1} parent=31 // pred_fallthru
          _
      $region32: #{upconv1_forward.1} parent=5 // pred_fallthru
        _
      %p5465 = scmp.le.s32.totalorder 2, %s11
      // Predicated region
      $region45: #{upconv1_forward.1} parent=5 // pred_check
        %p5466 = pneg %p5465
      $region46: #{upconv1_forward.1} parent=5 // pred_check_branch
        %5468 = sbr.rel (%p5466) target = $region48
      $region47: #{upconv1_forward.1} parent=5 // pred_region
        %s5469 = ssub.s32 %s11, 2
        // Predicated region
        $region49: #{upconv1_forward.1} parent=47 // pred_check
          %p5470 = pneg %p108
        $region50: #{upconv1_forward.1} parent=47 // pred_check_branch
          %5472 = sbr.rel (%p5470) target = $region52
        $region51: #{upconv1_forward.1} parent=47 // pred_region
          %p5473 = scmp.lt.s32.totalorder %s17, 1
          %s5474 = scalar_select %p5473, %s17, 1
          %s5475 = smul.addr %s5474, 64
          %s5476 = smul.addr %s5475, 8
          %s5477 = scalar_lea.vmem %s3, %s5476
        $region52: #{upconv1_forward.1} parent=47 // pred_fallthru
          _
      $region48: #{upconv1_forward.1} parent=5 // pred_fallthru
        _
    $region6: #{upconv1_forward.1} parent=1 // loop_footer
      %s15 = sadd.s32 1, %s11
    $region7: #{upconv1_forward.1} parent=1 // loop_footer_branch
      %10 = sbr.rel target = $region3
    $region8: #{upconv1_forward.1} parent=1 // loop_exit
      _
    %5478 = vsyncpa [#allocation3], 1
    %s5479 = scalar_lea.sflag [#allocation3], 1
    %5480 = vsyncpa %s5479, 1
    %5481 = vsyncpa [#allocation5], 1

</llo_original>
